<compile_context>
chip_gen: v7x
topology: tpu7x:2x2x1
jax: 0.10.0
libtpu: 0.0.40
codegen_flags: <defaults>
</compile_context>

<pallas_src>
import functools

import jax
import jax.numpy as jnp
from jax import lax
from jax.experimental import pallas as pl
from jax.experimental.pallas import tpu as pltpu


# ----------------------------------------------------------------------------
# Pallas kernel 1: full atrous pyramid per batch element.
# Layout: activations are (C, H*W): channels in sublanes, pixels in lanes.
# ----------------------------------------------------------------------------
def _pyramid_kernel(x_ref, w1_ref, b1_ref, w2_ref, b2_ref, w3_ref, b3_ref,
                    gp_ref, masks_ref, out_ref,
                    *, H, W, Cin, Cout, rates, pad, shifts):
    HW = H * W

    def padded(yT):
        # (C, HW) bf16 -> (C, pad + HW + pad) bf16.  Vertical (row) padding of
        # the conv becomes contiguous zero lanes; taps are plain lane slices.
        z = jnp.zeros((yT.shape[0], pad), jnp.bfloat16)
        return jnp.concatenate([z, yT, z], axis=1)

    def kept_taps(d):
        # Skip taps that can only ever read zero padding (dilation >= extent).
        ks = []
        for ki in range(3):
            di = ki - 1
            if di != 0 and d >= H:
                continue
            for kj in range(3):
                dj = kj - 1
                if dj != 0 and d >= W:
                    continue
                ks.append((ki * 3 + kj, di, dj))
        return ks

    def build_cols(yT, d):
        # yT: (C, HW) bf16.  Returns (len(kept)*C, HW) bf16 im2col slab.
        ks = kept_taps(d)
        if len(ks) == 1:                       # centre tap only (d >= H, W)
            return yT, ks
        yp = padded(yT)
        taps = []
        for _, di, dj in ks:
            start = pad + (di * W + dj) * d
            tap = yp[:, start:start + HW]
            if dj != 0:
                # Kill horizontal wrap-around (columns that should read the
                # zero padding of the neighbouring row).
                m = 2 * shifts.index(d) + (0 if dj < 0 else 1)
                tap = tap * masks_ref[m:m + 1, :]
            taps.append(tap)
        return jnp.concatenate(taps, axis=0), ks

    def weight_cols(wT, ks, c):
        # wT: (Cout, 9*c) bf16 -> (Cout, len(ks)*c) matching build_cols order.
        if len(ks) == 9:
            return wT
        return jnp.concatenate([wT[:, t * c:(t + 1) * c] for t, _, _ in ks],
                               axis=1)

    # ---- Merged stage 1 for all branches: ONE (nb*Cout, 9*Cin)@(9*Cin, HW). --
    xT = x_ref[0]                                           # (Cin, HW) bf16
    cols_x, ks_x = build_cols(xT, 1)                        # (9*Cin, HW)
    y1_all = jnp.dot(weight_cols(w1_ref[...], ks_x, Cin), cols_x,
                     preferred_element_type=jnp.float32)
    y1_all = jnp.maximum(y1_all + b1_ref[...], 0.0)         # (nb*Cout, HW) f32

    branch_outs = []
    cap_flow = jnp.zeros((Cout, HW), jnp.float32)
    for b, rate in enumerate(rates):
        # Stage 1 output of this branch + residual cap_flow.
        y = y1_all[b * Cout:(b + 1) * Cout, :] + cap_flow

        # Stage 2: ConvNormAct(Cout, Cout, 3, padding=rate, dilation=rate).
        cols, ks = build_cols(y.astype(jnp.bfloat16), rate)
        y = jnp.dot(weight_cols(w2_ref[b], ks, Cout), cols,
                    preferred_element_type=jnp.float32)
        y = jnp.maximum(y + b2_ref[b], 0.0)

        # Stage 3: ConvNormAct(Cout, Cout, 3, 1, 1).
        cols, ks = build_cols(y.astype(jnp.bfloat16), 1)
        y = jnp.dot(weight_cols(w3_ref[b], ks, Cout), cols,
                    preferred_element_type=jnp.float32)
        y = jnp.maximum(y + b3_ref[b], 0.0)

        cap_flow = y
        branch_outs.append(y)

    # Global-pool branch (computed in the wrapper), broadcast over all pixels
    # (bilinear upsample of a 1x1 map with align_corners=True == broadcast).
    branch_outs.append(jnp.broadcast_to(gp_ref[0], (Cout, HW)))

    cat = jnp.concatenate(branch_outs, axis=0)              # (Ctot, HW) f32
    out_ref[...] = cat[None, :, :].astype(out_ref.dtype)


def cap_pyramid(x_flat, w1, b1, w2, b2, w3, b3, gp, masks,
                *, H, W, Cin, Cout, rates, pad, shifts):
    """x_flat: (N, Cin, H*W) bf16.  Returns (N, Ctot, H*W) f32."""
    N = x_flat.shape[0]
    HW = H * W
    nb = len(rates)
    Ctot = (nb + 1) * Cout
    kernel = functools.partial(_pyramid_kernel, H=H, W=W, Cin=Cin, Cout=Cout,
                               rates=tuple(rates), pad=pad,
                               shifts=tuple(shifts))
    return pl.pallas_call(
        kernel,
        out_shape=jax.ShapeDtypeStruct((N, Ctot, HW), jnp.float32),
        grid=(N,),
        in_specs=[
            pl.BlockSpec((1, Cin, HW), lambda n: (n, 0, 0)),
            pl.BlockSpec((nb * Cout, 9 * Cin), lambda n: (0, 0)),
            pl.BlockSpec((nb * Cout, 1), lambda n: (0, 0)),
            pl.BlockSpec((nb, Cout, 9 * Cout), lambda n: (0, 0, 0)),
            pl.BlockSpec((nb, Cout, 1), lambda n: (0, 0, 0)),
            pl.BlockSpec((nb, Cout, 9 * Cout), lambda n: (0, 0, 0)),
            pl.BlockSpec((nb, Cout, 1), lambda n: (0, 0, 0)),
            pl.BlockSpec((1, Cout, 1), lambda n: (n, 0, 0)),
            pl.BlockSpec((masks.shape[0], HW), lambda n: (0, 0)),
        ],
        out_specs=pl.BlockSpec((1, Ctot, HW), lambda n: (n, 0, 0)),
        compiler_params=pltpu.CompilerParams(
            dimension_semantics=("parallel",)),
    )(x_flat, w1, b1, w2, b2, w3, b3, gp, masks)


# ----------------------------------------------------------------------------
# Pallas kernel 2: CBAM application + fuse 1x1 conv + folded BN + ReLU.
# Channel attention is pre-folded into a per-batch (Cout, Ctot) weight on the
# host; the kernel only multiplies by the lane-dense spatial attention.
# ----------------------------------------------------------------------------
def _fuse_kernel(cat_ref, sa_ref, w_ref, b_ref, out_ref):
    xm = (cat_ref[0] * sa_ref[0]).astype(jnp.bfloat16)      # (Ctot, HW) bf16
    y = jnp.dot(w_ref[0], xm, preferred_element_type=jnp.float32)
    y = jnp.maximum(y + b_ref[...], 0.0)                    # folded BN + ReLU
    out_ref[...] = y[None, :, :].astype(out_ref.dtype)


def cap_fuse(cat_flat, sa_flat, w_eff, bias, *, Cout):
    """cat_flat: (N,Ctot,HW) f32, sa_flat: (N,1,HW) f32, w_eff: (N,Cout,Ctot) bf16."""
    N, Ctot, HW = cat_flat.shape
    return pl.pallas_call(
        _fuse_kernel,
        out_shape=jax.ShapeDtypeStruct((N, Cout, HW), jnp.float32),
        grid=(N,),
        in_specs=[
            pl.BlockSpec((1, Ctot, HW), lambda n: (n, 0, 0)),
            pl.BlockSpec((1, 1, HW), lambda n: (n, 0, 0)),
            pl.BlockSpec((1, Cout, Ctot), lambda n: (n, 0, 0)),
            pl.BlockSpec((Cout, 1), lambda n: (0, 0)),
        ],
        out_specs=pl.BlockSpec((1, Cout, HW), lambda n: (n, 0, 0)),
        compiler_params=pltpu.CompilerParams(
            dimension_semantics=("parallel",)),
    )(cat_flat, sa_flat, w_eff, bias)


# ----------------------------------------------------------------------------
# CBAM attention gates (tiny glue reductions / MLP / 7x7 conv in plain JAX).
# ----------------------------------------------------------------------------
def channel_attention(x_flat, p):
    avg = jnp.mean(x_flat, axis=2)                          # (N, C)
    mx = jnp.max(x_flat, axis=2)                            # (N, C)

    def mlp(v):
        return jnp.maximum(v @ p["ca_w1"], 0.0) @ p["ca_w2"]

    return jax.nn.sigmoid(mlp(avg) + mlp(mx))               # (N, C)


def spatial_attention(x_flat, p, H, W):
    N = x_flat.shape[0]
    avg = jnp.mean(x_flat, axis=1, keepdims=True)           # (N,1,HW)
    mx = jnp.max(x_flat, axis=1, keepdims=True)             # (N,1,HW)
    cat = jnp.concatenate([avg, mx], axis=1).reshape(N, 2, H, W)
    y = lax.conv_general_dilated(
        cat, p["sa_w"], window_strides=(1, 1),
        padding=[(3, 3), (3, 3)],
        dimension_numbers=("NCHW", "HWIO", "NCHW"))
    return jax.nn.sigmoid(y).reshape(N, 1, H * W)           # (N,1,HW)


# ----------------------------------------------------------------------------
# Parameter initialization (deterministic, synthetic; BN eval-mode folded)
# ----------------------------------------------------------------------------
def _folded_bn(key, c):
    k1, k2, k3, k4 = jax.random.split(key, 4)
    gamma = 1.0 + 0.1 * jax.random.normal(k1, (c,))
    beta = 0.1 * jax.random.normal(k2, (c,))
    mean = 0.1 * jax.random.normal(k3, (c,))
    var = 1.0 + 0.1 * jnp.abs(jax.random.normal(k4, (c,)))
    scale = gamma / jnp.sqrt(var + 1e-5)
    bias = beta - mean * scale
    return scale.astype(jnp.float32), bias.astype(jnp.float32)


def init_params(key, in_channels, out_channels, atrous_rates):
    n_branch = len(atrous_rates)
    Ctot = (n_branch + 1) * out_channels
    Cr = max(Ctot // 16, 1)
    keys = iter(jax.random.split(key, 256))

    def conv_w(shape):
        return (0.1 * jax.random.normal(next(keys), shape)).astype(jnp.float32)

    branches = []
    for _ in atrous_rates:
        s1, b1 = _folded_bn(next(keys), out_channels)
        s2, b2 = _folded_bn(next(keys), out_channels)
        s3, b3 = _folded_bn(next(keys), out_channels)
        branches.append(dict(
            w1=conv_w((3, 3, in_channels, out_channels)), s1=s1, b1=b1,
            w2=conv_w((3, 3, out_channels, out_channels)), s2=s2, b2=b2,
            w3=conv_w((3, 3, out_channels, out_channels)), s3=s3, b3=b3,
        ))

    ps, pb = _folded_bn(next(keys), out_channels)
    pool = dict(w=conv_w((in_channels, out_channels)), s=ps, b=pb)

    cbam = dict(
        ca_w1=conv_w((Ctot, Cr)),
        ca_w2=conv_w((Cr, Ctot)),
        sa_w=conv_w((7, 7, 2, 1)),
    )

    fs, fb = _folded_bn(next(keys), out_channels)
    fuse = dict(w=conv_w((Ctot, out_channels)), s=fs, b=fb)

    return dict(branches=branches, pool=pool, cbam=cbam, fuse=fuse,
                atrous_rates=tuple(atrous_rates), out_channels=out_channels)


# ----------------------------------------------------------------------------
# CAP forward
# ----------------------------------------------------------------------------
def cap_forward(x_nchw, params):
    x = x_nchw.astype(jnp.float32)
    N, Cin, H, W = x.shape
    HW = H * W
    Cout = params["out_channels"]
    rates = params["atrous_rates"]
    nb = len(rates)
    Ctot = (nb + 1) * Cout

    br = params["branches"]

    def fold_t(w, s):
        # Fold BN scale into the conv weight; (3,3,Ci,Co) -> (Co, 9*Ci) bf16,
        # columns ordered tap-major / channel-minor to match the kernel im2col.
        return (w * s).reshape(-1, w.shape[-1]).T.astype(jnp.bfloat16)

    # Stage-1 weights merged across branches (one big matmul in the kernel).
    W1 = jnp.concatenate([fold_t(br[b]["w1"], br[b]["s1"]) for b in range(nb)],
                         axis=0)                                   # (nb*Co,9Ci)
    B1 = jnp.concatenate([br[b]["b1"] for b in range(nb)], axis=0)[:, None]
    W2 = jnp.stack([fold_t(br[b]["w2"], br[b]["s2"]) for b in range(nb)])
    B2 = jnp.stack([br[b]["b2"] for b in range(nb)])[:, :, None]
    W3 = jnp.stack([fold_t(br[b]["w3"], br[b]["s3"]) for b in range(nb)])
    B3 = jnp.stack([br[b]["b3"] for b in range(nb)])[:, :, None]

    # Global-pool branch (AdaptiveAvgPool2d(1) + 1x1 ConvNormAct) hoisted here.
    gp = jnp.mean(x, axis=(2, 3))                                  # (N, Cin)
    gy = jnp.maximum(gp @ (params["pool"]["w"] * params["pool"]["s"])
                     + params["pool"]["b"], 0.0)                   # (N, Cout)

    # Horizontal-edge masks for the flattened-spatial layout (one 0/1 row per
    # (shift, side) that any kept dilated tap needs).
    shifts = tuple(sorted({d for d in (1,) + tuple(rates) if d < W}))
    w_idx = jnp.arange(HW, dtype=jnp.int32) % W
    mrows = []
    for s in shifts:
        mrows.append(w_idx >= s)          # tap offset dj = -1
        mrows.append(w_idx < W - s)       # tap offset dj = +1
    masks = jnp.stack(mrows).astype(jnp.bfloat16)                  # (2S, HW)

    # Zero-lane halo: covers the largest kept vertical shift plus one row.
    pad = (max([1] + [r for r in rates if r < H]) + 1) * W

    x_flat = x.reshape(N, Cin, HW).astype(jnp.bfloat16)
    cat_flat = cap_pyramid(x_flat, W1, B1, W2, B2, W3, B3,
                           gy[:, :, None], masks,
                           H=H, W=W, Cin=Cin, Cout=Cout, rates=rates,
                           pad=pad, shifts=shifts)                 # (N,Ctot,HW)

    # CBAM gates (tiny, plain JAX): x' = x*Mc(x); x'' = x'*Ms(x').
    ca = channel_attention(cat_flat, params["cbam"])               # (N, Ctot)
    sa = spatial_attention(cat_flat * ca[:, :, None],
                           params["cbam"], H, W)                   # (N,1,HW)

    # Fold BN scale + channel attention into a per-batch fuse weight.
    WFt = (params["fuse"]["w"] * params["fuse"]["s"]).T            # (Cout,Ctot)
    w_eff = (WFt[None, :, :] * ca[:, None, :]).astype(jnp.bfloat16)
    out_flat = cap_fuse(cat_flat, sa, w_eff,
                        params["fuse"]["b"][:, None], Cout=Cout)
    # Dropout(0.5): identity in eval mode.
    return out_flat.reshape(N, Cout, H, W)                         # NCHW


# ----------------------------------------------------------------------------
if __name__ == "__main__":
    key = jax.random.PRNGKey(0)
    kx, kp = jax.random.split(key)

    N, Cin, H, W = 2, 4, 16, 16
    Cout = 8
    rates = (1, 2, 4, 8, 16)

    x = jax.random.normal(kx, (N, Cin, H, W), jnp.float32)
    params = init_params(kp, Cin, Cout, rates)

    out = jax.block_until_ready(cap_forward(x, params))

    assert out.shape == (N, Cout, H, W), out.shape
    assert bool(jnp.all(jnp.isfinite(out)))
    print("KERNEL_OK")
</pallas_src>

<mosaic_0001>
module attributes {stable_mosaic.version = 11 : i64} {
  func.func @_pyramid_kernel(%arg0: i32, %arg1: memref<1x4x256xbf16, #tpu.memory_space<vmem>>, %arg2: memref<40x36xbf16, #tpu.memory_space<vmem>>, %arg3: memref<40x1xf32, #tpu.memory_space<vmem>>, %arg4: memref<5x8x72xbf16, #tpu.memory_space<vmem>>, %arg5: memref<5x8x1xf32, #tpu.memory_space<vmem>>, %arg6: memref<5x8x72xbf16, #tpu.memory_space<vmem>>, %arg7: memref<5x8x1xf32, #tpu.memory_space<vmem>>, %arg8: memref<1x8x1xf32, #tpu.memory_space<vmem>>, %arg9: memref<8x256xbf16, #tpu.memory_space<vmem>>, %arg10: memref<1x48x256xf32, #tpu.memory_space<vmem>>) attributes {dimension_semantics = [#tpu.dimension_semantics<parallel>], iteration_bounds = array<i64: 2>, scalar_prefetch = 0 : i64, scratch_operands = 0 : i64, tpu.core_type = #tpu.core_type<tc>, window_params = [{transform_indices = @transform_0, window_bounds = array<i64: 1, 4, 256>}, {pipeline_mode = #tpu.pipeline_mode<synchronous>, transform_indices = @transform_1, window_bounds = array<i64: 40, 36>}, {pipeline_mode = #tpu.pipeline_mode<synchronous>, transform_indices = @transform_2, window_bounds = array<i64: 40, 1>}, {pipeline_mode = #tpu.pipeline_mode<synchronous>, transform_indices = @transform_3, window_bounds = array<i64: 5, 8, 72>}, {pipeline_mode = #tpu.pipeline_mode<synchronous>, transform_indices = @transform_4, window_bounds = array<i64: 5, 8, 1>}, {pipeline_mode = #tpu.pipeline_mode<synchronous>, transform_indices = @transform_5, window_bounds = array<i64: 5, 8, 72>}, {pipeline_mode = #tpu.pipeline_mode<synchronous>, transform_indices = @transform_6, window_bounds = array<i64: 5, 8, 1>}, {transform_indices = @transform_7, window_bounds = array<i64: 1, 8, 1>}, {pipeline_mode = #tpu.pipeline_mode<synchronous>, transform_indices = @transform_8, window_bounds = array<i64: 8, 256>}, {transform_indices = @transform_9, window_bounds = array<i64: 1, 48, 256>}]} {
    %c0 = arith.constant 0 : index
    %c0_0 = arith.constant 0 : index
    %c0_1 = arith.constant 0 : index
    %0 = vector.load %arg1[%c0, %c0_0, %c0_1] : memref<1x4x256xbf16, #tpu.memory_space<vmem>>, vector<1x4x256xbf16>
    %1 = vector.shape_cast %0 : vector<1x4x256xbf16> to vector<4x256xbf16>
    %cst = arith.constant 0.000000e+00 : bf16
    %2 = vector.broadcast %cst : bf16 to vector<4x144xbf16>
    %3 = tpu.concatenate %2, %1, %2 in 1 : vector<4x144xbf16>, vector<4x256xbf16>, vector<4x144xbf16> -> vector<4x544xbf16>
    %4 = vector.extract_strided_slice %3 {offsets = [0, 127], sizes = [4, 256], strides = [1, 1]} : vector<4x544xbf16> to vector<4x256xbf16>
    %c0_2 = arith.constant 0 : index
    %c0_3 = arith.constant 0 : index
    %5 = vector.load %arg9[%c0_2, %c0_3] : memref<8x256xbf16, #tpu.memory_space<vmem>>, vector<1x256xbf16>
    %6 = vector.broadcast %5 : vector<1x256xbf16> to vector<4x256xbf16>
    %7 = arith.mulf %4, %6 : vector<4x256xbf16>
    %8 = vector.extract_strided_slice %3 {offsets = [0, 128], sizes = [4, 256], strides = [1, 1]} : vector<4x544xbf16> to vector<4x256xbf16>
    %9 = vector.extract_strided_slice %3 {offsets = [0, 129], sizes = [4, 256], strides = [1, 1]} : vector<4x544xbf16> to vector<4x256xbf16>
    %c1 = arith.constant 1 : index
    %c0_4 = arith.constant 0 : index
    %10 = vector.load %arg9[%c1, %c0_4] : memref<8x256xbf16, #tpu.memory_space<vmem>>, vector<1x256xbf16>
    %11 = vector.broadcast %10 : vector<1x256xbf16> to vector<4x256xbf16>
    %12 = arith.mulf %9, %11 : vector<4x256xbf16>
    %13 = vector.extract_strided_slice %3 {offsets = [0, 143], sizes = [4, 256], strides = [1, 1]} : vector<4x544xbf16> to vector<4x256xbf16>
    %c0_5 = arith.constant 0 : index
    %c0_6 = arith.constant 0 : index
    %14 = vector.load %arg9[%c0_5, %c0_6] : memref<8x256xbf16, #tpu.memory_space<vmem>>, vector<1x256xbf16>
    %15 = vector.broadcast %14 : vector<1x256xbf16> to vector<4x256xbf16>
    %16 = arith.mulf %13, %15 : vector<4x256xbf16>
    %17 = vector.extract_strided_slice %3 {offsets = [0, 144], sizes = [4, 256], strides = [1, 1]} : vector<4x544xbf16> to vector<4x256xbf16>
    %18 = vector.extract_strided_slice %3 {offsets = [0, 145], sizes = [4, 256], strides = [1, 1]} : vector<4x544xbf16> to vector<4x256xbf16>
    %c1_7 = arith.constant 1 : index
    %c0_8 = arith.constant 0 : index
    %19 = vector.load %arg9[%c1_7, %c0_8] : memref<8x256xbf16, #tpu.memory_space<vmem>>, vector<1x256xbf16>
    %20 = vector.broadcast %19 : vector<1x256xbf16> to vector<4x256xbf16>
    %21 = arith.mulf %18, %20 : vector<4x256xbf16>
    %22 = vector.extract_strided_slice %3 {offsets = [0, 159], sizes = [4, 256], strides = [1, 1]} : vector<4x544xbf16> to vector<4x256xbf16>
    %c0_9 = arith.constant 0 : index
    %c0_10 = arith.constant 0 : index
    %23 = vector.load %arg9[%c0_9, %c0_10] : memref<8x256xbf16, #tpu.memory_space<vmem>>, vector<1x256xbf16>
    %24 = vector.broadcast %23 : vector<1x256xbf16> to vector<4x256xbf16>
    %25 = arith.mulf %22, %24 : vector<4x256xbf16>
    %26 = vector.extract_strided_slice %3 {offsets = [0, 160], sizes = [4, 256], strides = [1, 1]} : vector<4x544xbf16> to vector<4x256xbf16>
    %27 = vector.extract_strided_slice %3 {offsets = [0, 161], sizes = [4, 256], strides = [1, 1]} : vector<4x544xbf16> to vector<4x256xbf16>
    %c1_11 = arith.constant 1 : index
    %c0_12 = arith.constant 0 : index
    %28 = vector.load %arg9[%c1_11, %c0_12] : memref<8x256xbf16, #tpu.memory_space<vmem>>, vector<1x256xbf16>
    %29 = vector.broadcast %28 : vector<1x256xbf16> to vector<4x256xbf16>
    %30 = arith.mulf %27, %29 : vector<4x256xbf16>
    %31 = tpu.concatenate %7, %8, %12, %16, %17, %21, %25, %26, %30 in 0 : vector<4x256xbf16>, vector<4x256xbf16>, vector<4x256xbf16>, vector<4x256xbf16>, vector<4x256xbf16>, vector<4x256xbf16>, vector<4x256xbf16>, vector<4x256xbf16>, vector<4x256xbf16> -> vector<36x256xbf16>
    %c0_13 = arith.constant 0 : index
    %c0_14 = arith.constant 0 : index
    %32 = vector.load %arg2[%c0_13, %c0_14] : memref<40x36xbf16, #tpu.memory_space<vmem>>, vector<40x36xbf16>
    %cst_15 = arith.constant dense<0.000000e+00> : vector<40x256xf32>
    %33 = tpu.matmul %32, %31, %cst_15 {dimension_numbers = #tpu.dot_dimension_numbers<[1], [0], [0], [1], [0, 0, 1, 1], [], []>} : vector<40x36xbf16>, vector<36x256xbf16>, vector<40x256xf32> -> vector<40x256xf32>
    %c0_16 = arith.constant 0 : index
    %c0_17 = arith.constant 0 : index
    %34 = vector.load %arg3[%c0_16, %c0_17] : memref<40x1xf32, #tpu.memory_space<vmem>>, vector<40x1xf32>
    %35 = vector.broadcast %34 : vector<40x1xf32> to vector<40x256xf32>
    %36 = arith.addf %33, %35 : vector<40x256xf32>
    %cst_18 = arith.constant 0.000000e+00 : f32
    %37 = vector.broadcast %cst_18 : f32 to vector<40x256xf32>
    %38 = arith.maximumf %36, %37 : vector<40x256xf32>
    %cst_19 = arith.constant 0.000000e+00 : f32
    %39 = vector.broadcast %cst_19 : f32 to vector<8x256xf32>
    %40 = vector.extract_strided_slice %38 {offsets = [0, 0], sizes = [8, 256], strides = [1, 1]} : vector<40x256xf32> to vector<8x256xf32>
    %41 = arith.addf %40, %39 : vector<8x256xf32>
    %42 = arith.truncf %41 : vector<8x256xf32> to vector<8x256xbf16>
    %cst_20 = arith.constant 0.000000e+00 : bf16
    %43 = vector.broadcast %cst_20 : bf16 to vector<8x144xbf16>
    %44 = tpu.concatenate %43, %42, %43 in 1 : vector<8x144xbf16>, vector<8x256xbf16>, vector<8x144xbf16> -> vector<8x544xbf16>
    %45 = vector.extract_strided_slice %44 {offsets = [0, 127], sizes = [8, 256], strides = [1, 1]} : vector<8x544xbf16> to vector<8x256xbf16>
    %c0_21 = arith.constant 0 : index
    %c0_22 = arith.constant 0 : index
    %46 = vector.load %arg9[%c0_21, %c0_22] : memref<8x256xbf16, #tpu.memory_space<vmem>>, vector<1x256xbf16>
    %47 = vector.broadcast %46 : vector<1x256xbf16> to vector<8x256xbf16>
    %48 = arith.mulf %45, %47 : vector<8x256xbf16>
    %49 = vector.extract_strided_slice %44 {offsets = [0, 128], sizes = [8, 256], strides = [1, 1]} : vector<8x544xbf16> to vector<8x256xbf16>
    %50 = vector.extract_strided_slice %44 {offsets = [0, 129], sizes = [8, 256], strides = [1, 1]} : vector<8x544xbf16> to vector<8x256xbf16>
    %c1_23 = arith.constant 1 : index
    %c0_24 = arith.constant 0 : index
    %51 = vector.load %arg9[%c1_23, %c0_24] : memref<8x256xbf16, #tpu.memory_space<vmem>>, vector<1x256xbf16>
    %52 = vector.broadcast %51 : vector<1x256xbf16> to vector<8x256xbf16>
    %53 = arith.mulf %50, %52 : vector<8x256xbf16>
    %54 = vector.extract_strided_slice %44 {offsets = [0, 143], sizes = [8, 256], strides = [1, 1]} : vector<8x544xbf16> to vector<8x256xbf16>
    %c0_25 = arith.constant 0 : index
    %c0_26 = arith.constant 0 : index
    %55 = vector.load %arg9[%c0_25, %c0_26] : memref<8x256xbf16, #tpu.memory_space<vmem>>, vector<1x256xbf16>
    %56 = vector.broadcast %55 : vector<1x256xbf16> to vector<8x256xbf16>
    %57 = arith.mulf %54, %56 : vector<8x256xbf16>
    %58 = vector.extract_strided_slice %44 {offsets = [0, 144], sizes = [8, 256], strides = [1, 1]} : vector<8x544xbf16> to vector<8x256xbf16>
    %59 = vector.extract_strided_slice %44 {offsets = [0, 145], sizes = [8, 256], strides = [1, 1]} : vector<8x544xbf16> to vector<8x256xbf16>
    %c1_27 = arith.constant 1 : index
    %c0_28 = arith.constant 0 : index
    %60 = vector.load %arg9[%c1_27, %c0_28] : memref<8x256xbf16, #tpu.memory_space<vmem>>, vector<1x256xbf16>
    %61 = vector.broadcast %60 : vector<1x256xbf16> to vector<8x256xbf16>
    %62 = arith.mulf %59, %61 : vector<8x256xbf16>
    %63 = vector.extract_strided_slice %44 {offsets = [0, 159], sizes = [8, 256], strides = [1, 1]} : vector<8x544xbf16> to vector<8x256xbf16>
    %c0_29 = arith.constant 0 : index
    %c0_30 = arith.constant 0 : index
    %64 = vector.load %arg9[%c0_29, %c0_30] : memref<8x256xbf16, #tpu.memory_space<vmem>>, vector<1x256xbf16>
    %65 = vector.broadcast %64 : vector<1x256xbf16> to vector<8x256xbf16>
    %66 = arith.mulf %63, %65 : vector<8x256xbf16>
    %67 = vector.extract_strided_slice %44 {offsets = [0, 160], sizes = [8, 256], strides = [1, 1]} : vector<8x544xbf16> to vector<8x256xbf16>
    %68 = vector.extract_strided_slice %44 {offsets = [0, 161], sizes = [8, 256], strides = [1, 1]} : vector<8x544xbf16> to vector<8x256xbf16>
    %c1_31 = arith.constant 1 : index
    %c0_32 = arith.constant 0 : index
    %69 = vector.load %arg9[%c1_31, %c0_32] : memref<8x256xbf16, #tpu.memory_space<vmem>>, vector<1x256xbf16>
    %70 = vector.broadcast %69 : vector<1x256xbf16> to vector<8x256xbf16>
    %71 = arith.mulf %68, %70 : vector<8x256xbf16>
    %72 = tpu.concatenate %48, %49, %53, %57, %58, %62, %66, %67, %71 in 0 : vector<8x256xbf16>, vector<8x256xbf16>, vector<8x256xbf16>, vector<8x256xbf16>, vector<8x256xbf16>, vector<8x256xbf16>, vector<8x256xbf16>, vector<8x256xbf16>, vector<8x256xbf16> -> vector<72x256xbf16>
    %c0_33 = arith.constant 0 : index
    %c0_34 = arith.constant 0 : index
    %c0_35 = arith.constant 0 : index
    %73 = vector.load %arg4[%c0_33, %c0_34, %c0_35] : memref<5x8x72xbf16, #tpu.memory_space<vmem>>, vector<1x8x72xbf16>
    %74 = vector.shape_cast %73 : vector<1x8x72xbf16> to vector<8x72xbf16>
    %cst_36 = arith.constant dense<0.000000e+00> : vector<8x256xf32>
    %75 = tpu.matmul %74, %72, %cst_36 {dimension_numbers = #tpu.dot_dimension_numbers<[1], [0], [0], [1], [0, 0, 1, 1], [], []>} : vector<8x72xbf16>, vector<72x256xbf16>, vector<8x256xf32> -> vector<8x256xf32>
    %c0_37 = arith.constant 0 : index
    %c0_38 = arith.constant 0 : index
    %c0_39 = arith.constant 0 : index
    %76 = vector.load %arg5[%c0_37, %c0_38, %c0_39] : memref<5x8x1xf32, #tpu.memory_space<vmem>>, vector<1x8x1xf32>
    %77 = vector.shape_cast %76 : vector<1x8x1xf32> to vector<8x1xf32>
    %78 = vector.broadcast %77 : vector<8x1xf32> to vector<8x256xf32>
    %79 = arith.addf %75, %78 : vector<8x256xf32>
    %cst_40 = arith.constant 0.000000e+00 : f32
    %80 = vector.broadcast %cst_40 : f32 to vector<8x256xf32>
    %81 = arith.maximumf %79, %80 : vector<8x256xf32>
    %82 = arith.truncf %81 : vector<8x256xf32> to vector<8x256xbf16>
    %cst_41 = arith.constant 0.000000e+00 : bf16
    %83 = vector.broadcast %cst_41 : bf16 to vector<8x144xbf16>
    %84 = tpu.concatenate %83, %82, %83 in 1 : vector<8x144xbf16>, vector<8x256xbf16>, vector<8x144xbf16> -> vector<8x544xbf16>
    %85 = vector.extract_strided_slice %84 {offsets = [0, 127], sizes = [8, 256], strides = [1, 1]} : vector<8x544xbf16> to vector<8x256xbf16>
    %c0_42 = arith.constant 0 : index
    %c0_43 = arith.constant 0 : index
    %86 = vector.load %arg9[%c0_42, %c0_43] : memref<8x256xbf16, #tpu.memory_space<vmem>>, vector<1x256xbf16>
    %87 = vector.broadcast %86 : vector<1x256xbf16> to vector<8x256xbf16>
    %88 = arith.mulf %85, %87 : vector<8x256xbf16>
    %89 = vector.extract_strided_slice %84 {offsets = [0, 128], sizes = [8, 256], strides = [1, 1]} : vector<8x544xbf16> to vector<8x256xbf16>
    %90 = vector.extract_strided_slice %84 {offsets = [0, 129], sizes = [8, 256], strides = [1, 1]} : vector<8x544xbf16> to vector<8x256xbf16>
    %c1_44 = arith.constant 1 : index
    %c0_45 = arith.constant 0 : index
    %91 = vector.load %arg9[%c1_44, %c0_45] : memref<8x256xbf16, #tpu.memory_space<vmem>>, vector<1x256xbf16>
    %92 = vector.broadcast %91 : vector<1x256xbf16> to vector<8x256xbf16>
    %93 = arith.mulf %90, %92 : vector<8x256xbf16>
    %94 = vector.extract_strided_slice %84 {offsets = [0, 143], sizes = [8, 256], strides = [1, 1]} : vector<8x544xbf16> to vector<8x256xbf16>
    %c0_46 = arith.constant 0 : index
    %c0_47 = arith.constant 0 : index
    %95 = vector.load %arg9[%c0_46, %c0_47] : memref<8x256xbf16, #tpu.memory_space<vmem>>, vector<1x256xbf16>
    %96 = vector.broadcast %95 : vector<1x256xbf16> to vector<8x256xbf16>
    %97 = arith.mulf %94, %96 : vector<8x256xbf16>
    %98 = vector.extract_strided_slice %84 {offsets = [0, 144], sizes = [8, 256], strides = [1, 1]} : vector<8x544xbf16> to vector<8x256xbf16>
    %99 = vector.extract_strided_slice %84 {offsets = [0, 145], sizes = [8, 256], strides = [1, 1]} : vector<8x544xbf16> to vector<8x256xbf16>
    %c1_48 = arith.constant 1 : index
    %c0_49 = arith.constant 0 : index
    %100 = vector.load %arg9[%c1_48, %c0_49] : memref<8x256xbf16, #tpu.memory_space<vmem>>, vector<1x256xbf16>
    %101 = vector.broadcast %100 : vector<1x256xbf16> to vector<8x256xbf16>
    %102 = arith.mulf %99, %101 : vector<8x256xbf16>
    %103 = vector.extract_strided_slice %84 {offsets = [0, 159], sizes = [8, 256], strides = [1, 1]} : vector<8x544xbf16> to vector<8x256xbf16>
    %c0_50 = arith.constant 0 : index
    %c0_51 = arith.constant 0 : index
    %104 = vector.load %arg9[%c0_50, %c0_51] : memref<8x256xbf16, #tpu.memory_space<vmem>>, vector<1x256xbf16>
    %105 = vector.broadcast %104 : vector<1x256xbf16> to vector<8x256xbf16>
    %106 = arith.mulf %103, %105 : vector<8x256xbf16>
    %107 = vector.extract_strided_slice %84 {offsets = [0, 160], sizes = [8, 256], strides = [1, 1]} : vector<8x544xbf16> to vector<8x256xbf16>
    %108 = vector.extract_strided_slice %84 {offsets = [0, 161], sizes = [8, 256], strides = [1, 1]} : vector<8x544xbf16> to vector<8x256xbf16>
    %c1_52 = arith.constant 1 : index
    %c0_53 = arith.constant 0 : index
    %109 = vector.load %arg9[%c1_52, %c0_53] : memref<8x256xbf16, #tpu.memory_space<vmem>>, vector<1x256xbf16>
    %110 = vector.broadcast %109 : vector<1x256xbf16> to vector<8x256xbf16>
    %111 = arith.mulf %108, %110 : vector<8x256xbf16>
    %112 = tpu.concatenate %88, %89, %93, %97, %98, %102, %106, %107, %111 in 0 : vector<8x256xbf16>, vector<8x256xbf16>, vector<8x256xbf16>, vector<8x256xbf16>, vector<8x256xbf16>, vector<8x256xbf16>, vector<8x256xbf16>, vector<8x256xbf16>, vector<8x256xbf16> -> vector<72x256xbf16>
    %c0_54 = arith.constant 0 : index
    %c0_55 = arith.constant 0 : index
    %c0_56 = arith.constant 0 : index
    %113 = vector.load %arg6[%c0_54, %c0_55, %c0_56] : memref<5x8x72xbf16, #tpu.memory_space<vmem>>, vector<1x8x72xbf16>
    %114 = vector.shape_cast %113 : vector<1x8x72xbf16> to vector<8x72xbf16>
    %cst_57 = arith.constant dense<0.000000e+00> : vector<8x256xf32>
    %115 = tpu.matmul %114, %112, %cst_57 {dimension_numbers = #tpu.dot_dimension_numbers<[1], [0], [0], [1], [0, 0, 1, 1], [], []>} : vector<8x72xbf16>, vector<72x256xbf16>, vector<8x256xf32> -> vector<8x256xf32>
    %c0_58 = arith.constant 0 : index
    %c0_59 = arith.constant 0 : index
    %c0_60 = arith.constant 0 : index
    %116 = vector.load %arg7[%c0_58, %c0_59, %c0_60] : memref<5x8x1xf32, #tpu.memory_space<vmem>>, vector<1x8x1xf32>
    %117 = vector.shape_cast %116 : vector<1x8x1xf32> to vector<8x1xf32>
    %118 = vector.broadcast %117 : vector<8x1xf32> to vector<8x256xf32>
    %119 = arith.addf %115, %118 : vector<8x256xf32>
    %cst_61 = arith.constant 0.000000e+00 : f32
    %120 = vector.broadcast %cst_61 : f32 to vector<8x256xf32>
    %121 = arith.maximumf %119, %120 : vector<8x256xf32>
    %122 = vector.extract_strided_slice %38 {offsets = [8, 0], sizes = [8, 256], strides = [1, 1]} : vector<40x256xf32> to vector<8x256xf32>
    %123 = arith.addf %122, %121 : vector<8x256xf32>
    %124 = arith.truncf %123 : vector<8x256xf32> to vector<8x256xbf16>
    %cst_62 = arith.constant 0.000000e+00 : bf16
    %125 = vector.broadcast %cst_62 : bf16 to vector<8x144xbf16>
    %126 = tpu.concatenate %125, %124, %125 in 1 : vector<8x144xbf16>, vector<8x256xbf16>, vector<8x144xbf16> -> vector<8x544xbf16>
    %127 = vector.extract_strided_slice %126 {offsets = [0, 110], sizes = [8, 256], strides = [1, 1]} : vector<8x544xbf16> to vector<8x256xbf16>
    %c2 = arith.constant 2 : index
    %c0_63 = arith.constant 0 : index
    %128 = vector.load %arg9[%c2, %c0_63] : memref<8x256xbf16, #tpu.memory_space<vmem>>, vector<1x256xbf16>
    %129 = vector.broadcast %128 : vector<1x256xbf16> to vector<8x256xbf16>
    %130 = arith.mulf %127, %129 : vector<8x256xbf16>
    %131 = vector.extract_strided_slice %126 {offsets = [0, 112], sizes = [8, 256], strides = [1, 1]} : vector<8x544xbf16> to vector<8x256xbf16>
    %132 = vector.extract_strided_slice %126 {offsets = [0, 114], sizes = [8, 256], strides = [1, 1]} : vector<8x544xbf16> to vector<8x256xbf16>
    %c3 = arith.constant 3 : index
    %c0_64 = arith.constant 0 : index
    %133 = vector.load %arg9[%c3, %c0_64] : memref<8x256xbf16, #tpu.memory_space<vmem>>, vector<1x256xbf16>
    %134 = vector.broadcast %133 : vector<1x256xbf16> to vector<8x256xbf16>
    %135 = arith.mulf %132, %134 : vector<8x256xbf16>
    %136 = vector.extract_strided_slice %126 {offsets = [0, 142], sizes = [8, 256], strides = [1, 1]} : vector<8x544xbf16> to vector<8x256xbf16>
    %c2_65 = arith.constant 2 : index
    %c0_66 = arith.constant 0 : index
    %137 = vector.load %arg9[%c2_65, %c0_66] : memref<8x256xbf16, #tpu.memory_space<vmem>>, vector<1x256xbf16>
    %138 = vector.broadcast %137 : vector<1x256xbf16> to vector<8x256xbf16>
    %139 = arith.mulf %136, %138 : vector<8x256xbf16>
    %140 = vector.extract_strided_slice %126 {offsets = [0, 144], sizes = [8, 256], strides = [1, 1]} : vector<8x544xbf16> to vector<8x256xbf16>
    %141 = vector.extract_strided_slice %126 {offsets = [0, 146], sizes = [8, 256], strides = [1, 1]} : vector<8x544xbf16> to vector<8x256xbf16>
    %c3_67 = arith.constant 3 : index
    %c0_68 = arith.constant 0 : index
    %142 = vector.load %arg9[%c3_67, %c0_68] : memref<8x256xbf16, #tpu.memory_space<vmem>>, vector<1x256xbf16>
    %143 = vector.broadcast %142 : vector<1x256xbf16> to vector<8x256xbf16>
    %144 = arith.mulf %141, %143 : vector<8x256xbf16>
    %145 = vector.extract_strided_slice %126 {offsets = [0, 174], sizes = [8, 256], strides = [1, 1]} : vector<8x544xbf16> to vector<8x256xbf16>
    %c2_69 = arith.constant 2 : index
    %c0_70 = arith.constant 0 : index
    %146 = vector.load %arg9[%c2_69, %c0_70] : memref<8x256xbf16, #tpu.memory_space<vmem>>, vector<1x256xbf16>
    %147 = vector.broadcast %146 : vector<1x256xbf16> to vector<8x256xbf16>
    %148 = arith.mulf %145, %147 : vector<8x256xbf16>
    %149 = vector.extract_strided_slice %126 {offsets = [0, 176], sizes = [8, 256], strides = [1, 1]} : vector<8x544xbf16> to vector<8x256xbf16>
    %150 = vector.extract_strided_slice %126 {offsets = [0, 178], sizes = [8, 256], strides = [1, 1]} : vector<8x544xbf16> to vector<8x256xbf16>
    %c3_71 = arith.constant 3 : index
    %c0_72 = arith.constant 0 : index
    %151 = vector.load %arg9[%c3_71, %c0_72] : memref<8x256xbf16, #tpu.memory_space<vmem>>, vector<1x256xbf16>
    %152 = vector.broadcast %151 : vector<1x256xbf16> to vector<8x256xbf16>
    %153 = arith.mulf %150, %152 : vector<8x256xbf16>
    %154 = tpu.concatenate %130, %131, %135, %139, %140, %144, %148, %149, %153 in 0 : vector<8x256xbf16>, vector<8x256xbf16>, vector<8x256xbf16>, vector<8x256xbf16>, vector<8x256xbf16>, vector<8x256xbf16>, vector<8x256xbf16>, vector<8x256xbf16>, vector<8x256xbf16> -> vector<72x256xbf16>
    %c1_73 = arith.constant 1 : index
    %c0_74 = arith.constant 0 : index
    %c0_75 = arith.constant 0 : index
    %155 = vector.load %arg4[%c1_73, %c0_74, %c0_75] : memref<5x8x72xbf16, #tpu.memory_space<vmem>>, vector<1x8x72xbf16>
    %156 = vector.shape_cast %155 : vector<1x8x72xbf16> to vector<8x72xbf16>
    %cst_76 = arith.constant dense<0.000000e+00> : vector<8x256xf32>
    %157 = tpu.matmul %156, %154, %cst_76 {dimension_numbers = #tpu.dot_dimension_numbers<[1], [0], [0], [1], [0, 0, 1, 1], [], []>} : vector<8x72xbf16>, vector<72x256xbf16>, vector<8x256xf32> -> vector<8x256xf32>
    %c1_77 = arith.constant 1 : index
    %c0_78 = arith.constant 0 : index
    %c0_79 = arith.constant 0 : index
    %158 = vector.load %arg5[%c1_77, %c0_78, %c0_79] : memref<5x8x1xf32, #tpu.memory_space<vmem>>, vector<1x8x1xf32>
    %159 = vector.shape_cast %158 : vector<1x8x1xf32> to vector<8x1xf32>
    %160 = vector.broadcast %159 : vector<8x1xf32> to vector<8x256xf32>
    %161 = arith.addf %157, %160 : vector<8x256xf32>
    %cst_80 = arith.constant 0.000000e+00 : f32
    %162 = vector.broadcast %cst_80 : f32 to vector<8x256xf32>
    %163 = arith.maximumf %161, %162 : vector<8x256xf32>
    %164 = arith.truncf %163 : vector<8x256xf32> to vector<8x256xbf16>
    %cst_81 = arith.constant 0.000000e+00 : bf16
    %165 = vector.broadcast %cst_81 : bf16 to vector<8x144xbf16>
    %166 = tpu.concatenate %165, %164, %165 in 1 : vector<8x144xbf16>, vector<8x256xbf16>, vector<8x144xbf16> -> vector<8x544xbf16>
    %167 = vector.extract_strided_slice %166 {offsets = [0, 127], sizes = [8, 256], strides = [1, 1]} : vector<8x544xbf16> to vector<8x256xbf16>
    %c0_82 = arith.constant 0 : index
    %c0_83 = arith.constant 0 : index
    %168 = vector.load %arg9[%c0_82, %c0_83] : memref<8x256xbf16, #tpu.memory_space<vmem>>, vector<1x256xbf16>
    %169 = vector.broadcast %168 : vector<1x256xbf16> to vector<8x256xbf16>
    %170 = arith.mulf %167, %169 : vector<8x256xbf16>
    %171 = vector.extract_strided_slice %166 {offsets = [0, 128], sizes = [8, 256], strides = [1, 1]} : vector<8x544xbf16> to vector<8x256xbf16>
    %172 = vector.extract_strided_slice %166 {offsets = [0, 129], sizes = [8, 256], strides = [1, 1]} : vector<8x544xbf16> to vector<8x256xbf16>
    %c1_84 = arith.constant 1 : index
    %c0_85 = arith.constant 0 : index
    %173 = vector.load %arg9[%c1_84, %c0_85] : memref<8x256xbf16, #tpu.memory_space<vmem>>, vector<1x256xbf16>
    %174 = vector.broadcast %173 : vector<1x256xbf16> to vector<8x256xbf16>
    %175 = arith.mulf %172, %174 : vector<8x256xbf16>
    %176 = vector.extract_strided_slice %166 {offsets = [0, 143], sizes = [8, 256], strides = [1, 1]} : vector<8x544xbf16> to vector<8x256xbf16>
    %c0_86 = arith.constant 0 : index
    %c0_87 = arith.constant 0 : index
    %177 = vector.load %arg9[%c0_86, %c0_87] : memref<8x256xbf16, #tpu.memory_space<vmem>>, vector<1x256xbf16>
    %178 = vector.broadcast %177 : vector<1x256xbf16> to vector<8x256xbf16>
    %179 = arith.mulf %176, %178 : vector<8x256xbf16>
    %180 = vector.extract_strided_slice %166 {offsets = [0, 144], sizes = [8, 256], strides = [1, 1]} : vector<8x544xbf16> to vector<8x256xbf16>
    %181 = vector.extract_strided_slice %166 {offsets = [0, 145], sizes = [8, 256], strides = [1, 1]} : vector<8x544xbf16> to vector<8x256xbf16>
    %c1_88 = arith.constant 1 : index
    %c0_89 = arith.constant 0 : index
    %182 = vector.load %arg9[%c1_88, %c0_89] : memref<8x256xbf16, #tpu.memory_space<vmem>>, vector<1x256xbf16>
    %183 = vector.broadcast %182 : vector<1x256xbf16> to vector<8x256xbf16>
    %184 = arith.mulf %181, %183 : vector<8x256xbf16>
    %185 = vector.extract_strided_slice %166 {offsets = [0, 159], sizes = [8, 256], strides = [1, 1]} : vector<8x544xbf16> to vector<8x256xbf16>
    %c0_90 = arith.constant 0 : index
    %c0_91 = arith.constant 0 : index
    %186 = vector.load %arg9[%c0_90, %c0_91] : memref<8x256xbf16, #tpu.memory_space<vmem>>, vector<1x256xbf16>
    %187 = vector.broadcast %186 : vector<1x256xbf16> to vector<8x256xbf16>
    %188 = arith.mulf %185, %187 : vector<8x256xbf16>
    %189 = vector.extract_strided_slice %166 {offsets = [0, 160], sizes = [8, 256], strides = [1, 1]} : vector<8x544xbf16> to vector<8x256xbf16>
    %190 = vector.extract_strided_slice %166 {offsets = [0, 161], sizes = [8, 256], strides = [1, 1]} : vector<8x544xbf16> to vector<8x256xbf16>
    %c1_92 = arith.constant 1 : index
    %c0_93 = arith.constant 0 : index
    %191 = vector.load %arg9[%c1_92, %c0_93] : memref<8x256xbf16, #tpu.memory_space<vmem>>, vector<1x256xbf16>
    %192 = vector.broadcast %191 : vector<1x256xbf16> to vector<8x256xbf16>
    %193 = arith.mulf %190, %192 : vector<8x256xbf16>
    %194 = tpu.concatenate %170, %171, %175, %179, %180, %184, %188, %189, %193 in 0 : vector<8x256xbf16>, vector<8x256xbf16>, vector<8x256xbf16>, vector<8x256xbf16>, vector<8x256xbf16>, vector<8x256xbf16>, vector<8x256xbf16>, vector<8x256xbf16>, vector<8x256xbf16> -> vector<72x256xbf16>
    %c1_94 = arith.constant 1 : index
    %c0_95 = arith.constant 0 : index
    %c0_96 = arith.constant 0 : index
    %195 = vector.load %arg6[%c1_94, %c0_95, %c0_96] : memref<5x8x72xbf16, #tpu.memory_space<vmem>>, vector<1x8x72xbf16>
    %196 = vector.shape_cast %195 : vector<1x8x72xbf16> to vector<8x72xbf16>
    %cst_97 = arith.constant dense<0.000000e+00> : vector<8x256xf32>
    %197 = tpu.matmul %196, %194, %cst_97 {dimension_numbers = #tpu.dot_dimension_numbers<[1], [0], [0], [1], [0, 0, 1, 1], [], []>} : vector<8x72xbf16>, vector<72x256xbf16>, vector<8x256xf32> -> vector<8x256xf32>
    %c1_98 = arith.constant 1 : index
    %c0_99 = arith.constant 0 : index
    %c0_100 = arith.constant 0 : index
    %198 = vector.load %arg7[%c1_98, %c0_99, %c0_100] : memref<5x8x1xf32, #tpu.memory_space<vmem>>, vector<1x8x1xf32>
    %199 = vector.shape_cast %198 : vector<1x8x1xf32> to vector<8x1xf32>
    %200 = vector.broadcast %199 : vector<8x1xf32> to vector<8x256xf32>
    %201 = arith.addf %197, %200 : vector<8x256xf32>
    %cst_101 = arith.constant 0.000000e+00 : f32
    %202 = vector.broadcast %cst_101 : f32 to vector<8x256xf32>
    %203 = arith.maximumf %201, %202 : vector<8x256xf32>
    %204 = vector.extract_strided_slice %38 {offsets = [16, 0], sizes = [8, 256], strides = [1, 1]} : vector<40x256xf32> to vector<8x256xf32>
    %205 = arith.addf %204, %203 : vector<8x256xf32>
    %206 = arith.truncf %205 : vector<8x256xf32> to vector<8x256xbf16>
    %cst_102 = arith.constant 0.000000e+00 : bf16
    %207 = vector.broadcast %cst_102 : bf16 to vector<8x144xbf16>
    %208 = tpu.concatenate %207, %206, %207 in 1 : vector<8x144xbf16>, vector<8x256xbf16>, vector<8x144xbf16> -> vector<8x544xbf16>
    %209 = vector.extract_strided_slice %208 {offsets = [0, 76], sizes = [8, 256], strides = [1, 1]} : vector<8x544xbf16> to vector<8x256xbf16>
    %c4 = arith.constant 4 : index
    %c0_103 = arith.constant 0 : index
    %210 = vector.load %arg9[%c4, %c0_103] : memref<8x256xbf16, #tpu.memory_space<vmem>>, vector<1x256xbf16>
    %211 = vector.broadcast %210 : vector<1x256xbf16> to vector<8x256xbf16>
    %212 = arith.mulf %209, %211 : vector<8x256xbf16>
    %213 = vector.extract_strided_slice %208 {offsets = [0, 80], sizes = [8, 256], strides = [1, 1]} : vector<8x544xbf16> to vector<8x256xbf16>
    %214 = vector.extract_strided_slice %208 {offsets = [0, 84], sizes = [8, 256], strides = [1, 1]} : vector<8x544xbf16> to vector<8x256xbf16>
    %c5 = arith.constant 5 : index
    %c0_104 = arith.constant 0 : index
    %215 = vector.load %arg9[%c5, %c0_104] : memref<8x256xbf16, #tpu.memory_space<vmem>>, vector<1x256xbf16>
    %216 = vector.broadcast %215 : vector<1x256xbf16> to vector<8x256xbf16>
    %217 = arith.mulf %214, %216 : vector<8x256xbf16>
    %218 = vector.extract_strided_slice %208 {offsets = [0, 140], sizes = [8, 256], strides = [1, 1]} : vector<8x544xbf16> to vector<8x256xbf16>
    %c4_105 = arith.constant 4 : index
    %c0_106 = arith.constant 0 : index
    %219 = vector.load %arg9[%c4_105, %c0_106] : memref<8x256xbf16, #tpu.memory_space<vmem>>, vector<1x256xbf16>
    %220 = vector.broadcast %219 : vector<1x256xbf16> to vector<8x256xbf16>
    %221 = arith.mulf %218, %220 : vector<8x256xbf16>
    %222 = vector.extract_strided_slice %208 {offsets = [0, 144], sizes = [8, 256], strides = [1, 1]} : vector<8x544xbf16> to vector<8x256xbf16>
    %223 = vector.extract_strided_slice %208 {offsets = [0, 148], sizes = [8, 256], strides = [1, 1]} : vector<8x544xbf16> to vector<8x256xbf16>
    %c5_107 = arith.constant 5 : index
    %c0_108 = arith.constant 0 : index
    %224 = vector.load %arg9[%c5_107, %c0_108] : memref<8x256xbf16, #tpu.memory_space<vmem>>, vector<1x256xbf16>
    %225 = vector.broadcast %224 : vector<1x256xbf16> to vector<8x256xbf16>
    %226 = arith.mulf %223, %225 : vector<8x256xbf16>
    %227 = vector.extract_strided_slice %208 {offsets = [0, 204], sizes = [8, 256], strides = [1, 1]} : vector<8x544xbf16> to vector<8x256xbf16>
    %c4_109 = arith.constant 4 : index
    %c0_110 = arith.constant 0 : index
    %228 = vector.load %arg9[%c4_109, %c0_110] : memref<8x256xbf16, #tpu.memory_space<vmem>>, vector<1x256xbf16>
    %229 = vector.broadcast %228 : vector<1x256xbf16> to vector<8x256xbf16>
    %230 = arith.mulf %227, %229 : vector<8x256xbf16>
    %231 = vector.extract_strided_slice %208 {offsets = [0, 208], sizes = [8, 256], strides = [1, 1]} : vector<8x544xbf16> to vector<8x256xbf16>
    %232 = vector.extract_strided_slice %208 {offsets = [0, 212], sizes = [8, 256], strides = [1, 1]} : vector<8x544xbf16> to vector<8x256xbf16>
    %c5_111 = arith.constant 5 : index
    %c0_112 = arith.constant 0 : index
    %233 = vector.load %arg9[%c5_111, %c0_112] : memref<8x256xbf16, #tpu.memory_space<vmem>>, vector<1x256xbf16>
    %234 = vector.broadcast %233 : vector<1x256xbf16> to vector<8x256xbf16>
    %235 = arith.mulf %232, %234 : vector<8x256xbf16>
    %236 = tpu.concatenate %212, %213, %217, %221, %222, %226, %230, %231, %235 in 0 : vector<8x256xbf16>, vector<8x256xbf16>, vector<8x256xbf16>, vector<8x256xbf16>, vector<8x256xbf16>, vector<8x256xbf16>, vector<8x256xbf16>, vector<8x256xbf16>, vector<8x256xbf16> -> vector<72x256xbf16>
    %c2_113 = arith.constant 2 : index
    %c0_114 = arith.constant 0 : index
    %c0_115 = arith.constant 0 : index
    %237 = vector.load %arg4[%c2_113, %c0_114, %c0_115] : memref<5x8x72xbf16, #tpu.memory_space<vmem>>, vector<1x8x72xbf16>
    %238 = vector.shape_cast %237 : vector<1x8x72xbf16> to vector<8x72xbf16>
    %cst_116 = arith.constant dense<0.000000e+00> : vector<8x256xf32>
    %239 = tpu.matmul %238, %236, %cst_116 {dimension_numbers = #tpu.dot_dimension_numbers<[1], [0], [0], [1], [0, 0, 1, 1], [], []>} : vector<8x72xbf16>, vector<72x256xbf16>, vector<8x256xf32> -> vector<8x256xf32>
    %c2_117 = arith.constant 2 : index
    %c0_118 = arith.constant 0 : index
    %c0_119 = arith.constant 0 : index
    %240 = vector.load %arg5[%c2_117, %c0_118, %c0_119] : memref<5x8x1xf32, #tpu.memory_space<vmem>>, vector<1x8x1xf32>
    %241 = vector.shape_cast %240 : vector<1x8x1xf32> to vector<8x1xf32>
    %242 = vector.broadcast %241 : vector<8x1xf32> to vector<8x256xf32>
    %243 = arith.addf %239, %242 : vector<8x256xf32>
    %cst_120 = arith.constant 0.000000e+00 : f32
    %244 = vector.broadcast %cst_120 : f32 to vector<8x256xf32>
    %245 = arith.maximumf %243, %244 : vector<8x256xf32>
    %246 = arith.truncf %245 : vector<8x256xf32> to vector<8x256xbf16>
    %cst_121 = arith.constant 0.000000e+00 : bf16
    %247 = vector.broadcast %cst_121 : bf16 to vector<8x144xbf16>
    %248 = tpu.concatenate %247, %246, %247 in 1 : vector<8x144xbf16>, vector<8x256xbf16>, vector<8x144xbf16> -> vector<8x544xbf16>
    %249 = vector.extract_strided_slice %248 {offsets = [0, 127], sizes = [8, 256], strides = [1, 1]} : vector<8x544xbf16> to vector<8x256xbf16>
    %c0_122 = arith.constant 0 : index
    %c0_123 = arith.constant 0 : index
    %250 = vector.load %arg9[%c0_122, %c0_123] : memref<8x256xbf16, #tpu.memory_space<vmem>>, vector<1x256xbf16>
    %251 = vector.broadcast %250 : vector<1x256xbf16> to vector<8x256xbf16>
    %252 = arith.mulf %249, %251 : vector<8x256xbf16>
    %253 = vector.extract_strided_slice %248 {offsets = [0, 128], sizes = [8, 256], strides = [1, 1]} : vector<8x544xbf16> to vector<8x256xbf16>
    %254 = vector.extract_strided_slice %248 {offsets = [0, 129], sizes = [8, 256], strides = [1, 1]} : vector<8x544xbf16> to vector<8x256xbf16>
    %c1_124 = arith.constant 1 : index
    %c0_125 = arith.constant 0 : index
    %255 = vector.load %arg9[%c1_124, %c0_125] : memref<8x256xbf16, #tpu.memory_space<vmem>>, vector<1x256xbf16>
    %256 = vector.broadcast %255 : vector<1x256xbf16> to vector<8x256xbf16>
    %257 = arith.mulf %254, %256 : vector<8x256xbf16>
    %258 = vector.extract_strided_slice %248 {offsets = [0, 143], sizes = [8, 256], strides = [1, 1]} : vector<8x544xbf16> to vector<8x256xbf16>
    %c0_126 = arith.constant 0 : index
    %c0_127 = arith.constant 0 : index
    %259 = vector.load %arg9[%c0_126, %c0_127] : memref<8x256xbf16, #tpu.memory_space<vmem>>, vector<1x256xbf16>
    %260 = vector.broadcast %259 : vector<1x256xbf16> to vector<8x256xbf16>
    %261 = arith.mulf %258, %260 : vector<8x256xbf16>
    %262 = vector.extract_strided_slice %248 {offsets = [0, 144], sizes = [8, 256], strides = [1, 1]} : vector<8x544xbf16> to vector<8x256xbf16>
    %263 = vector.extract_strided_slice %248 {offsets = [0, 145], sizes = [8, 256], strides = [1, 1]} : vector<8x544xbf16> to vector<8x256xbf16>
    %c1_128 = arith.constant 1 : index
    %c0_129 = arith.constant 0 : index
    %264 = vector.load %arg9[%c1_128, %c0_129] : memref<8x256xbf16, #tpu.memory_space<vmem>>, vector<1x256xbf16>
    %265 = vector.broadcast %264 : vector<1x256xbf16> to vector<8x256xbf16>
    %266 = arith.mulf %263, %265 : vector<8x256xbf16>
    %267 = vector.extract_strided_slice %248 {offsets = [0, 159], sizes = [8, 256], strides = [1, 1]} : vector<8x544xbf16> to vector<8x256xbf16>
    %c0_130 = arith.constant 0 : index
    %c0_131 = arith.constant 0 : index
    %268 = vector.load %arg9[%c0_130, %c0_131] : memref<8x256xbf16, #tpu.memory_space<vmem>>, vector<1x256xbf16>
    %269 = vector.broadcast %268 : vector<1x256xbf16> to vector<8x256xbf16>
    %270 = arith.mulf %267, %269 : vector<8x256xbf16>
    %271 = vector.extract_strided_slice %248 {offsets = [0, 160], sizes = [8, 256], strides = [1, 1]} : vector<8x544xbf16> to vector<8x256xbf16>
    %272 = vector.extract_strided_slice %248 {offsets = [0, 161], sizes = [8, 256], strides = [1, 1]} : vector<8x544xbf16> to vector<8x256xbf16>
    %c1_132 = arith.constant 1 : index
    %c0_133 = arith.constant 0 : index
    %273 = vector.load %arg9[%c1_132, %c0_133] : memref<8x256xbf16, #tpu.memory_space<vmem>>, vector<1x256xbf16>
    %274 = vector.broadcast %273 : vector<1x256xbf16> to vector<8x256xbf16>
    %275 = arith.mulf %272, %274 : vector<8x256xbf16>
    %276 = tpu.concatenate %252, %253, %257, %261, %262, %266, %270, %271, %275 in 0 : vector<8x256xbf16>, vector<8x256xbf16>, vector<8x256xbf16>, vector<8x256xbf16>, vector<8x256xbf16>, vector<8x256xbf16>, vector<8x256xbf16>, vector<8x256xbf16>, vector<8x256xbf16> -> vector<72x256xbf16>
    %c2_134 = arith.constant 2 : index
    %c0_135 = arith.constant 0 : index
    %c0_136 = arith.constant 0 : index
    %277 = vector.load %arg6[%c2_134, %c0_135, %c0_136] : memref<5x8x72xbf16, #tpu.memory_space<vmem>>, vector<1x8x72xbf16>
    %278 = vector.shape_cast %277 : vector<1x8x72xbf16> to vector<8x72xbf16>
    %cst_137 = arith.constant dense<0.000000e+00> : vector<8x256xf32>
    %279 = tpu.matmul %278, %276, %cst_137 {dimension_numbers = #tpu.dot_dimension_numbers<[1], [0], [0], [1], [0, 0, 1, 1], [], []>} : vector<8x72xbf16>, vector<72x256xbf16>, vector<8x256xf32> -> vector<8x256xf32>
    %c2_138 = arith.constant 2 : index
    %c0_139 = arith.constant 0 : index
    %c0_140 = arith.constant 0 : index
    %280 = vector.load %arg7[%c2_138, %c0_139, %c0_140] : memref<5x8x1xf32, #tpu.memory_space<vmem>>, vector<1x8x1xf32>
    %281 = vector.shape_cast %280 : vector<1x8x1xf32> to vector<8x1xf32>
    %282 = vector.broadcast %281 : vector<8x1xf32> to vector<8x256xf32>
    %283 = arith.addf %279, %282 : vector<8x256xf32>
    %cst_141 = arith.constant 0.000000e+00 : f32
    %284 = vector.broadcast %cst_141 : f32 to vector<8x256xf32>
    %285 = arith.maximumf %283, %284 : vector<8x256xf32>
    %286 = vector.extract_strided_slice %38 {offsets = [24, 0], sizes = [8, 256], strides = [1, 1]} : vector<40x256xf32> to vector<8x256xf32>
    %287 = arith.addf %286, %285 : vector<8x256xf32>
    %288 = arith.truncf %287 : vector<8x256xf32> to vector<8x256xbf16>
    %cst_142 = arith.constant 0.000000e+00 : bf16
    %289 = vector.broadcast %cst_142 : bf16 to vector<8x144xbf16>
    %290 = tpu.concatenate %289, %288, %289 in 1 : vector<8x144xbf16>, vector<8x256xbf16>, vector<8x144xbf16> -> vector<8x544xbf16>
    %291 = vector.extract_strided_slice %290 {offsets = [0, 8], sizes = [8, 256], strides = [1, 1]} : vector<8x544xbf16> to vector<8x256xbf16>
    %c6 = arith.constant 6 : index
    %c0_143 = arith.constant 0 : index
    %292 = vector.load %arg9[%c6, %c0_143] : memref<8x256xbf16, #tpu.memory_space<vmem>>, vector<1x256xbf16>
    %293 = vector.broadcast %292 : vector<1x256xbf16> to vector<8x256xbf16>
    %294 = arith.mulf %291, %293 : vector<8x256xbf16>
    %295 = vector.extract_strided_slice %290 {offsets = [0, 16], sizes = [8, 256], strides = [1, 1]} : vector<8x544xbf16> to vector<8x256xbf16>
    %296 = vector.extract_strided_slice %290 {offsets = [0, 24], sizes = [8, 256], strides = [1, 1]} : vector<8x544xbf16> to vector<8x256xbf16>
    %c7 = arith.constant 7 : index
    %c0_144 = arith.constant 0 : index
    %297 = vector.load %arg9[%c7, %c0_144] : memref<8x256xbf16, #tpu.memory_space<vmem>>, vector<1x256xbf16>
    %298 = vector.broadcast %297 : vector<1x256xbf16> to vector<8x256xbf16>
    %299 = arith.mulf %296, %298 : vector<8x256xbf16>
    %300 = vector.extract_strided_slice %290 {offsets = [0, 136], sizes = [8, 256], strides = [1, 1]} : vector<8x544xbf16> to vector<8x256xbf16>
    %c6_145 = arith.constant 6 : index
    %c0_146 = arith.constant 0 : index
    %301 = vector.load %arg9[%c6_145, %c0_146] : memref<8x256xbf16, #tpu.memory_space<vmem>>, vector<1x256xbf16>
    %302 = vector.broadcast %301 : vector<1x256xbf16> to vector<8x256xbf16>
    %303 = arith.mulf %300, %302 : vector<8x256xbf16>
    %304 = vector.extract_strided_slice %290 {offsets = [0, 144], sizes = [8, 256], strides = [1, 1]} : vector<8x544xbf16> to vector<8x256xbf16>
    %305 = vector.extract_strided_slice %290 {offsets = [0, 152], sizes = [8, 256], strides = [1, 1]} : vector<8x544xbf16> to vector<8x256xbf16>
    %c7_147 = arith.constant 7 : index
    %c0_148 = arith.constant 0 : index
    %306 = vector.load %arg9[%c7_147, %c0_148] : memref<8x256xbf16, #tpu.memory_space<vmem>>, vector<1x256xbf16>
    %307 = vector.broadcast %306 : vector<1x256xbf16> to vector<8x256xbf16>
    %308 = arith.mulf %305, %307 : vector<8x256xbf16>
    %309 = vector.extract_strided_slice %290 {offsets = [0, 264], sizes = [8, 256], strides = [1, 1]} : vector<8x544xbf16> to vector<8x256xbf16>
    %c6_149 = arith.constant 6 : index
    %c0_150 = arith.constant 0 : index
    %310 = vector.load %arg9[%c6_149, %c0_150] : memref<8x256xbf16, #tpu.memory_space<vmem>>, vector<1x256xbf16>
    %311 = vector.broadcast %310 : vector<1x256xbf16> to vector<8x256xbf16>
    %312 = arith.mulf %309, %311 : vector<8x256xbf16>
    %313 = vector.extract_strided_slice %290 {offsets = [0, 272], sizes = [8, 256], strides = [1, 1]} : vector<8x544xbf16> to vector<8x256xbf16>
    %314 = vector.extract_strided_slice %290 {offsets = [0, 280], sizes = [8, 256], strides = [1, 1]} : vector<8x544xbf16> to vector<8x256xbf16>
    %c7_151 = arith.constant 7 : index
    %c0_152 = arith.constant 0 : index
    %315 = vector.load %arg9[%c7_151, %c0_152] : memref<8x256xbf16, #tpu.memory_space<vmem>>, vector<1x256xbf16>
    %316 = vector.broadcast %315 : vector<1x256xbf16> to vector<8x256xbf16>
    %317 = arith.mulf %314, %316 : vector<8x256xbf16>
    %318 = tpu.concatenate %294, %295, %299, %303, %304, %308, %312, %313, %317 in 0 : vector<8x256xbf16>, vector<8x256xbf16>, vector<8x256xbf16>, vector<8x256xbf16>, vector<8x256xbf16>, vector<8x256xbf16>, vector<8x256xbf16>, vector<8x256xbf16>, vector<8x256xbf16> -> vector<72x256xbf16>
    %c3_153 = arith.constant 3 : index
    %c0_154 = arith.constant 0 : index
    %c0_155 = arith.constant 0 : index
    %319 = vector.load %arg4[%c3_153, %c0_154, %c0_155] : memref<5x8x72xbf16, #tpu.memory_space<vmem>>, vector<1x8x72xbf16>
    %320 = vector.shape_cast %319 : vector<1x8x72xbf16> to vector<8x72xbf16>
    %cst_156 = arith.constant dense<0.000000e+00> : vector<8x256xf32>
    %321 = tpu.matmul %320, %318, %cst_156 {dimension_numbers = #tpu.dot_dimension_numbers<[1], [0], [0], [1], [0, 0, 1, 1], [], []>} : vector<8x72xbf16>, vector<72x256xbf16>, vector<8x256xf32> -> vector<8x256xf32>
    %c3_157 = arith.constant 3 : index
    %c0_158 = arith.constant 0 : index
    %c0_159 = arith.constant 0 : index
    %322 = vector.load %arg5[%c3_157, %c0_158, %c0_159] : memref<5x8x1xf32, #tpu.memory_space<vmem>>, vector<1x8x1xf32>
    %323 = vector.shape_cast %322 : vector<1x8x1xf32> to vector<8x1xf32>
    %324 = vector.broadcast %323 : vector<8x1xf32> to vector<8x256xf32>
    %325 = arith.addf %321, %324 : vector<8x256xf32>
    %cst_160 = arith.constant 0.000000e+00 : f32
    %326 = vector.broadcast %cst_160 : f32 to vector<8x256xf32>
    %327 = arith.maximumf %325, %326 : vector<8x256xf32>
    %328 = arith.truncf %327 : vector<8x256xf32> to vector<8x256xbf16>
    %cst_161 = arith.constant 0.000000e+00 : bf16
    %329 = vector.broadcast %cst_161 : bf16 to vector<8x144xbf16>
    %330 = tpu.concatenate %329, %328, %329 in 1 : vector<8x144xbf16>, vector<8x256xbf16>, vector<8x144xbf16> -> vector<8x544xbf16>
    %331 = vector.extract_strided_slice %330 {offsets = [0, 127], sizes = [8, 256], strides = [1, 1]} : vector<8x544xbf16> to vector<8x256xbf16>
    %c0_162 = arith.constant 0 : index
    %c0_163 = arith.constant 0 : index
    %332 = vector.load %arg9[%c0_162, %c0_163] : memref<8x256xbf16, #tpu.memory_space<vmem>>, vector<1x256xbf16>
    %333 = vector.broadcast %332 : vector<1x256xbf16> to vector<8x256xbf16>
    %334 = arith.mulf %331, %333 : vector<8x256xbf16>
    %335 = vector.extract_strided_slice %330 {offsets = [0, 128], sizes = [8, 256], strides = [1, 1]} : vector<8x544xbf16> to vector<8x256xbf16>
    %336 = vector.extract_strided_slice %330 {offsets = [0, 129], sizes = [8, 256], strides = [1, 1]} : vector<8x544xbf16> to vector<8x256xbf16>
    %c1_164 = arith.constant 1 : index
    %c0_165 = arith.constant 0 : index
    %337 = vector.load %arg9[%c1_164, %c0_165] : memref<8x256xbf16, #tpu.memory_space<vmem>>, vector<1x256xbf16>
    %338 = vector.broadcast %337 : vector<1x256xbf16> to vector<8x256xbf16>
    %339 = arith.mulf %336, %338 : vector<8x256xbf16>
    %340 = vector.extract_strided_slice %330 {offsets = [0, 143], sizes = [8, 256], strides = [1, 1]} : vector<8x544xbf16> to vector<8x256xbf16>
    %c0_166 = arith.constant 0 : index
    %c0_167 = arith.constant 0 : index
    %341 = vector.load %arg9[%c0_166, %c0_167] : memref<8x256xbf16, #tpu.memory_space<vmem>>, vector<1x256xbf16>
    %342 = vector.broadcast %341 : vector<1x256xbf16> to vector<8x256xbf16>
    %343 = arith.mulf %340, %342 : vector<8x256xbf16>
    %344 = vector.extract_strided_slice %330 {offsets = [0, 144], sizes = [8, 256], strides = [1, 1]} : vector<8x544xbf16> to vector<8x256xbf16>
    %345 = vector.extract_strided_slice %330 {offsets = [0, 145], sizes = [8, 256], strides = [1, 1]} : vector<8x544xbf16> to vector<8x256xbf16>
    %c1_168 = arith.constant 1 : index
    %c0_169 = arith.constant 0 : index
    %346 = vector.load %arg9[%c1_168, %c0_169] : memref<8x256xbf16, #tpu.memory_space<vmem>>, vector<1x256xbf16>
    %347 = vector.broadcast %346 : vector<1x256xbf16> to vector<8x256xbf16>
    %348 = arith.mulf %345, %347 : vector<8x256xbf16>
    %349 = vector.extract_strided_slice %330 {offsets = [0, 159], sizes = [8, 256], strides = [1, 1]} : vector<8x544xbf16> to vector<8x256xbf16>
    %c0_170 = arith.constant 0 : index
    %c0_171 = arith.constant 0 : index
    %350 = vector.load %arg9[%c0_170, %c0_171] : memref<8x256xbf16, #tpu.memory_space<vmem>>, vector<1x256xbf16>
    %351 = vector.broadcast %350 : vector<1x256xbf16> to vector<8x256xbf16>
    %352 = arith.mulf %349, %351 : vector<8x256xbf16>
    %353 = vector.extract_strided_slice %330 {offsets = [0, 160], sizes = [8, 256], strides = [1, 1]} : vector<8x544xbf16> to vector<8x256xbf16>
    %354 = vector.extract_strided_slice %330 {offsets = [0, 161], sizes = [8, 256], strides = [1, 1]} : vector<8x544xbf16> to vector<8x256xbf16>
    %c1_172 = arith.constant 1 : index
    %c0_173 = arith.constant 0 : index
    %355 = vector.load %arg9[%c1_172, %c0_173] : memref<8x256xbf16, #tpu.memory_space<vmem>>, vector<1x256xbf16>
    %356 = vector.broadcast %355 : vector<1x256xbf16> to vector<8x256xbf16>
    %357 = arith.mulf %354, %356 : vector<8x256xbf16>
    %358 = tpu.concatenate %334, %335, %339, %343, %344, %348, %352, %353, %357 in 0 : vector<8x256xbf16>, vector<8x256xbf16>, vector<8x256xbf16>, vector<8x256xbf16>, vector<8x256xbf16>, vector<8x256xbf16>, vector<8x256xbf16>, vector<8x256xbf16>, vector<8x256xbf16> -> vector<72x256xbf16>
    %c3_174 = arith.constant 3 : index
    %c0_175 = arith.constant 0 : index
    %c0_176 = arith.constant 0 : index
    %359 = vector.load %arg6[%c3_174, %c0_175, %c0_176] : memref<5x8x72xbf16, #tpu.memory_space<vmem>>, vector<1x8x72xbf16>
    %360 = vector.shape_cast %359 : vector<1x8x72xbf16> to vector<8x72xbf16>
    %cst_177 = arith.constant dense<0.000000e+00> : vector<8x256xf32>
    %361 = tpu.matmul %360, %358, %cst_177 {dimension_numbers = #tpu.dot_dimension_numbers<[1], [0], [0], [1], [0, 0, 1, 1], [], []>} : vector<8x72xbf16>, vector<72x256xbf16>, vector<8x256xf32> -> vector<8x256xf32>
    %c3_178 = arith.constant 3 : index
    %c0_179 = arith.constant 0 : index
    %c0_180 = arith.constant 0 : index
    %362 = vector.load %arg7[%c3_178, %c0_179, %c0_180] : memref<5x8x1xf32, #tpu.memory_space<vmem>>, vector<1x8x1xf32>
    %363 = vector.shape_cast %362 : vector<1x8x1xf32> to vector<8x1xf32>
    %364 = vector.broadcast %363 : vector<8x1xf32> to vector<8x256xf32>
    %365 = arith.addf %361, %364 : vector<8x256xf32>
    %cst_181 = arith.constant 0.000000e+00 : f32
    %366 = vector.broadcast %cst_181 : f32 to vector<8x256xf32>
    %367 = arith.maximumf %365, %366 : vector<8x256xf32>
    %368 = vector.extract_strided_slice %38 {offsets = [32, 0], sizes = [8, 256], strides = [1, 1]} : vector<40x256xf32> to vector<8x256xf32>
    %369 = arith.addf %368, %367 : vector<8x256xf32>
    %370 = arith.truncf %369 : vector<8x256xf32> to vector<8x256xbf16>
    %c4_182 = arith.constant 4 : index
    %c0_183 = arith.constant 0 : index
    %c0_184 = arith.constant 0 : index
    %371 = vector.load %arg4[%c4_182, %c0_183, %c0_184] : memref<5x8x72xbf16, #tpu.memory_space<vmem>>, vector<1x8x72xbf16>
    %372 = vector.shape_cast %371 : vector<1x8x72xbf16> to vector<8x72xbf16>
    %373 = vector.extract_strided_slice %372 {offsets = [0, 32], sizes = [8, 8], strides = [1, 1]} : vector<8x72xbf16> to vector<8x8xbf16>
    %cst_185 = arith.constant dense<0.000000e+00> : vector<8x256xf32>
    %374 = tpu.matmul %373, %370, %cst_185 {dimension_numbers = #tpu.dot_dimension_numbers<[1], [0], [0], [1], [0, 0, 1, 1], [], []>} : vector<8x8xbf16>, vector<8x256xbf16>, vector<8x256xf32> -> vector<8x256xf32>
    %c4_186 = arith.constant 4 : index
    %c0_187 = arith.constant 0 : index
    %c0_188 = arith.constant 0 : index
    %375 = vector.load %arg5[%c4_186, %c0_187, %c0_188] : memref<5x8x1xf32, #tpu.memory_space<vmem>>, vector<1x8x1xf32>
    %376 = vector.shape_cast %375 : vector<1x8x1xf32> to vector<8x1xf32>
    %377 = vector.broadcast %376 : vector<8x1xf32> to vector<8x256xf32>
    %378 = arith.addf %374, %377 : vector<8x256xf32>
    %cst_189 = arith.constant 0.000000e+00 : f32
    %379 = vector.broadcast %cst_189 : f32 to vector<8x256xf32>
    %380 = arith.maximumf %378, %379 : vector<8x256xf32>
    %381 = arith.truncf %380 : vector<8x256xf32> to vector<8x256xbf16>
    %cst_190 = arith.constant 0.000000e+00 : bf16
    %382 = vector.broadcast %cst_190 : bf16 to vector<8x144xbf16>
    %383 = tpu.concatenate %382, %381, %382 in 1 : vector<8x144xbf16>, vector<8x256xbf16>, vector<8x144xbf16> -> vector<8x544xbf16>
    %384 = vector.extract_strided_slice %383 {offsets = [0, 127], sizes = [8, 256], strides = [1, 1]} : vector<8x544xbf16> to vector<8x256xbf16>
    %c0_191 = arith.constant 0 : index
    %c0_192 = arith.constant 0 : index
    %385 = vector.load %arg9[%c0_191, %c0_192] : memref<8x256xbf16, #tpu.memory_space<vmem>>, vector<1x256xbf16>
    %386 = vector.broadcast %385 : vector<1x256xbf16> to vector<8x256xbf16>
    %387 = arith.mulf %384, %386 : vector<8x256xbf16>
    %388 = vector.extract_strided_slice %383 {offsets = [0, 128], sizes = [8, 256], strides = [1, 1]} : vector<8x544xbf16> to vector<8x256xbf16>
    %389 = vector.extract_strided_slice %383 {offsets = [0, 129], sizes = [8, 256], strides = [1, 1]} : vector<8x544xbf16> to vector<8x256xbf16>
    %c1_193 = arith.constant 1 : index
    %c0_194 = arith.constant 0 : index
    %390 = vector.load %arg9[%c1_193, %c0_194] : memref<8x256xbf16, #tpu.memory_space<vmem>>, vector<1x256xbf16>
    %391 = vector.broadcast %390 : vector<1x256xbf16> to vector<8x256xbf16>
    %392 = arith.mulf %389, %391 : vector<8x256xbf16>
    %393 = vector.extract_strided_slice %383 {offsets = [0, 143], sizes = [8, 256], strides = [1, 1]} : vector<8x544xbf16> to vector<8x256xbf16>
    %c0_195 = arith.constant 0 : index
    %c0_196 = arith.constant 0 : index
    %394 = vector.load %arg9[%c0_195, %c0_196] : memref<8x256xbf16, #tpu.memory_space<vmem>>, vector<1x256xbf16>
    %395 = vector.broadcast %394 : vector<1x256xbf16> to vector<8x256xbf16>
    %396 = arith.mulf %393, %395 : vector<8x256xbf16>
    %397 = vector.extract_strided_slice %383 {offsets = [0, 144], sizes = [8, 256], strides = [1, 1]} : vector<8x544xbf16> to vector<8x256xbf16>
    %398 = vector.extract_strided_slice %383 {offsets = [0, 145], sizes = [8, 256], strides = [1, 1]} : vector<8x544xbf16> to vector<8x256xbf16>
    %c1_197 = arith.constant 1 : index
    %c0_198 = arith.constant 0 : index
    %399 = vector.load %arg9[%c1_197, %c0_198] : memref<8x256xbf16, #tpu.memory_space<vmem>>, vector<1x256xbf16>
    %400 = vector.broadcast %399 : vector<1x256xbf16> to vector<8x256xbf16>
    %401 = arith.mulf %398, %400 : vector<8x256xbf16>
    %402 = vector.extract_strided_slice %383 {offsets = [0, 159], sizes = [8, 256], strides = [1, 1]} : vector<8x544xbf16> to vector<8x256xbf16>
    %c0_199 = arith.constant 0 : index
    %c0_200 = arith.constant 0 : index
    %403 = vector.load %arg9[%c0_199, %c0_200] : memref<8x256xbf16, #tpu.memory_space<vmem>>, vector<1x256xbf16>
    %404 = vector.broadcast %403 : vector<1x256xbf16> to vector<8x256xbf16>
    %405 = arith.mulf %402, %404 : vector<8x256xbf16>
    %406 = vector.extract_strided_slice %383 {offsets = [0, 160], sizes = [8, 256], strides = [1, 1]} : vector<8x544xbf16> to vector<8x256xbf16>
    %407 = vector.extract_strided_slice %383 {offsets = [0, 161], sizes = [8, 256], strides = [1, 1]} : vector<8x544xbf16> to vector<8x256xbf16>
    %c1_201 = arith.constant 1 : index
    %c0_202 = arith.constant 0 : index
    %408 = vector.load %arg9[%c1_201, %c0_202] : memref<8x256xbf16, #tpu.memory_space<vmem>>, vector<1x256xbf16>
    %409 = vector.broadcast %408 : vector<1x256xbf16> to vector<8x256xbf16>
    %410 = arith.mulf %407, %409 : vector<8x256xbf16>
    %411 = tpu.concatenate %387, %388, %392, %396, %397, %401, %405, %406, %410 in 0 : vector<8x256xbf16>, vector<8x256xbf16>, vector<8x256xbf16>, vector<8x256xbf16>, vector<8x256xbf16>, vector<8x256xbf16>, vector<8x256xbf16>, vector<8x256xbf16>, vector<8x256xbf16> -> vector<72x256xbf16>
    %c4_203 = arith.constant 4 : index
    %c0_204 = arith.constant 0 : index
    %c0_205 = arith.constant 0 : index
    %412 = vector.load %arg6[%c4_203, %c0_204, %c0_205] : memref<5x8x72xbf16, #tpu.memory_space<vmem>>, vector<1x8x72xbf16>
    %413 = vector.shape_cast %412 : vector<1x8x72xbf16> to vector<8x72xbf16>
    %cst_206 = arith.constant dense<0.000000e+00> : vector<8x256xf32>
    %414 = tpu.matmul %413, %411, %cst_206 {dimension_numbers = #tpu.dot_dimension_numbers<[1], [0], [0], [1], [0, 0, 1, 1], [], []>} : vector<8x72xbf16>, vector<72x256xbf16>, vector<8x256xf32> -> vector<8x256xf32>
    %c4_207 = arith.constant 4 : index
    %c0_208 = arith.constant 0 : index
    %c0_209 = arith.constant 0 : index
    %415 = vector.load %arg7[%c4_207, %c0_208, %c0_209] : memref<5x8x1xf32, #tpu.memory_space<vmem>>, vector<1x8x1xf32>
    %416 = vector.shape_cast %415 : vector<1x8x1xf32> to vector<8x1xf32>
    %417 = vector.broadcast %416 : vector<8x1xf32> to vector<8x256xf32>
    %418 = arith.addf %414, %417 : vector<8x256xf32>
    %cst_210 = arith.constant 0.000000e+00 : f32
    %419 = vector.broadcast %cst_210 : f32 to vector<8x256xf32>
    %420 = arith.maximumf %418, %419 : vector<8x256xf32>
    %c0_211 = arith.constant 0 : index
    %c0_212 = arith.constant 0 : index
    %c0_213 = arith.constant 0 : index
    %421 = vector.load %arg8[%c0_211, %c0_212, %c0_213] : memref<1x8x1xf32, #tpu.memory_space<vmem>>, vector<1x8x1xf32>
    %422 = vector.shape_cast %421 : vector<1x8x1xf32> to vector<8x1xf32>
    %423 = vector.shape_cast %422 : vector<8x1xf32> to vector<8x1xf32>
    %424 = vector.broadcast %423 : vector<8x1xf32> to vector<8x256xf32>
    %425 = tpu.concatenate %121, %203, %285, %367, %420, %424 in 0 : vector<8x256xf32>, vector<8x256xf32>, vector<8x256xf32>, vector<8x256xf32>, vector<8x256xf32>, vector<8x256xf32> -> vector<48x256xf32>
    %426 = vector.shape_cast %425 : vector<48x256xf32> to vector<1x48x256xf32>
    %c0_214 = arith.constant 0 : index
    %c0_215 = arith.constant 0 : index
    %c0_216 = arith.constant 0 : index
    %427 = vector.load %arg10[%c0_214, %c0_215, %c0_216] : memref<1x48x256xf32, #tpu.memory_space<vmem>>, vector<1x48x256xf32>
    tpu.vector_store %arg10[%c0_214, %c0_215, %c0_216], %426 {strides = array<i32>} : memref<1x48x256xf32, #tpu.memory_space<vmem>>, vector<1x48x256xf32>,
    return
  }
  func.func @transform_0(%arg0: i32) -> (i32, i32, i32) {
    %c0_i32 = arith.constant 0 : i32
    %c0_i32_0 = arith.constant 0 : i32
    %c0_i32_1 = arith.constant 0 : i32
    return %arg0, %c0_i32, %c0_i32_0 : i32, i32, i32
  }
  func.func @transform_1(%arg0: i32) -> (i32, i32) {
    %c0_i32 = arith.constant 0 : i32
    %c0_i32_0 = arith.constant 0 : i32
    %c0_i32_1 = arith.constant 0 : i32
    return %c0_i32, %c0_i32_0 : i32, i32
  }
  func.func @transform_2(%arg0: i32) -> (i32, i32) {
    %c0_i32 = arith.constant 0 : i32
    %c0_i32_0 = arith.constant 0 : i32
    %c0_i32_1 = arith.constant 0 : i32
    return %c0_i32, %c0_i32_0 : i32, i32
  }
  func.func @transform_3(%arg0: i32) -> (i32, i32, i32) {
    %c0_i32 = arith.constant 0 : i32
    %c0_i32_0 = arith.constant 0 : i32
    %c0_i32_1 = arith.constant 0 : i32
    %c0_i32_2 = arith.constant 0 : i32
    return %c0_i32, %c0_i32_0, %c0_i32_1 : i32, i32, i32
  }
  func.func @transform_4(%arg0: i32) -> (i32, i32, i32) {
    %c0_i32 = arith.constant 0 : i32
    %c0_i32_0 = arith.constant 0 : i32
    %c0_i32_1 = arith.constant 0 : i32
    %c0_i32_2 = arith.constant 0 : i32
    return %c0_i32, %c0_i32_0, %c0_i32_1 : i32, i32, i32
  }
  func.func @transform_5(%arg0: i32) -> (i32, i32, i32) {
    %c0_i32 = arith.constant 0 : i32
    %c0_i32_0 = arith.constant 0 : i32
    %c0_i32_1 = arith.constant 0 : i32
    %c0_i32_2 = arith.constant 0 : i32
    return %c0_i32, %c0_i32_0, %c0_i32_1 : i32, i32, i32
  }
  func.func @transform_6(%arg0: i32) -> (i32, i32, i32) {
    %c0_i32 = arith.constant 0 : i32
    %c0_i32_0 = arith.constant 0 : i32
    %c0_i32_1 = arith.constant 0 : i32
    %c0_i32_2 = arith.constant 0 : i32
    return %c0_i32, %c0_i32_0, %c0_i32_1 : i32, i32, i32
  }
  func.func @transform_7(%arg0: i32) -> (i32, i32, i32) {
    %c0_i32 = arith.constant 0 : i32
    %c0_i32_0 = arith.constant 0 : i32
    %c0_i32_1 = arith.constant 0 : i32
    return %arg0, %c0_i32, %c0_i32_0 : i32, i32, i32
  }
  func.func @transform_8(%arg0: i32) -> (i32, i32) {
    %c0_i32 = arith.constant 0 : i32
    %c0_i32_0 = arith.constant 0 : i32
    %c0_i32_1 = arith.constant 0 : i32
    return %c0_i32, %c0_i32_0 : i32, i32
  }
  func.func @transform_9(%arg0: i32) -> (i32, i32, i32) {
    %c0_i32 = arith.constant 0 : i32
    %c0_i32_0 = arith.constant 0 : i32
    %c0_i32_1 = arith.constant 0 : i32
    return %arg0, %c0_i32, %c0_i32_0 : i32, i32, i32
  }
}

</mosaic_0001>

<llo_original>
// kernel: tpu_custom_call.1
$region0: #{tpu_custom_call.1}
  #allocation0 [shape = 'u32[]', space=smem, size = 0x4, offset = 0x4, fixed_abs, tag = 'smem constant byte address 0x4 - core index']
  #allocation1 [shape = 'u32[144,128]{1,0:T(1,128)}', space=vmem, size = 0x12000, scoped, tag = 'internal scratch']
  %s0 = inlined_call_operand.vmem [shape: bf16[2,4,256], index: 0, kind: input, shape index: {}]
  %s1 = inlined_call_operand.vmem [shape: bf16[40,36], index: 1, kind: input, shape index: {}]
  %s2 = inlined_call_operand.vmem [shape: f32[40,1], index: 2, kind: input, shape index: {}]
  %s3 = inlined_call_operand.vmem [shape: bf16[5,8,72], index: 3, kind: input, shape index: {}]
  %s4 = inlined_call_operand.vmem [shape: f32[5,8,1], index: 4, kind: input, shape index: {}]
  %s5 = inlined_call_operand.vmem [shape: bf16[5,8,72], index: 5, kind: input, shape index: {}]
  %s6 = inlined_call_operand.vmem [shape: f32[5,8,1], index: 6, kind: input, shape index: {}]
  %s7 = inlined_call_operand.vmem [shape: f32[2,8,1], index: 7, kind: input, shape index: {}]
  %s8 = inlined_call_operand.vmem [shape: bf16[8,256], index: 8, kind: input, shape index: {}]
  %s9 = inlined_call_operand.hbm [shape: f32[2,48,256], index: 9, kind: output, shape index: {}]
  %s10 = sld [smem:[#allocation0]]
  $region69: #{tpu_custom_call.1} parent=0
    _
  %s12 = ssub.s32 1, %s10
  %s13 = scalar_select 0, %s12, %s10
  $region1: #{tpu_custom_call.1} parent=0
    #allocation2 [shape = 'u8[98304]{0}', space=vmem, size = 0x18000, scoped, tag = 'output window, operand 0']
    #allocation3 [shape = 's32[2]{0}', space=sflag, size = 0x8, scoped, tag = 'scoped memory for tpu_custom_call.1']
    %14 = vsyncpa [#allocation3], 0
    %s15 = scalar_lea.sflag [#allocation3], 1
    %16 = vsyncpa %s15, 0
    loop: start=0, step=1, limit=4
    $region2: #{tpu_custom_call.1} parent=1 // loop_pre_header
      _
    $region3: #{tpu_custom_call.1} parent=1 // loop_header
      %s18 = sphi 0, %s22
      %p19 = scmp.ge.s32.totalorder %s18, 4
      %s28 = sphi 0, %s30
      %s31 = sphi 0, %s28
      %s32 = sphi 0, %s31
      %s48 = sphi 0, %s32
      %s52 = sphi 0, %s52
      %s54 = sphi 0, %s52
      %s55 = sphi 0, %s54
      %s69 = sphi 0, %s55
      %s73 = sphi 0, %s73
      %s75 = sphi 0, %s73
      %s76 = sphi 0, %s75
      %s90 = sphi 0, %s76
      %s94 = sphi 0, %s94
      %s96 = sphi 0, %s94
      %s97 = sphi 0, %s96
      %s111 = sphi 0, %s97
      %s115 = sphi 0, %s115
      %s117 = sphi 0, %s115
      %s118 = sphi 0, %s117
      %s132 = sphi 0, %s118
      %s136 = sphi 0, %s136
      %s138 = sphi 0, %s136
      %s139 = sphi 0, %s138
      %s153 = sphi 0, %s139
      %s157 = sphi 0, %s157
      %s159 = sphi 0, %s157
      %s160 = sphi 0, %s159
      %s174 = sphi 0, %s160
      %s180 = sphi 0, %s182
      %s183 = sphi 0, %s180
      %s184 = sphi 0, %s183
      %s200 = sphi 0, %s184
      %s204 = sphi 0, %s204
      %s206 = sphi 0, %s204
      %s207 = sphi 0, %s206
      %s221 = sphi 0, %s207
      %s227 = sphi 0, %s229
      %s230 = sphi 0, %s227
      %s231 = sphi 0, %s230
      %s247 = sphi 0, %s231
    $region4: #{tpu_custom_call.1} parent=1 // loop_header_branch
      %21 = sbr.rel (%p19) target = $region8
    $region5: #{tpu_custom_call.1} parent=1 // loop_body
      %s23 = ssub.s32 %s18, 1
      %s24 = ssub.s32 %s18, 2
      %s25 = sadd.s32 %s18, 1
      %s26 = ssub.s32 %s18, %s25
      %p27 = scmp.eq.s32.totalorder %s26, 0
      %s29 = sadd.s32 %s28, 1
      %s30 = scalar_select %p27, %s28, %s29
      %p33 = pneg %p27
      %p34 = scmp.eq.s32.totalorder %s18, 1
      %p35 = por %p33, %p34
      %p36 = scmp.ne.s32.totalorder %s28, %s31
      %p37 = scmp.eq.s32.totalorder %s18, 0
      %p38 = por %p36, %p37
      %p39 = scmp.ne.s32.totalorder %s28, %s31
      %p40 = scmp.eq.s32.totalorder %s23, 1
      %p41 = por %p39, %p40
      %p42 = scmp.ne.s32.totalorder %s31, %s32
      %p43 = scmp.eq.s32.totalorder %s23, 0
      %p44 = por %p42, %p43
      %p45 = scmp.ne.s32.totalorder %s31, %s32
      %p46 = scmp.eq.s32.totalorder %s24, 1
      %p47 = por %p45, %p46
      %p49 = scmp.ne.s32.totalorder %s32, %s48
      %p50 = scmp.eq.s32.totalorder %s24, 0
      %p51 = por %p49, %p50
      %s53 = sadd.s32 %s52, 1
      %p56 = scmp.eq.s32.totalorder %s18, 1
      %p57 = scmp.ne.s32.totalorder %s52, %s54
      %p58 = scmp.eq.s32.totalorder %s18, 0
      %p59 = por %p57, %p58
      %p60 = scmp.ne.s32.totalorder %s52, %s54
      %p61 = scmp.eq.s32.totalorder %s23, 1
      %p62 = por %p60, %p61
      %p63 = scmp.ne.s32.totalorder %s54, %s55
      %p64 = scmp.eq.s32.totalorder %s23, 0
      %p65 = por %p63, %p64
      %p66 = scmp.ne.s32.totalorder %s54, %s55
      %p67 = scmp.eq.s32.totalorder %s24, 1
      %p68 = por %p66, %p67
      %p70 = scmp.ne.s32.totalorder %s55, %s69
      %p71 = scmp.eq.s32.totalorder %s24, 0
      %p72 = por %p70, %p71
      %s74 = sadd.s32 %s73, 1
      %p77 = scmp.eq.s32.totalorder %s18, 1
      %p78 = scmp.ne.s32.totalorder %s73, %s75
      %p79 = scmp.eq.s32.totalorder %s18, 0
      %p80 = por %p78, %p79
      %p81 = scmp.ne.s32.totalorder %s73, %s75
      %p82 = scmp.eq.s32.totalorder %s23, 1
      %p83 = por %p81, %p82
      %p84 = scmp.ne.s32.totalorder %s75, %s76
      %p85 = scmp.eq.s32.totalorder %s23, 0
      %p86 = por %p84, %p85
      %p87 = scmp.ne.s32.totalorder %s75, %s76
      %p88 = scmp.eq.s32.totalorder %s24, 1
      %p89 = por %p87, %p88
      %p91 = scmp.ne.s32.totalorder %s76, %s90
      %p92 = scmp.eq.s32.totalorder %s24, 0
      %p93 = por %p91, %p92
      %s95 = sadd.s32 %s94, 1
      %p98 = scmp.eq.s32.totalorder %s18, 1
      %p99 = scmp.ne.s32.totalorder %s94, %s96
      %p100 = scmp.eq.s32.totalorder %s18, 0
      %p101 = por %p99, %p100
      %p102 = scmp.ne.s32.totalorder %s94, %s96
      %p103 = scmp.eq.s32.totalorder %s23, 1
      %p104 = por %p102, %p103
      %p105 = scmp.ne.s32.totalorder %s96, %s97
      %p106 = scmp.eq.s32.totalorder %s23, 0
      %p107 = por %p105, %p106
      %p108 = scmp.ne.s32.totalorder %s96, %s97
      %p109 = scmp.eq.s32.totalorder %s24, 1
      %p110 = por %p108, %p109
      %p112 = scmp.ne.s32.totalorder %s97, %s111
      %p113 = scmp.eq.s32.totalorder %s24, 0
      %p114 = por %p112, %p113
      %s116 = sadd.s32 %s115, 1
      %p119 = scmp.eq.s32.totalorder %s18, 1
      %p120 = scmp.ne.s32.totalorder %s115, %s117
      %p121 = scmp.eq.s32.totalorder %s18, 0
      %p122 = por %p120, %p121
      %p123 = scmp.ne.s32.totalorder %s115, %s117
      %p124 = scmp.eq.s32.totalorder %s23, 1
      %p125 = por %p123, %p124
      %p126 = scmp.ne.s32.totalorder %s117, %s118
      %p127 = scmp.eq.s32.totalorder %s23, 0
      %p128 = por %p126, %p127
      %p129 = scmp.ne.s32.totalorder %s117, %s118
      %p130 = scmp.eq.s32.totalorder %s24, 1
      %p131 = por %p129, %p130
      %p133 = scmp.ne.s32.totalorder %s118, %s132
      %p134 = scmp.eq.s32.totalorder %s24, 0
      %p135 = por %p133, %p134
      %s137 = sadd.s32 %s136, 1
      %p140 = scmp.eq.s32.totalorder %s18, 1
      %p141 = scmp.ne.s32.totalorder %s136, %s138
      %p142 = scmp.eq.s32.totalorder %s18, 0
      %p143 = por %p141, %p142
      %p144 = scmp.ne.s32.totalorder %s136, %s138
      %p145 = scmp.eq.s32.totalorder %s23, 1
      %p146 = por %p144, %p145
      %p147 = scmp.ne.s32.totalorder %s138, %s139
      %p148 = scmp.eq.s32.totalorder %s23, 0
      %p149 = por %p147, %p148
      %p150 = scmp.ne.s32.totalorder %s138, %s139
      %p151 = scmp.eq.s32.totalorder %s24, 1
      %p152 = por %p150, %p151
      %p154 = scmp.ne.s32.totalorder %s139, %s153
      %p155 = scmp.eq.s32.totalorder %s24, 0
      %p156 = por %p154, %p155
      %s158 = sadd.s32 %s157, 1
      %p161 = scmp.eq.s32.totalorder %s18, 1
      %p162 = scmp.ne.s32.totalorder %s157, %s159
      %p163 = scmp.eq.s32.totalorder %s18, 0
      %p164 = por %p162, %p163
      %p165 = scmp.ne.s32.totalorder %s157, %s159
      %p166 = scmp.eq.s32.totalorder %s23, 1
      %p167 = por %p165, %p166
      %p168 = scmp.ne.s32.totalorder %s159, %s160
      %p169 = scmp.eq.s32.totalorder %s23, 0
      %p170 = por %p168, %p169
      %p171 = scmp.ne.s32.totalorder %s159, %s160
      %p172 = scmp.eq.s32.totalorder %s24, 1
      %p173 = por %p171, %p172
      %p175 = scmp.ne.s32.totalorder %s160, %s174
      %p176 = scmp.eq.s32.totalorder %s24, 0
      %p177 = por %p175, %p176
      %s178 = ssub.s32 %s18, %s25
      %p179 = scmp.eq.s32.totalorder %s178, 0
      %s181 = sadd.s32 %s180, 1
      %s182 = scalar_select %p179, %s180, %s181
      %p185 = pneg %p179
      %p186 = scmp.eq.s32.totalorder %s18, 1
      %p187 = por %p185, %p186
      %p188 = scmp.ne.s32.totalorder %s180, %s183
      %p189 = scmp.eq.s32.totalorder %s18, 0
      %p190 = por %p188, %p189
      %p191 = scmp.ne.s32.totalorder %s180, %s183
      %p192 = scmp.eq.s32.totalorder %s23, 1
      %p193 = por %p191, %p192
      %p194 = scmp.ne.s32.totalorder %s183, %s184
      %p195 = scmp.eq.s32.totalorder %s23, 0
      %p196 = por %p194, %p195
      %p197 = scmp.ne.s32.totalorder %s183, %s184
      %p198 = scmp.eq.s32.totalorder %s24, 1
      %p199 = por %p197, %p198
      %p201 = scmp.ne.s32.totalorder %s184, %s200
      %p202 = scmp.eq.s32.totalorder %s24, 0
      %p203 = por %p201, %p202
      %s205 = sadd.s32 %s204, 1
      %p208 = scmp.eq.s32.totalorder %s18, 1
      %p209 = scmp.ne.s32.totalorder %s204, %s206
      %p210 = scmp.eq.s32.totalorder %s18, 0
      %p211 = por %p209, %p210
      %p212 = scmp.ne.s32.totalorder %s204, %s206
      %p213 = scmp.eq.s32.totalorder %s23, 1
      %p214 = por %p212, %p213
      %p215 = scmp.ne.s32.totalorder %s206, %s207
      %p216 = scmp.eq.s32.totalorder %s23, 0
      %p217 = por %p215, %p216
      %p218 = scmp.ne.s32.totalorder %s206, %s207
      %p219 = scmp.eq.s32.totalorder %s24, 1
      %p220 = por %p218, %p219
      %p222 = scmp.ne.s32.totalorder %s207, %s221
      %p223 = scmp.eq.s32.totalorder %s24, 0
      %p224 = por %p222, %p223
      %s225 = ssub.s32 %s18, %s25
      %p226 = scmp.eq.s32.totalorder %s225, 0
      %s228 = sadd.s32 %s227, 1
      %s229 = scalar_select %p226, %s227, %s228
      %p232 = pneg %p226
      %p233 = scmp.eq.s32.totalorder %s18, 1
      %p234 = por %p232, %p233
      %p235 = scmp.ne.s32.totalorder %s227, %s230
      %p236 = scmp.eq.s32.totalorder %s18, 0
      %p237 = por %p235, %p236
      %p238 = scmp.ne.s32.totalorder %s227, %s230
      %p239 = scmp.eq.s32.totalorder %s23, 1
      %p240 = por %p238, %p239
      %p241 = scmp.ne.s32.totalorder %s230, %s231
      %p242 = scmp.eq.s32.totalorder %s23, 0
      %p243 = por %p241, %p242
      %p244 = scmp.ne.s32.totalorder %s230, %s231
      %p245 = scmp.eq.s32.totalorder %s24, 1
      %p246 = por %p244, %p245
      %p248 = scmp.ne.s32.totalorder %s231, %s247
      %p249 = scmp.eq.s32.totalorder %s24, 0
      %p250 = por %p248, %p249
      %p251 = scmp.le.s32.totalorder 1, %s18
      %p252 = scmp.lt.s32.totalorder %s18, 3
      %p253 = pnand %p251, %p252
      %p254 = pneg %p253
      // Predicated region
      $region9: #{tpu_custom_call.1} parent=5 // pred_check
        _
      $region10: #{tpu_custom_call.1} parent=5 // pred_check_branch
        %256 = sbr.rel (%p253) target = $region12
      $region11: #{tpu_custom_call.1} parent=5 // pred_region
        %s257 = ssub.s32 %s18, 1
        // Predicated region
        $region13: #{tpu_custom_call.1} parent=11 // pred_check
          %p258 = pneg %p65
        $region14: #{tpu_custom_call.1} parent=11 // pred_check_branch
          %260 = sbr.rel (%p258) target = $region16
        $region15: #{tpu_custom_call.1} parent=11 // pred_region
          _
        $region16: #{tpu_custom_call.1} parent=11 // pred_fallthru
          _
        // Predicated region
        $region17: #{tpu_custom_call.1} parent=11 // pred_check
          %p261 = pneg %p86
        $region18: #{tpu_custom_call.1} parent=11 // pred_check_branch
          %263 = sbr.rel (%p261) target = $region20
        $region19: #{tpu_custom_call.1} parent=11 // pred_region
          _
        $region20: #{tpu_custom_call.1} parent=11 // pred_fallthru
          _
        // Predicated region
        $region21: #{tpu_custom_call.1} parent=11 // pred_check
          %p264 = pneg %p107
        $region22: #{tpu_custom_call.1} parent=11 // pred_check_branch
          %266 = sbr.rel (%p264) target = $region24
        $region23: #{tpu_custom_call.1} parent=11 // pred_region
          _
        $region24: #{tpu_custom_call.1} parent=11 // pred_fallthru
          _
        // Predicated region
        $region25: #{tpu_custom_call.1} parent=11 // pred_check
          %p267 = pneg %p128
        $region26: #{tpu_custom_call.1} parent=11 // pred_check_branch
          %269 = sbr.rel (%p267) target = $region28
        $region27: #{tpu_custom_call.1} parent=11 // pred_region
          _
        $region28: #{tpu_custom_call.1} parent=11 // pred_fallthru
          _
        // Predicated region
        $region29: #{tpu_custom_call.1} parent=11 // pred_check
          %p270 = pneg %p149
        $region30: #{tpu_custom_call.1} parent=11 // pred_check_branch
          %272 = sbr.rel (%p270) target = $region32
        $region31: #{tpu_custom_call.1} parent=11 // pred_region
          _
        $region32: #{tpu_custom_call.1} parent=11 // pred_fallthru
          _
        // Predicated region
        $region33: #{tpu_custom_call.1} parent=11 // pred_check
          %p273 = pneg %p170
        $region34: #{tpu_custom_call.1} parent=11 // pred_check_branch
          %275 = sbr.rel (%p273) target = $region36
        $region35: #{tpu_custom_call.1} parent=11 // pred_region
          _
        $region36: #{tpu_custom_call.1} parent=11 // pred_fallthru
          _
        // Predicated region
        $region37: #{tpu_custom_call.1} parent=11 // pred_check
          %p276 = pneg %p217
        $region38: #{tpu_custom_call.1} parent=11 // pred_check_branch
          %278 = sbr.rel (%p276) target = $region40
        $region39: #{tpu_custom_call.1} parent=11 // pred_region
          _
        $region40: #{tpu_custom_call.1} parent=11 // pred_fallthru
          _
      $region12: #{tpu_custom_call.1} parent=5 // pred_fallthru
        _
      %p279 = scmp.lt.s32.totalorder %s18, 2
      // Predicated region
      $region41: #{tpu_custom_call.1} parent=5 // pred_check
        %p280 = pneg %p279
      $region42: #{tpu_custom_call.1} parent=5 // pred_check_branch
        %282 = sbr.rel (%p280) target = $region44
      $region43: #{tpu_custom_call.1} parent=5 // pred_region
        // Predicated region
        $region45: #{tpu_custom_call.1} parent=43 // pred_check
          %p283 = pneg %p38
        $region46: #{tpu_custom_call.1} parent=43 // pred_check_branch
          %285 = sbr.rel (%p283) target = $region48
        $region47: #{tpu_custom_call.1} parent=43 // pred_region
          %p286 = scmp.lt.s32.totalorder %s18, 1
          %s287 = scalar_select %p286, %s18, 1
          %s288 = smul.addr %s287, 2
          %s289 = smul.addr %s288, 2
          %s290 = scalar_lea.vmem %s0, %s289
        $region48: #{tpu_custom_call.1} parent=43 // pred_fallthru
          _
        // Predicated region
        $region49: #{tpu_custom_call.1} parent=43 // pred_check
          %p291 = pneg %p190
        $region50: #{tpu_custom_call.1} parent=43 // pred_check_branch
          %293 = sbr.rel (%p291) target = $region52
        $region51: #{tpu_custom_call.1} parent=43 // pred_region
          %p294 = scmp.lt.s32.totalorder %s18, 1
          %s295 = scalar_select %p294, %s18, 1
          %s296 = smul.addr %s295, 8
          %s297 = scalar_lea.vmem %s7, %s296
        $region52: #{tpu_custom_call.1} parent=43 // pred_fallthru
          _
      $region44: #{tpu_custom_call.1} parent=5 // pred_fallthru
        _
      %p298 = scmp.le.s32.totalorder 1, %s18
      %p299 = scmp.lt.s32.totalorder %s18, 3
      %p300 = pnand %p298, %p299
      %p301 = pneg %p300
      // Predicated region
      $region53: #{tpu_custom_call.1} parent=5 // pred_check
        _
      $region54: #{tpu_custom_call.1} parent=5 // pred_check_branch
        %303 = sbr.rel (%p300) target = $region56
      $region55: #{tpu_custom_call.1} parent=5 // pred_region
        %s304 = ssub.s32 %s18, 1
        %p305 = scmp.lt.s32.totalorder %s23, 1
        %s306 = scalar_select %p305, %s23, 1
        %s307 = smul.addr %s306, 2
        %s308 = smul.addr %s307, 2
        %s309 = scalar_lea.vmem %s0, %s308
        %p310 = pneg %p44
        %p311 = pneg %p41
        %p312 = pneg %p65
        %p313 = pneg %p62
        %p314 = pneg %p86
        %p315 = pneg %p83
        %p316 = pneg %p107
        %p317 = pneg %p104
        %p318 = pneg %p128
        %p319 = pneg %p125
        %p320 = pneg %p149
        %p321 = pneg %p146
        %p322 = pneg %p170
        %p323 = pneg %p167
        %p324 = scmp.lt.s32.totalorder %s23, 1
        %s325 = scalar_select %p324, %s23, 1
        %s326 = smul.addr %s325, 8
        %s327 = scalar_lea.vmem %s7, %s326
        %p328 = pneg %p196
        %p329 = pneg %p193
        %p330 = pneg %p217
        %p331 = pneg %p214
        %p332 = pneg %p243
        %p333 = pneg %p240
        %s334 = sand.u32 %s230, 1
        %s335 = scalar_lea.sflag [#allocation3], %s334
        %s336 = sand.u32 %s230, 1
        %s337 = smul.addr %s336, 96
        %s338 = scalar_lea.vmem [#allocation2], %s337
        %p339 = scmp.lt.s32.totalorder %s23, 1
        %s340 = scalar_select %p339, %s23, 1
        %s341 = smul.addr %s340, 2
        %s342 = smul.addr %s341, 2
        %s343 = scalar_lea.vmem %s0, %s342
        %p344 = scmp.lt.s32.totalorder %s23, 1
        %s345 = scalar_select %p344, %s23, 1
        %s346 = smul.addr %s345, 8
        %s347 = scalar_lea.vmem %s7, %s346
        %v349 = vld [vmem:[%s343] sm:$0xf]
        %v352 = vunpack.c.l.s4 1983009808
        %v353 = vunpack.c.0.s8 %v352
        %v354 = vlaneseq
        %v355 = vshrl.u32 %v354, 7
        %v356 = vsub.s32 %v353, %v355
        %v357 = vrot.slane %v349, %v356
        %v358 = vcombine.high %v357, %v357
        %359 = vrot.lane.b32.xlu0 %v357, 16
        %v360 = vpop.permute.xlu0 %359
        %361 = vrot.lane.b32.xlu0 %v358, 16
        %v362 = vpop.permute.xlu0 %361
        %vm363 = vcmask 130048
        %v364 = vsel %vm363, %v360, %v362
        %vm366 = vcmask 130048
        %v369 = vsel %vm366, 0, %v360
        %v372 = vsel %vm366, %v362, 0
        %v374 = vld [vmem:[%s8] sm:$0x11]
        %v376 = vunpack.c.l.b16 %v374
        %v377 = vunpack.c.h.b16 %v374
        %v378 = vpack.c.b16 %v376, %v376
        %v379 = vpack.c.b16 %v377, %v377
        %v381 = vpack.i.b16 %v378, %v378
        %v383 = vlaneseq
        %v384 = vshrl.u32 %v383, 7
        %v385 = vsub.s32 0, %v384
        %v386 = vrot.slane %v381, %v385
        %v388 = vpack.i.b16 %v379, %v379
        %v390 = vlaneseq
        %v391 = vshrl.u32 %v390, 7
        %v392 = vsub.s32 0, %v391
        %v393 = vrot.slane %v388, %v392
        %396 = vrot.lane.b32.xlu0 %v386, 127
        %v397 = vpop.permute.xlu0 %396
        %398 = vrot.lane.b32.xlu0 %v393, 127
        %v399 = vpop.permute.xlu0 %398
        %vm400 = vcmask 1039360
        %v401 = vsel %vm400, %v397, %v399
        %v405 = vmul.bf16 %v397, 0
        %v406 = vmul.bf16 %v369, %v401
        %v407 = vmul.bf16 %v364, %v399
        %v408 = vshrl.u32 %v378, 16
        %v409 = vpack.i.b16 %v408, %v408
        %v411 = vlaneseq
        %v412 = vshrl.u32 %v411, 7
        %v413 = vsub.s32 0, %v412
        %v414 = vrot.slane %v409, %v413
        %v415 = vshrl.u32 %v379, 16
        %v416 = vpack.i.b16 %v415, %v415
        %v418 = vlaneseq
        %v419 = vshrl.u32 %v418, 7
        %v420 = vsub.s32 0, %v419
        %v421 = vrot.slane %v416, %v420
        %424 = vrot.lane.b32.xlu0 %v414, 1
        %v425 = vpop.permute.xlu0 %424
        %426 = vrot.lane.b32.xlu0 %v421, 1
        %v427 = vpop.permute.xlu0 %426
        %vm428 = vcmask 7168
        %v429 = vsel %vm428, %v425, %v427
        %v433 = vmul.bf16 %v369, %v425
        %v434 = vmul.bf16 %v364, %v429
        %v435 = vmul.bf16 %v372, %v427
        %436 = vrot.lane.b32.xlu0 %v386, 15
        %v437 = vpop.permute.xlu0 %436
        %438 = vrot.lane.b32.xlu0 %v393, 15
        %v439 = vpop.permute.xlu0 %438
        %vm440 = vcmask 121856
        %v441 = vsel %vm440, %v437, %v439
        %v445 = vmul.bf16 %v369, %v437
        %v446 = vmul.bf16 %v364, %v441
        %v447 = vmul.bf16 %v372, %v439
        %448 = vrot.lane.b32.xlu0 %v414, 17
        %v449 = vpop.permute.xlu0 %448
        %450 = vrot.lane.b32.xlu0 %v421, 17
        %v451 = vpop.permute.xlu0 %450
        %vm452 = vcmask 138240
        %v453 = vsel %vm452, %v449, %v451
        %v457 = vmul.bf16 %v369, %v449
        %v458 = vmul.bf16 %v364, %v453
        %v459 = vmul.bf16 %v372, %v451
        %460 = vrot.lane.b32.xlu0 %v386, 31
        %v461 = vpop.permute.xlu0 %460
        %462 = vrot.lane.b32.xlu0 %v393, 31
        %v463 = vpop.permute.xlu0 %462
        %vm464 = vcmask 252928
        %v465 = vsel %vm464, %v461, %v463
        %v469 = vmul.bf16 %v369, %v461
        %v470 = vmul.bf16 %v364, %v465
        %v471 = vmul.bf16 %v372, %v463
        %472 = vrot.lane.b32.xlu0 %v414, 33
        %v473 = vpop.permute.xlu0 %472
        %474 = vrot.lane.b32.xlu0 %v421, 33
        %v475 = vpop.permute.xlu0 %474
        %vm476 = vcmask 269312
        %v477 = vsel %vm476, %v473, %v475
        %v481 = vmul.bf16 %v369, %v473
        %v482 = vmul.bf16 %v364, %v477
        %v483 = vmul.bf16 %v372, %v475
        %v485 = vrot.slane %v369, 6
        %v486 = vrot.slane %v364, 6
        %487 = vrot.lane.b32.xlu0 %v485, 127
        %v488 = vpop.permute.xlu0 %487
        %489 = vrot.lane.b32.xlu0 %v486, 127
        %v490 = vpop.permute.xlu0 %489
        %v491 = vsel %vm400, %v488, %v490
        %v495 = vrot.slane %v433, 4
        %v496 = vrot.slane %v434, 4
        %v497 = vrot.slane %v435, 4
        %498 = vrot.lane.b32.xlu0 %v495, 126
        %v499 = vpop.permute.xlu0 %498
        %500 = vrot.lane.b32.xlu0 %v496, 126
        %v501 = vpop.permute.xlu0 %500
        %502 = vrot.lane.b32.xlu0 %v497, 126
        %v503 = vpop.permute.xlu0 %502
        %vm504 = vcmask 1031168
        %v505 = vsel %vm504, %v499, %v501
        %v506 = vsel %vm504, %v501, %v503
        %v510 = vrot.slane %v445, 2
        %v511 = vrot.slane %v446, 2
        %v512 = vrot.slane %v447, 2
        %513 = vrot.lane.b32.xlu0 %v510, 112
        %v514 = vpop.permute.xlu0 %513
        %515 = vrot.lane.b32.xlu0 %v511, 112
        %v516 = vpop.permute.xlu0 %515
        %517 = vrot.lane.b32.xlu0 %v512, 112
        %v518 = vpop.permute.xlu0 %517
        %vm519 = vcmask 916480
        %v520 = vsel %vm519, %v514, %v516
        %v521 = vsel %vm519, %v516, %v518
        %523 = vrot.lane.b32.xlu0 %v369, 111
        %v524 = vpop.permute.xlu0 %523
        %525 = vrot.lane.b32.xlu0 %v364, 111
        %v526 = vpop.permute.xlu0 %525
        %527 = vrot.lane.b32.xlu0 %v372, 111
        %v528 = vpop.permute.xlu0 %527
        %vm529 = vcmask 908288
        %v530 = vsel %vm529, %v524, %v526
        %v531 = vsel %vm529, %v526, %v528
        %v535 = vrot.slane %v457, 6
        %v536 = vrot.slane %v458, 6
        %v537 = vrot.slane %v459, 6
        %538 = vrot.lane.b32.xlu0 %v535, 110
        %v539 = vpop.permute.xlu0 %538
        %540 = vrot.lane.b32.xlu0 %v536, 110
        %v541 = vpop.permute.xlu0 %540
        %542 = vrot.lane.b32.xlu0 %v537, 110
        %v543 = vpop.permute.xlu0 %542
        %vm544 = vcmask 900096
        %v545 = vsel %vm544, %v539, %v541
        %v546 = vsel %vm544, %v541, %v543
        %v550 = vrot.slane %v469, 4
        %v551 = vrot.slane %v470, 4
        %v552 = vrot.slane %v471, 4
        %553 = vrot.lane.b32.xlu0 %v550, 96
        %v554 = vpop.permute.xlu0 %553
        %555 = vrot.lane.b32.xlu0 %v551, 96
        %v556 = vpop.permute.xlu0 %555
        %557 = vrot.lane.b32.xlu0 %v552, 96
        %v558 = vpop.permute.xlu0 %557
        %vm559 = vcmask 785408
        %v560 = vsel %vm559, %v554, %v556
        %v561 = vsel %vm559, %v556, %v558
        %v562 = vrot.slane %v369, 2
        %v563 = vrot.slane %v364, 2
        %v564 = vrot.slane %v372, 2
        %565 = vrot.lane.b32.xlu0 %v562, 95
        %v566 = vpop.permute.xlu0 %565
        %567 = vrot.lane.b32.xlu0 %v563, 95
        %v568 = vpop.permute.xlu0 %567
        %569 = vrot.lane.b32.xlu0 %v564, 95
        %v570 = vpop.permute.xlu0 %569
        %vm571 = vcmask 777216
        %v572 = vsel %vm571, %v566, %v568
        %v573 = vsel %vm571, %v568, %v570
        %577 = vrot.lane.b32.xlu0 %v481, 94
        %v578 = vpop.permute.xlu0 %577
        %579 = vrot.lane.b32.xlu0 %v482, 94
        %v580 = vpop.permute.xlu0 %579
        %581 = vrot.lane.b32.xlu0 %v483, 94
        %v582 = vpop.permute.xlu0 %581
        %vm583 = vcmask 769024
        %v584 = vsel %vm583, %v578, %v580
        %v585 = vsel %vm583, %v580, %v582
        %vm586 = vcmask 1041408
        %v589 = vsel %vm586, %v405, %v488
        %v592 = vsel %vm586, %v406, %v491
        %v595 = vsel %vm586, %v407, %v490
        %vm596 = vcmask 1043456
        %v598 = vsel %vm596, %v589, %v499
        %v600 = vsel %vm596, %v592, %v505
        %v602 = vsel %vm596, %v595, %v506
        %vm603 = vcmask 1045504
        %v605 = vsel %vm603, %v598, %v514
        %v607 = vsel %vm603, %v600, %v520
        %v609 = vsel %vm603, %v602, %v521
        %v612 = vsel %vm586, %v524, %v539
        %v615 = vsel %vm586, %v530, %v545
        %v618 = vsel %vm586, %v531, %v546
        %v620 = vsel %vm596, %v612, %v554
        %v622 = vsel %vm596, %v615, %v560
        %v624 = vsel %vm596, %v618, %v561
        %v626 = vsel %vm603, %v620, %v566
        %v628 = vsel %vm603, %v622, %v572
        %v630 = vsel %vm603, %v624, %v573
        %v631 = vld [vmem:[%s1] sm:$0xf]
        %v632 = vld [vmem:[%s1 + $0x4] sm:$0xf]
        %v633 = vld [vmem:[%s1 + $0x8] sm:$0xf]
        %v634 = vld [vmem:[%s1 + $0xc] sm:$0xf]
        %v635 = vld [vmem:[%s1 + $0x10] sm:$0xf]
        %v636 = vld [vmem:[%s2] sm:$0xff]
        %v637 = vld [vmem:[%s2 + $0x8] sm:$0xff]
        %v638 = vld [vmem:[%s2 + $0x10] sm:$0xff]
        %v639 = vld [vmem:[%s2 + $0x18] sm:$0xff]
        %v640 = vld [vmem:[%s2 + $0x20] sm:$0xff]
        %642 = vset.pattern.permute.xlu0 0
        %643 = vperm.xlu0 %642, %v636
        %v644 = vpop.permute.xlu0 %643
        %647 = vset.pattern.permute.xlu0 0
        %648 = vperm.xlu0 %647, %v637
        %v649 = vpop.permute.xlu0 %648
        %652 = vset.pattern.permute.xlu0 0
        %653 = vperm.xlu0 %652, %v638
        %v654 = vpop.permute.xlu0 %653
        %657 = vset.pattern.permute.xlu0 0
        %658 = vperm.xlu0 %657, %v639
        %v659 = vpop.permute.xlu0 %658
        %662 = vset.pattern.permute.xlu0 0
        %663 = vperm.xlu0 %662, %v640
        %v664 = vpop.permute.xlu0 %663
        %v671 = vunpack.c.l.b16 %v631
        %v672 = vunpack.c.l.b16 %v632
        %v673 = vunpack.c.l.b16 %v633
        %v674 = vunpack.c.l.b16 %v634
        %v675 = vunpack.c.l.b16 %v635
        %v676 = vpack.c.b16 %v672, %v671
        %v677 = vpack.c.b16 %v674, %v673
        %v678 = vpack.c.b16 %v675, %v675
        %685 = vrot.lane.b32.xlu0 %v605, 1
        %v686 = vpop.permute.xlu0 %685
        %687 = vrot.lane.b32.xlu0 %v607, 1
        %v688 = vpop.permute.xlu0 %687
        %689 = vrot.lane.b32.xlu0 %v609, 1
        %v690 = vpop.permute.xlu0 %689
        %691 = vrot.lane.b32.xlu0 %v626, 1
        %v692 = vpop.permute.xlu0 %691
        %693 = vrot.lane.b32.xlu0 %v628, 1
        %v694 = vpop.permute.xlu0 %693
        %695 = vrot.lane.b32.xlu0 %v630, 1
        %v696 = vpop.permute.xlu0 %695
        %697 = vrot.lane.b32.xlu0 %v578, 1
        %v698 = vpop.permute.xlu0 %697
        %699 = vrot.lane.b32.xlu0 %v584, 1
        %v700 = vpop.permute.xlu0 %699
        %701 = vrot.lane.b32.xlu0 %v585, 1
        %v702 = vpop.permute.xlu0 %701
        %v703 = vsel %vm428, %v686, %v688
        %v704 = vsel %vm428, %v688, %v690
        %v705 = vsel %vm428, %v692, %v694
        %v706 = vsel %vm428, %v694, %v696
        %v707 = vsel %vm428, %v698, %v700
        %v708 = vsel %vm428, %v700, %v702
        %vm713 = vcmask 293888
        %v715 = vsel %vm713, %v676, 0
        %v718 = vsel %vm713, %v677, 0
        %v721 = vsel %vm713, %v678, 0
        %v724 = vsel %vm586, %v707, 0
        %v727 = vsel %vm586, %v708, 0
        %729 = vmatprep.subr.bf16.mxu0 %v704
        %730 = vmatpush1.bf16.msra.mxu0 %v703
        %731 = vmatprep.subr.bf16.mxu0 %v706
        %732 = vmatpush1.bf16.msra.mxu0 %v705
        %733 = vmatprep.subr.bf16.mxu0 %v727
        %734 = vmatpush1.bf16.msra.mxu0 %v724
        %735 = vmatprep.subr.bf16.mxu0 0
        %736 = vmatpush1.bf16.msra.mxu0 0
        %737 = vmatprep.subr.bf16.mxu0 0
        %738 = vmatpush1.bf16.msra.mxu0 0
        %739 = vmatprep.subr.bf16.mxu0 0
        %740 = vmatpush1.bf16.msra.mxu0 0
        %741 = vmatprep.subr.bf16.mxu0 0
        %742 = vmatpush1.bf16.msra.mxu0 0
        %743 = vmatprep.subr.bf16.mxu0 0
        %744 = vmatpush1.bf16.msra.mxu0 0
        %745 = vmatprep.subr.bf16.mxu0 0
        %746 = vmatpush1.bf16.msra.mxu0 0
        %747 = vmatprep.subr.bf16.mxu0 0
        %748 = vmatpush1.bf16.msra.mxu0 0
        %749 = vmatprep.subr.bf16.mxu0 0
        %750 = vmatpush1.bf16.msra.mxu0 0
        %751 = vmatprep.subr.bf16.mxu0 0
        %752 = vmatpush1.bf16.msra.mxu0 0
        %753 = vmatprep.subr.bf16.mxu0 0
        %754 = vmatpush1.bf16.msra.mxu0 0
        %755 = vmatprep.subr.bf16.mxu0 0
        %756 = vmatpush1.bf16.msra.mxu0 0
        %757 = vmatprep.subr.bf16.mxu0 0
        %758 = vmatpush1.bf16.msra.mxu0 0
        %759 = vmatprep.subr.bf16.mxu0 0
        %760 = vmatpush1.bf16.msra.mxu0 0
        %761 = vmatprep.mubr.bf16.mxu0 0
        %762 = vmatmul.mubr.bf16.gmra.mrb[0].mxu0 %v715
        %v763 = vpop.f32.mrb[0].mxu0
        %v764 = vadd.f32 %v644, %v763
        %v765 = vpop.f32.mrb[0].mxu0
        %v766 = vadd.f32 %v644, %v765
        %v767 = vpop.f32.mrb[0].mxu0
        %v768 = vadd.f32 %v649, %v767
        %v769 = vpop.f32.mrb[0].mxu0
        %v770 = vadd.f32 %v649, %v769
        %771 = vmatprep.mubr.bf16.mxu0 0
        %772 = vmatmul.mubr.bf16.gmra.mrb[0].mxu0 %v718
        %v773 = vpop.f32.mrb[0].mxu0
        %v774 = vadd.f32 %v654, %v773
        %v775 = vpop.f32.mrb[0].mxu0
        %v776 = vadd.f32 %v654, %v775
        %v777 = vpop.f32.mrb[0].mxu0
        %v778 = vadd.f32 %v659, %v777
        %v779 = vpop.f32.mrb[0].mxu0
        %v780 = vadd.f32 %v659, %v779
        %781 = vmatprep.mubr.bf16.mxu0 0
        %782 = vmatmul.mubr.bf16.gmra.mrb[0].mxu0 %v721
        %v783 = vpop.f32.mrb[0].mxu0
        %v784 = vadd.f32 %v664, %v783
        %v785 = vpop.f32.mrb[0].mxu0
        %v786 = vadd.f32 %v664, %v785
        %v787 = vpop.f32.mrb[0].mxu0
        %v788 = vpop.f32.mrb[0].mxu0
        %789 = vdwg.mxu0
        %v790 = vmax.f32 %v764, 0.0
        %v791 = vmax.f32 %v766, 0.0
        %v792 = vmax.f32 %v768, 0.0
        %v793 = vmax.f32 %v770, 0.0
        %v794 = vmax.f32 %v774, 0.0
        %v795 = vmax.f32 %v776, 0.0
        %v796 = vmax.f32 %v778, 0.0
        %v797 = vmax.f32 %v780, 0.0
        %v798 = vmax.f32 %v784, 0.0
        %v799 = vmax.f32 %v786, 0.0
        %v800 = vadd.f32 %v790, 0.0
        %v801 = vadd.f32 %v791, 0.0
        %v802 = vpack.c.bf16 %v800, %v800
        %v803 = vpack.c.bf16 %v801, %v801
        %806 = vrot.lane.b32.xlu0 %v802, 16
        %v807 = vpop.permute.xlu0 %806
        %808 = vrot.lane.b32.xlu0 %v803, 16
        %v809 = vpop.permute.xlu0 %808
        %v810 = vsel %vm363, %v807, %v809
        %v813 = vsel %vm366, 0, %v807
        %v816 = vsel %vm366, %v809, 0
        %v818 = vmul.bf16 %v813, %v401
        %v819 = vmul.bf16 %v810, %v399
        %v820 = vmul.bf16 %v813, %v425
        %v821 = vmul.bf16 %v810, %v429
        %v822 = vmul.bf16 %v816, %v427
        %v823 = vmul.bf16 %v813, %v437
        %v824 = vmul.bf16 %v810, %v441
        %v825 = vmul.bf16 %v816, %v439
        %v826 = vmul.bf16 %v813, %v449
        %v827 = vmul.bf16 %v810, %v453
        %v828 = vmul.bf16 %v816, %v451
        %v829 = vmul.bf16 %v813, %v461
        %v830 = vmul.bf16 %v810, %v465
        %v831 = vmul.bf16 %v816, %v463
        %v832 = vmul.bf16 %v813, %v473
        %v833 = vmul.bf16 %v810, %v477
        %v834 = vmul.bf16 %v816, %v475
        %v836 = vrot.slane %v813, 4
        %v837 = vrot.slane %v810, 4
        %838 = vrot.lane.b32.xlu0 %v836, 127
        %v839 = vpop.permute.xlu0 %838
        %840 = vrot.lane.b32.xlu0 %v837, 127
        %v841 = vpop.permute.xlu0 %840
        %v842 = vsel %vm400, %v839, %v841
        %846 = vrot.lane.b32.xlu0 %v820, 126
        %v847 = vpop.permute.xlu0 %846
        %848 = vrot.lane.b32.xlu0 %v821, 126
        %v849 = vpop.permute.xlu0 %848
        %850 = vrot.lane.b32.xlu0 %v822, 126
        %v851 = vpop.permute.xlu0 %850
        %v852 = vsel %vm504, %v847, %v849
        %v853 = vsel %vm504, %v849, %v851
        %v857 = vrot.slane %v823, 4
        %v858 = vrot.slane %v824, 4
        %v859 = vrot.slane %v825, 4
        %860 = vrot.lane.b32.xlu0 %v857, 112
        %v861 = vpop.permute.xlu0 %860
        %862 = vrot.lane.b32.xlu0 %v858, 112
        %v863 = vpop.permute.xlu0 %862
        %864 = vrot.lane.b32.xlu0 %v859, 112
        %v865 = vpop.permute.xlu0 %864
        %v866 = vsel %vm519, %v861, %v863
        %v867 = vsel %vm519, %v863, %v865
        %869 = vrot.lane.b32.xlu0 %v813, 111
        %v870 = vpop.permute.xlu0 %869
        %871 = vrot.lane.b32.xlu0 %v810, 111
        %v872 = vpop.permute.xlu0 %871
        %873 = vrot.lane.b32.xlu0 %v816, 111
        %v874 = vpop.permute.xlu0 %873
        %v875 = vsel %vm529, %v870, %v872
        %v876 = vsel %vm529, %v872, %v874
        %v880 = vrot.slane %v826, 4
        %v881 = vrot.slane %v827, 4
        %v882 = vrot.slane %v828, 4
        %883 = vrot.lane.b32.xlu0 %v880, 110
        %v884 = vpop.permute.xlu0 %883
        %885 = vrot.lane.b32.xlu0 %v881, 110
        %v886 = vpop.permute.xlu0 %885
        %887 = vrot.lane.b32.xlu0 %v882, 110
        %v888 = vpop.permute.xlu0 %887
        %v889 = vsel %vm544, %v884, %v886
        %v890 = vsel %vm544, %v886, %v888
        %894 = vrot.lane.b32.xlu0 %v829, 96
        %v895 = vpop.permute.xlu0 %894
        %896 = vrot.lane.b32.xlu0 %v830, 96
        %v897 = vpop.permute.xlu0 %896
        %898 = vrot.lane.b32.xlu0 %v831, 96
        %v899 = vpop.permute.xlu0 %898
        %v900 = vsel %vm559, %v895, %v897
        %v901 = vsel %vm559, %v897, %v899
        %v902 = vrot.slane %v816, 4
        %903 = vrot.lane.b32.xlu0 %v836, 95
        %v904 = vpop.permute.xlu0 %903
        %905 = vrot.lane.b32.xlu0 %v837, 95
        %v906 = vpop.permute.xlu0 %905
        %907 = vrot.lane.b32.xlu0 %v902, 95
        %v908 = vpop.permute.xlu0 %907
        %v909 = vsel %vm571, %v904, %v906
        %v910 = vsel %vm571, %v906, %v908
        %914 = vrot.lane.b32.xlu0 %v832, 94
        %v915 = vpop.permute.xlu0 %914
        %916 = vrot.lane.b32.xlu0 %v833, 94
        %v917 = vpop.permute.xlu0 %916
        %918 = vrot.lane.b32.xlu0 %v834, 94
        %v919 = vpop.permute.xlu0 %918
        %v920 = vsel %vm583, %v915, %v917
        %v921 = vsel %vm583, %v917, %v919
        %v923 = vsel %vm596, %v405, %v839
        %v926 = vsel %vm596, %v818, %v842
        %v929 = vsel %vm596, %v819, %v841
        %v932 = vsel %vm596, %v847, %v861
        %v935 = vsel %vm596, %v852, %v866
        %v938 = vsel %vm596, %v853, %v867
        %v941 = vsel %vm596, %v870, %v884
        %v944 = vsel %vm596, %v875, %v889
        %v947 = vsel %vm596, %v876, %v890
        %v950 = vsel %vm596, %v895, %v904
        %v953 = vsel %vm596, %v900, %v909
        %v956 = vsel %vm596, %v901, %v910
        %v957 = vld [vmem:[%s3] sm:$0xf]
        %v958 = vld [vmem:[%s4] sm:$0xff]
        %960 = vset.pattern.permute.xlu0 0
        %961 = vperm.xlu0 %960, %v958
        %v962 = vpop.permute.xlu0 %961
        %976 = vrot.lane.b32.xlu0 %v923, 1
        %v977 = vpop.permute.xlu0 %976
        %978 = vrot.lane.b32.xlu0 %v926, 1
        %v979 = vpop.permute.xlu0 %978
        %980 = vrot.lane.b32.xlu0 %v929, 1
        %v981 = vpop.permute.xlu0 %980
        %982 = vrot.lane.b32.xlu0 %v932, 1
        %v983 = vpop.permute.xlu0 %982
        %984 = vrot.lane.b32.xlu0 %v935, 1
        %v985 = vpop.permute.xlu0 %984
        %986 = vrot.lane.b32.xlu0 %v938, 1
        %v987 = vpop.permute.xlu0 %986
        %988 = vrot.lane.b32.xlu0 %v941, 1
        %v989 = vpop.permute.xlu0 %988
        %990 = vrot.lane.b32.xlu0 %v944, 1
        %v991 = vpop.permute.xlu0 %990
        %992 = vrot.lane.b32.xlu0 %v947, 1
        %v993 = vpop.permute.xlu0 %992
        %994 = vrot.lane.b32.xlu0 %v950, 1
        %v995 = vpop.permute.xlu0 %994
        %996 = vrot.lane.b32.xlu0 %v953, 1
        %v997 = vpop.permute.xlu0 %996
        %998 = vrot.lane.b32.xlu0 %v956, 1
        %v999 = vpop.permute.xlu0 %998
        %1000 = vrot.lane.b32.xlu0 %v915, 1
        %v1001 = vpop.permute.xlu0 %1000
        %1002 = vrot.lane.b32.xlu0 %v920, 1
        %v1003 = vpop.permute.xlu0 %1002
        %1004 = vrot.lane.b32.xlu0 %v921, 1
        %v1005 = vpop.permute.xlu0 %1004
        %v1006 = vsel %vm428, %v977, %v979
        %v1007 = vsel %vm428, %v979, %v981
        %v1008 = vsel %vm428, %v983, %v985
        %v1009 = vsel %vm428, %v985, %v987
        %v1010 = vsel %vm428, %v989, %v991
        %v1011 = vsel %vm428, %v991, %v993
        %v1012 = vsel %vm428, %v995, %v997
        %v1013 = vsel %vm428, %v997, %v999
        %v1014 = vsel %vm428, %v1001, %v1003
        %v1015 = vsel %vm428, %v1003, %v1005
        %vm1024 = vcmask 588800
        %v1026 = vsel %vm1024, %v957, 0
        %v1029 = vsel %vm596, %v1014, 0
        %v1032 = vsel %vm596, %v1015, 0
        %1034 = vmatprep.subr.bf16.mxu0 %v1007
        %1035 = vmatpush1.bf16.msra.mxu0 %v1006
        %1036 = vmatprep.subr.bf16.mxu0 %v1009
        %1037 = vmatpush1.bf16.msra.mxu0 %v1008
        %1038 = vmatprep.subr.bf16.mxu0 %v1011
        %1039 = vmatpush1.bf16.msra.mxu0 %v1010
        %1040 = vmatprep.subr.bf16.mxu0 %v1013
        %1041 = vmatpush1.bf16.msra.mxu0 %v1012
        %1042 = vmatprep.subr.bf16.mxu0 %v1032
        %1043 = vmatpush1.bf16.msra.mxu0 %v1029
        %1044 = vmatprep.subr.bf16.mxu0 0
        %1045 = vmatpush1.bf16.msra.mxu0 0
        %1046 = vmatprep.subr.bf16.mxu0 0
        %1047 = vmatpush1.bf16.msra.mxu0 0
        %1048 = vmatprep.subr.bf16.mxu0 0
        %1049 = vmatpush1.bf16.msra.mxu0 0
        %1050 = vmatprep.subr.bf16.mxu0 0
        %1051 = vmatpush1.bf16.msra.mxu0 0
        %1052 = vmatprep.subr.bf16.mxu0 0
        %1053 = vmatpush1.bf16.msra.mxu0 0
        %1054 = vmatprep.subr.bf16.mxu0 0
        %1055 = vmatpush1.bf16.msra.mxu0 0
        %1056 = vmatprep.subr.bf16.mxu0 0
        %1057 = vmatpush1.bf16.msra.mxu0 0
        %1058 = vmatprep.subr.bf16.mxu0 0
        %1059 = vmatpush1.bf16.msra.mxu0 0
        %1060 = vmatprep.subr.bf16.mxu0 0
        %1061 = vmatpush1.bf16.msra.mxu0 0
        %1062 = vmatprep.subr.bf16.mxu0 0
        %1063 = vmatpush1.bf16.msra.mxu0 0
        %1064 = vmatprep.subr.bf16.mxu0 0
        %1065 = vmatpush1.bf16.msra.mxu0 0
        %1066 = vmatprep.mubr.bf16.mxu0 0
        %1067 = vmatmul.mubr.bf16.gmra.mrb[0].mxu0 %v1026
        %v1068 = vpop.f32.mrb[0].mxu0
        %v1069 = vadd.f32 %v962, %v1068
        %v1070 = vpop.f32.mrb[0].mxu0
        %v1071 = vadd.f32 %v962, %v1070
        %v1072 = vpop.f32.mrb[0].mxu0
        %v1073 = vpop.f32.mrb[0].mxu0
        %1074 = vdwg.mxu0
        %v1075 = vmax.f32 %v1069, 0.0
        %v1076 = vmax.f32 %v1071, 0.0
        %v1077 = vpack.c.bf16 %v1075, %v1075
        %v1078 = vpack.c.bf16 %v1076, %v1076
        %1081 = vrot.lane.b32.xlu0 %v1077, 16
        %v1082 = vpop.permute.xlu0 %1081
        %1083 = vrot.lane.b32.xlu0 %v1078, 16
        %v1084 = vpop.permute.xlu0 %1083
        %v1085 = vsel %vm363, %v1082, %v1084
        %v1088 = vsel %vm366, 0, %v1082
        %v1091 = vsel %vm366, %v1084, 0
        %v1093 = vmul.bf16 %v1088, %v401
        %v1094 = vmul.bf16 %v1085, %v399
        %v1095 = vmul.bf16 %v1088, %v425
        %v1096 = vmul.bf16 %v1085, %v429
        %v1097 = vmul.bf16 %v1091, %v427
        %v1098 = vmul.bf16 %v1088, %v437
        %v1099 = vmul.bf16 %v1085, %v441
        %v1100 = vmul.bf16 %v1091, %v439
        %v1101 = vmul.bf16 %v1088, %v449
        %v1102 = vmul.bf16 %v1085, %v453
        %v1103 = vmul.bf16 %v1091, %v451
        %v1104 = vmul.bf16 %v1088, %v461
        %v1105 = vmul.bf16 %v1085, %v465
        %v1106 = vmul.bf16 %v1091, %v463
        %v1107 = vmul.bf16 %v1088, %v473
        %v1108 = vmul.bf16 %v1085, %v477
        %v1109 = vmul.bf16 %v1091, %v475
        %v1111 = vrot.slane %v1088, 4
        %v1112 = vrot.slane %v1085, 4
        %1113 = vrot.lane.b32.xlu0 %v1111, 127
        %v1114 = vpop.permute.xlu0 %1113
        %1115 = vrot.lane.b32.xlu0 %v1112, 127
        %v1116 = vpop.permute.xlu0 %1115
        %v1117 = vsel %vm400, %v1114, %v1116
        %1121 = vrot.lane.b32.xlu0 %v1095, 126
        %v1122 = vpop.permute.xlu0 %1121
        %1123 = vrot.lane.b32.xlu0 %v1096, 126
        %v1124 = vpop.permute.xlu0 %1123
        %1125 = vrot.lane.b32.xlu0 %v1097, 126
        %v1126 = vpop.permute.xlu0 %1125
        %v1127 = vsel %vm504, %v1122, %v1124
        %v1128 = vsel %vm504, %v1124, %v1126
        %v1132 = vrot.slane %v1098, 4
        %v1133 = vrot.slane %v1099, 4
        %v1134 = vrot.slane %v1100, 4
        %1135 = vrot.lane.b32.xlu0 %v1132, 112
        %v1136 = vpop.permute.xlu0 %1135
        %1137 = vrot.lane.b32.xlu0 %v1133, 112
        %v1138 = vpop.permute.xlu0 %1137
        %1139 = vrot.lane.b32.xlu0 %v1134, 112
        %v1140 = vpop.permute.xlu0 %1139
        %v1141 = vsel %vm519, %v1136, %v1138
        %v1142 = vsel %vm519, %v1138, %v1140
        %1144 = vrot.lane.b32.xlu0 %v1088, 111
        %v1145 = vpop.permute.xlu0 %1144
        %1146 = vrot.lane.b32.xlu0 %v1085, 111
        %v1147 = vpop.permute.xlu0 %1146
        %1148 = vrot.lane.b32.xlu0 %v1091, 111
        %v1149 = vpop.permute.xlu0 %1148
        %v1150 = vsel %vm529, %v1145, %v1147
        %v1151 = vsel %vm529, %v1147, %v1149
        %v1155 = vrot.slane %v1101, 4
        %v1156 = vrot.slane %v1102, 4
        %v1157 = vrot.slane %v1103, 4
        %1158 = vrot.lane.b32.xlu0 %v1155, 110
        %v1159 = vpop.permute.xlu0 %1158
        %1160 = vrot.lane.b32.xlu0 %v1156, 110
        %v1161 = vpop.permute.xlu0 %1160
        %1162 = vrot.lane.b32.xlu0 %v1157, 110
        %v1163 = vpop.permute.xlu0 %1162
        %v1164 = vsel %vm544, %v1159, %v1161
        %v1165 = vsel %vm544, %v1161, %v1163
        %1169 = vrot.lane.b32.xlu0 %v1104, 96
        %v1170 = vpop.permute.xlu0 %1169
        %1171 = vrot.lane.b32.xlu0 %v1105, 96
        %v1172 = vpop.permute.xlu0 %1171
        %1173 = vrot.lane.b32.xlu0 %v1106, 96
        %v1174 = vpop.permute.xlu0 %1173
        %v1175 = vsel %vm559, %v1170, %v1172
        %v1176 = vsel %vm559, %v1172, %v1174
        %v1177 = vrot.slane %v1091, 4
        %1178 = vrot.lane.b32.xlu0 %v1111, 95
        %v1179 = vpop.permute.xlu0 %1178
        %1180 = vrot.lane.b32.xlu0 %v1112, 95
        %v1181 = vpop.permute.xlu0 %1180
        %1182 = vrot.lane.b32.xlu0 %v1177, 95
        %v1183 = vpop.permute.xlu0 %1182
        %v1184 = vsel %vm571, %v1179, %v1181
        %v1185 = vsel %vm571, %v1181, %v1183
        %1189 = vrot.lane.b32.xlu0 %v1107, 94
        %v1190 = vpop.permute.xlu0 %1189
        %1191 = vrot.lane.b32.xlu0 %v1108, 94
        %v1192 = vpop.permute.xlu0 %1191
        %1193 = vrot.lane.b32.xlu0 %v1109, 94
        %v1194 = vpop.permute.xlu0 %1193
        %v1195 = vsel %vm583, %v1190, %v1192
        %v1196 = vsel %vm583, %v1192, %v1194
        %v1198 = vsel %vm596, %v405, %v1114
        %v1201 = vsel %vm596, %v1093, %v1117
        %v1204 = vsel %vm596, %v1094, %v1116
        %v1207 = vsel %vm596, %v1122, %v1136
        %v1210 = vsel %vm596, %v1127, %v1141
        %v1213 = vsel %vm596, %v1128, %v1142
        %v1216 = vsel %vm596, %v1145, %v1159
        %v1219 = vsel %vm596, %v1150, %v1164
        %v1222 = vsel %vm596, %v1151, %v1165
        %v1225 = vsel %vm596, %v1170, %v1179
        %v1228 = vsel %vm596, %v1175, %v1184
        %v1231 = vsel %vm596, %v1176, %v1185
        %v1232 = vld [vmem:[%s5] sm:$0xf]
        %v1233 = vld [vmem:[%s6] sm:$0xff]
        %1235 = vset.pattern.permute.xlu0 0
        %1236 = vperm.xlu0 %1235, %v1233
        %v1237 = vpop.permute.xlu0 %1236
        %1251 = vrot.lane.b32.xlu0 %v1198, 1
        %v1252 = vpop.permute.xlu0 %1251
        %1253 = vrot.lane.b32.xlu0 %v1201, 1
        %v1254 = vpop.permute.xlu0 %1253
        %1255 = vrot.lane.b32.xlu0 %v1204, 1
        %v1256 = vpop.permute.xlu0 %1255
        %1257 = vrot.lane.b32.xlu0 %v1207, 1
        %v1258 = vpop.permute.xlu0 %1257
        %1259 = vrot.lane.b32.xlu0 %v1210, 1
        %v1260 = vpop.permute.xlu0 %1259
        %1261 = vrot.lane.b32.xlu0 %v1213, 1
        %v1262 = vpop.permute.xlu0 %1261
        %1263 = vrot.lane.b32.xlu0 %v1216, 1
        %v1264 = vpop.permute.xlu0 %1263
        %1265 = vrot.lane.b32.xlu0 %v1219, 1
        %v1266 = vpop.permute.xlu0 %1265
        %1267 = vrot.lane.b32.xlu0 %v1222, 1
        %v1268 = vpop.permute.xlu0 %1267
        %1269 = vrot.lane.b32.xlu0 %v1225, 1
        %v1270 = vpop.permute.xlu0 %1269
        %1271 = vrot.lane.b32.xlu0 %v1228, 1
        %v1272 = vpop.permute.xlu0 %1271
        %1273 = vrot.lane.b32.xlu0 %v1231, 1
        %v1274 = vpop.permute.xlu0 %1273
        %1275 = vrot.lane.b32.xlu0 %v1190, 1
        %v1276 = vpop.permute.xlu0 %1275
        %1277 = vrot.lane.b32.xlu0 %v1195, 1
        %v1278 = vpop.permute.xlu0 %1277
        %1279 = vrot.lane.b32.xlu0 %v1196, 1
        %v1280 = vpop.permute.xlu0 %1279
        %v1281 = vsel %vm428, %v1252, %v1254
        %v1282 = vsel %vm428, %v1254, %v1256
        %v1283 = vsel %vm428, %v1258, %v1260
        %v1284 = vsel %vm428, %v1260, %v1262
        %v1285 = vsel %vm428, %v1264, %v1266
        %v1286 = vsel %vm428, %v1266, %v1268
        %v1287 = vsel %vm428, %v1270, %v1272
        %v1288 = vsel %vm428, %v1272, %v1274
        %v1289 = vsel %vm428, %v1276, %v1278
        %v1290 = vsel %vm428, %v1278, %v1280
        %v1300 = vsel %vm1024, %v1232, 0
        %v1303 = vsel %vm596, %v1289, 0
        %v1306 = vsel %vm596, %v1290, 0
        %1308 = vmatprep.subr.bf16.mxu0 %v1282
        %1309 = vmatpush1.bf16.msra.mxu0 %v1281
        %1310 = vmatprep.subr.bf16.mxu0 %v1284
        %1311 = vmatpush1.bf16.msra.mxu0 %v1283
        %1312 = vmatprep.subr.bf16.mxu0 %v1286
        %1313 = vmatpush1.bf16.msra.mxu0 %v1285
        %1314 = vmatprep.subr.bf16.mxu0 %v1288
        %1315 = vmatpush1.bf16.msra.mxu0 %v1287
        %1316 = vmatprep.subr.bf16.mxu0 %v1306
        %1317 = vmatpush1.bf16.msra.mxu0 %v1303
        %1318 = vmatprep.subr.bf16.mxu0 0
        %1319 = vmatpush1.bf16.msra.mxu0 0
        %1320 = vmatprep.subr.bf16.mxu0 0
        %1321 = vmatpush1.bf16.msra.mxu0 0
        %1322 = vmatprep.subr.bf16.mxu0 0
        %1323 = vmatpush1.bf16.msra.mxu0 0
        %1324 = vmatprep.subr.bf16.mxu0 0
        %1325 = vmatpush1.bf16.msra.mxu0 0
        %1326 = vmatprep.subr.bf16.mxu0 0
        %1327 = vmatpush1.bf16.msra.mxu0 0
        %1328 = vmatprep.subr.bf16.mxu0 0
        %1329 = vmatpush1.bf16.msra.mxu0 0
        %1330 = vmatprep.subr.bf16.mxu0 0
        %1331 = vmatpush1.bf16.msra.mxu0 0
        %1332 = vmatprep.subr.bf16.mxu0 0
        %1333 = vmatpush1.bf16.msra.mxu0 0
        %1334 = vmatprep.subr.bf16.mxu0 0
        %1335 = vmatpush1.bf16.msra.mxu0 0
        %1336 = vmatprep.subr.bf16.mxu0 0
        %1337 = vmatpush1.bf16.msra.mxu0 0
        %1338 = vmatprep.subr.bf16.mxu0 0
        %1339 = vmatpush1.bf16.msra.mxu0 0
        %1340 = vmatprep.mubr.bf16.mxu0 0
        %1341 = vmatmul.mubr.bf16.gmra.mrb[0].mxu0 %v1300
        %v1342 = vpop.f32.mrb[0].mxu0
        %v1343 = vadd.f32 %v1237, %v1342
        %v1344 = vpop.f32.mrb[0].mxu0
        %v1345 = vadd.f32 %v1237, %v1344
        %v1346 = vpop.f32.mrb[0].mxu0
        %v1347 = vpop.f32.mrb[0].mxu0
        %1348 = vdwg.mxu0
        %v1349 = vmax.f32 %v1343, 0.0
        %v1350 = vmax.f32 %v1345, 0.0
        %v1351 = vadd.f32 %v792, %v1349
        %v1352 = vadd.f32 %v793, %v1350
        %v1353 = vpack.c.bf16 %v1351, %v1351
        %v1354 = vpack.c.bf16 %v1352, %v1352
        %1357 = vrot.lane.b32.xlu0 %v1353, 16
        %v1358 = vpop.permute.xlu0 %1357
        %1359 = vrot.lane.b32.xlu0 %v1354, 16
        %v1360 = vpop.permute.xlu0 %1359
        %v1361 = vsel %vm363, %v1358, %v1360
        %v1364 = vsel %vm366, 0, %v1358
        %v1367 = vsel %vm366, %v1360, 0
        %v1369 = vld [vmem:[%s8] sm:$0x22]
        %v1371 = vunpack.c.l.b16 %v1369
        %v1372 = vunpack.c.h.b16 %v1369
        %v1373 = vpack.c.b16 %v1371, %v1371
        %v1374 = vpack.c.b16 %v1372, %v1372
        %v1376 = vpack.i.b16 %v1373, %v1373
        %v1378 = vlaneseq
        %v1379 = vshrl.u32 %v1378, 7
        %v1380 = vsub.s32 1, %v1379
        %v1381 = vrot.slane %v1376, %v1380
        %v1383 = vpack.i.b16 %v1374, %v1374
        %v1385 = vlaneseq
        %v1386 = vshrl.u32 %v1385, 7
        %v1387 = vsub.s32 1, %v1386
        %v1388 = vrot.slane %v1383, %v1387
        %1391 = vrot.lane.b32.xlu0 %v1381, 110
        %v1392 = vpop.permute.xlu0 %1391
        %1393 = vrot.lane.b32.xlu0 %v1388, 110
        %v1394 = vpop.permute.xlu0 %1393
        %v1395 = vsel %vm544, %v1392, %v1394
        %v1399 = vmul.bf16 %v1392, 0
        %v1400 = vmul.bf16 %v1364, %v1395
        %v1401 = vmul.bf16 %v1361, %v1394
        %v1402 = vshrl.u32 %v1373, 16
        %v1403 = vpack.i.b16 %v1402, %v1402
        %v1405 = vlaneseq
        %v1406 = vshrl.u32 %v1405, 7
        %v1407 = vsub.s32 1, %v1406
        %v1408 = vrot.slane %v1403, %v1407
        %v1409 = vshrl.u32 %v1374, 16
        %v1410 = vpack.i.b16 %v1409, %v1409
        %v1412 = vlaneseq
        %v1413 = vshrl.u32 %v1412, 7
        %v1414 = vsub.s32 1, %v1413
        %v1415 = vrot.slane %v1410, %v1414
        %1418 = vrot.lane.b32.xlu0 %v1408, 114
        %v1419 = vpop.permute.xlu0 %1418
        %1420 = vrot.lane.b32.xlu0 %v1415, 114
        %v1421 = vpop.permute.xlu0 %1420
        %vm1422 = vcmask 932864
        %v1423 = vsel %vm1422, %v1419, %v1421
        %v1427 = vmul.bf16 %v1419, 0
        %v1428 = vmul.bf16 %v1364, %v1423
        %v1429 = vmul.bf16 %v1361, %v1421
        %1430 = vrot.lane.b32.xlu0 %v1381, 14
        %v1431 = vpop.permute.xlu0 %1430
        %1432 = vrot.lane.b32.xlu0 %v1388, 14
        %v1433 = vpop.permute.xlu0 %1432
        %vm1434 = vcmask 113664
        %v1435 = vsel %vm1434, %v1431, %v1433
        %v1439 = vmul.bf16 %v1364, %v1431
        %v1440 = vmul.bf16 %v1361, %v1435
        %v1441 = vmul.bf16 %v1367, %v1433
        %1442 = vrot.lane.b32.xlu0 %v1408, 18
        %v1443 = vpop.permute.xlu0 %1442
        %1444 = vrot.lane.b32.xlu0 %v1415, 18
        %v1445 = vpop.permute.xlu0 %1444
        %vm1446 = vcmask 146432
        %v1447 = vsel %vm1446, %v1443, %v1445
        %v1451 = vmul.bf16 %v1364, %v1443
        %v1452 = vmul.bf16 %v1361, %v1447
        %v1453 = vmul.bf16 %v1367, %v1445
        %1454 = vrot.lane.b32.xlu0 %v1381, 46
        %v1455 = vpop.permute.xlu0 %1454
        %1456 = vrot.lane.b32.xlu0 %v1388, 46
        %v1457 = vpop.permute.xlu0 %1456
        %vm1458 = vcmask 375808
        %v1459 = vsel %vm1458, %v1455, %v1457
        %v1463 = vmul.bf16 %v1364, %v1455
        %v1464 = vmul.bf16 %v1361, %v1459
        %v1465 = vmul.bf16 %v1367, %v1457
        %1466 = vrot.lane.b32.xlu0 %v1408, 50
        %v1467 = vpop.permute.xlu0 %1466
        %1468 = vrot.lane.b32.xlu0 %v1415, 50
        %v1469 = vpop.permute.xlu0 %1468
        %vm1470 = vcmask 408576
        %v1471 = vsel %vm1470, %v1467, %v1469
        %v1475 = vmul.bf16 %v1364, %v1467
        %v1476 = vmul.bf16 %v1361, %v1471
        %v1477 = vmul.bf16 %v1367, %v1469
        %v1480 = vrot.slane 0, 4
        %v1481 = vrot.slane %v1364, 4
        %v1482 = vrot.slane %v1361, 4
        %1483 = vrot.lane.b32.xlu0 %v1480, 126
        %v1484 = vpop.permute.xlu0 %1483
        %1485 = vrot.lane.b32.xlu0 %v1481, 126
        %v1486 = vpop.permute.xlu0 %1485
        %1487 = vrot.lane.b32.xlu0 %v1482, 126
        %v1488 = vpop.permute.xlu0 %1487
        %v1489 = vsel %vm504, %v1484, %v1486
        %v1490 = vsel %vm504, %v1486, %v1488
        %1494 = vrot.lane.b32.xlu0 %v1427, 124
        %v1495 = vpop.permute.xlu0 %1494
        %1496 = vrot.lane.b32.xlu0 %v1428, 124
        %v1497 = vpop.permute.xlu0 %1496
        %1498 = vrot.lane.b32.xlu0 %v1429, 124
        %v1499 = vpop.permute.xlu0 %1498
        %vm1500 = vcmask 1014784
        %v1501 = vsel %vm1500, %v1495, %v1497
        %v1502 = vsel %vm1500, %v1497, %v1499
        %v1506 = vrot.slane %v1439, 4
        %v1507 = vrot.slane %v1440, 4
        %v1508 = vrot.slane %v1441, 4
        %1509 = vrot.lane.b32.xlu0 %v1506, 96
        %v1510 = vpop.permute.xlu0 %1509
        %1511 = vrot.lane.b32.xlu0 %v1507, 96
        %v1512 = vpop.permute.xlu0 %1511
        %1513 = vrot.lane.b32.xlu0 %v1508, 96
        %v1514 = vpop.permute.xlu0 %1513
        %v1515 = vsel %vm559, %v1510, %v1512
        %v1516 = vsel %vm559, %v1512, %v1514
        %1518 = vrot.lane.b32.xlu0 %v1364, 94
        %v1519 = vpop.permute.xlu0 %1518
        %1520 = vrot.lane.b32.xlu0 %v1361, 94
        %v1521 = vpop.permute.xlu0 %1520
        %1522 = vrot.lane.b32.xlu0 %v1367, 94
        %v1523 = vpop.permute.xlu0 %1522
        %v1524 = vsel %vm583, %v1519, %v1521
        %v1525 = vsel %vm583, %v1521, %v1523
        %v1529 = vrot.slane %v1451, 4
        %v1530 = vrot.slane %v1452, 4
        %v1531 = vrot.slane %v1453, 4
        %1532 = vrot.lane.b32.xlu0 %v1529, 92
        %v1533 = vpop.permute.xlu0 %1532
        %1534 = vrot.lane.b32.xlu0 %v1530, 92
        %v1535 = vpop.permute.xlu0 %1534
        %1536 = vrot.lane.b32.xlu0 %v1531, 92
        %v1537 = vpop.permute.xlu0 %1536
        %vm1538 = vcmask 752640
        %v1539 = vsel %vm1538, %v1533, %v1535
        %v1540 = vsel %vm1538, %v1535, %v1537
        %1544 = vrot.lane.b32.xlu0 %v1463, 64
        %v1545 = vpop.permute.xlu0 %1544
        %1546 = vrot.lane.b32.xlu0 %v1464, 64
        %v1547 = vpop.permute.xlu0 %1546
        %1548 = vrot.lane.b32.xlu0 %v1465, 64
        %v1549 = vpop.permute.xlu0 %1548
        %vm1550 = vcmask 523264
        %v1551 = vsel %vm1550, %v1545, %v1547
        %v1552 = vsel %vm1550, %v1547, %v1549
        %v1553 = vrot.slane %v1367, 4
        %1554 = vrot.lane.b32.xlu0 %v1481, 62
        %v1555 = vpop.permute.xlu0 %1554
        %1556 = vrot.lane.b32.xlu0 %v1482, 62
        %v1557 = vpop.permute.xlu0 %1556
        %1558 = vrot.lane.b32.xlu0 %v1553, 62
        %v1559 = vpop.permute.xlu0 %1558
        %vm1560 = vcmask 506880
        %v1561 = vsel %vm1560, %v1555, %v1557
        %v1562 = vsel %vm1560, %v1557, %v1559
        %1566 = vrot.lane.b32.xlu0 %v1475, 60
        %v1567 = vpop.permute.xlu0 %1566
        %1568 = vrot.lane.b32.xlu0 %v1476, 60
        %v1569 = vpop.permute.xlu0 %1568
        %1570 = vrot.lane.b32.xlu0 %v1477, 60
        %v1571 = vpop.permute.xlu0 %1570
        %vm1572 = vcmask 490496
        %v1573 = vsel %vm1572, %v1567, %v1569
        %v1574 = vsel %vm1572, %v1569, %v1571
        %v1577 = vsel %vm596, %v1399, %v1489
        %v1580 = vsel %vm596, %v1400, %v1490
        %v1583 = vsel %vm596, %v1401, %v1488
        %v1586 = vsel %vm596, %v1501, %v1510
        %v1589 = vsel %vm596, %v1502, %v1515
        %v1592 = vsel %vm596, %v1499, %v1516
        %v1595 = vsel %vm596, %v1519, %v1533
        %v1598 = vsel %vm596, %v1524, %v1539
        %v1601 = vsel %vm596, %v1525, %v1540
        %v1604 = vsel %vm596, %v1545, %v1555
        %v1607 = vsel %vm596, %v1551, %v1561
        %v1610 = vsel %vm596, %v1552, %v1562
        %s1611 = scalar_lea.vmem %s3, 4
        %v1612 = vld [vmem:[%s1611] sm:$0xf]
        %s1613 = scalar_lea.vmem %s4, 8
        %v1614 = vld [vmem:[%s1613] sm:$0xff]
        %1616 = vset.pattern.permute.xlu0 0
        %1617 = vperm.xlu0 %1616, %v1614
        %v1618 = vpop.permute.xlu0 %1617
        %1632 = vrot.lane.b32.xlu0 %v1577, 18
        %v1633 = vpop.permute.xlu0 %1632
        %1634 = vrot.lane.b32.xlu0 %v1580, 18
        %v1635 = vpop.permute.xlu0 %1634
        %1636 = vrot.lane.b32.xlu0 %v1583, 18
        %v1637 = vpop.permute.xlu0 %1636
        %1638 = vrot.lane.b32.xlu0 %v1586, 18
        %v1639 = vpop.permute.xlu0 %1638
        %1640 = vrot.lane.b32.xlu0 %v1589, 18
        %v1641 = vpop.permute.xlu0 %1640
        %1642 = vrot.lane.b32.xlu0 %v1592, 18
        %v1643 = vpop.permute.xlu0 %1642
        %1644 = vrot.lane.b32.xlu0 %v1595, 18
        %v1645 = vpop.permute.xlu0 %1644
        %1646 = vrot.lane.b32.xlu0 %v1598, 18
        %v1647 = vpop.permute.xlu0 %1646
        %1648 = vrot.lane.b32.xlu0 %v1601, 18
        %v1649 = vpop.permute.xlu0 %1648
        %1650 = vrot.lane.b32.xlu0 %v1604, 18
        %v1651 = vpop.permute.xlu0 %1650
        %1652 = vrot.lane.b32.xlu0 %v1607, 18
        %v1653 = vpop.permute.xlu0 %1652
        %1654 = vrot.lane.b32.xlu0 %v1610, 18
        %v1655 = vpop.permute.xlu0 %1654
        %1656 = vrot.lane.b32.xlu0 %v1567, 18
        %v1657 = vpop.permute.xlu0 %1656
        %1658 = vrot.lane.b32.xlu0 %v1573, 18
        %v1659 = vpop.permute.xlu0 %1658
        %1660 = vrot.lane.b32.xlu0 %v1574, 18
        %v1661 = vpop.permute.xlu0 %1660
        %v1662 = vsel %vm1446, %v1633, %v1635
        %v1663 = vsel %vm1446, %v1635, %v1637
        %v1664 = vsel %vm1446, %v1639, %v1641
        %v1665 = vsel %vm1446, %v1641, %v1643
        %v1666 = vsel %vm1446, %v1645, %v1647
        %v1667 = vsel %vm1446, %v1647, %v1649
        %v1668 = vsel %vm1446, %v1651, %v1653
        %v1669 = vsel %vm1446, %v1653, %v1655
        %v1670 = vsel %vm1446, %v1657, %v1659
        %v1671 = vsel %vm1446, %v1659, %v1661
        %v1681 = vsel %vm1024, %v1612, 0
        %v1684 = vsel %vm596, %v1670, 0
        %v1687 = vsel %vm596, %v1671, 0
        %1689 = vmatprep.subr.bf16.mxu0 %v1663
        %1690 = vmatpush1.bf16.msra.mxu0 %v1662
        %1691 = vmatprep.subr.bf16.mxu0 %v1665
        %1692 = vmatpush1.bf16.msra.mxu0 %v1664
        %1693 = vmatprep.subr.bf16.mxu0 %v1667
        %1694 = vmatpush1.bf16.msra.mxu0 %v1666
        %1695 = vmatprep.subr.bf16.mxu0 %v1669
        %1696 = vmatpush1.bf16.msra.mxu0 %v1668
        %1697 = vmatprep.subr.bf16.mxu0 %v1687
        %1698 = vmatpush1.bf16.msra.mxu0 %v1684
        %1699 = vmatprep.subr.bf16.mxu0 0
        %1700 = vmatpush1.bf16.msra.mxu0 0
        %1701 = vmatprep.subr.bf16.mxu0 0
        %1702 = vmatpush1.bf16.msra.mxu0 0
        %1703 = vmatprep.subr.bf16.mxu0 0
        %1704 = vmatpush1.bf16.msra.mxu0 0
        %1705 = vmatprep.subr.bf16.mxu0 0
        %1706 = vmatpush1.bf16.msra.mxu0 0
        %1707 = vmatprep.subr.bf16.mxu0 0
        %1708 = vmatpush1.bf16.msra.mxu0 0
        %1709 = vmatprep.subr.bf16.mxu0 0
        %1710 = vmatpush1.bf16.msra.mxu0 0
        %1711 = vmatprep.subr.bf16.mxu0 0
        %1712 = vmatpush1.bf16.msra.mxu0 0
        %1713 = vmatprep.subr.bf16.mxu0 0
        %1714 = vmatpush1.bf16.msra.mxu0 0
        %1715 = vmatprep.subr.bf16.mxu0 0
        %1716 = vmatpush1.bf16.msra.mxu0 0
        %1717 = vmatprep.subr.bf16.mxu0 0
        %1718 = vmatpush1.bf16.msra.mxu0 0
        %1719 = vmatprep.subr.bf16.mxu0 0
        %1720 = vmatpush1.bf16.msra.mxu0 0
        %1721 = vmatprep.mubr.bf16.mxu0 0
        %1722 = vmatmul.mubr.bf16.gmra.mrb[0].mxu0 %v1681
        %v1723 = vpop.f32.mrb[0].mxu0
        %v1724 = vadd.f32 %v1618, %v1723
        %v1725 = vpop.f32.mrb[0].mxu0
        %v1726 = vadd.f32 %v1618, %v1725
        %v1727 = vpop.f32.mrb[0].mxu0
        %v1728 = vpop.f32.mrb[0].mxu0
        %1729 = vdwg.mxu0
        %v1730 = vmax.f32 %v1724, 0.0
        %v1731 = vmax.f32 %v1726, 0.0
        %v1732 = vpack.c.bf16 %v1730, %v1730
        %v1733 = vpack.c.bf16 %v1731, %v1731
        %1736 = vrot.lane.b32.xlu0 %v1732, 16
        %v1737 = vpop.permute.xlu0 %1736
        %1738 = vrot.lane.b32.xlu0 %v1733, 16
        %v1739 = vpop.permute.xlu0 %1738
        %v1740 = vsel %vm363, %v1737, %v1739
        %v1743 = vsel %vm366, 0, %v1737
        %v1746 = vsel %vm366, %v1739, 0
        %v1748 = vmul.bf16 %v1743, %v401
        %v1749 = vmul.bf16 %v1740, %v399
        %v1750 = vmul.bf16 %v1743, %v425
        %v1751 = vmul.bf16 %v1740, %v429
        %v1752 = vmul.bf16 %v1746, %v427
        %v1753 = vmul.bf16 %v1743, %v437
        %v1754 = vmul.bf16 %v1740, %v441
        %v1755 = vmul.bf16 %v1746, %v439
        %v1756 = vmul.bf16 %v1743, %v449
        %v1757 = vmul.bf16 %v1740, %v453
        %v1758 = vmul.bf16 %v1746, %v451
        %v1759 = vmul.bf16 %v1743, %v461
        %v1760 = vmul.bf16 %v1740, %v465
        %v1761 = vmul.bf16 %v1746, %v463
        %v1762 = vmul.bf16 %v1743, %v473
        %v1763 = vmul.bf16 %v1740, %v477
        %v1764 = vmul.bf16 %v1746, %v475
        %v1766 = vrot.slane %v1743, 4
        %v1767 = vrot.slane %v1740, 4
        %1768 = vrot.lane.b32.xlu0 %v1766, 127
        %v1769 = vpop.permute.xlu0 %1768
        %1770 = vrot.lane.b32.xlu0 %v1767, 127
        %v1771 = vpop.permute.xlu0 %1770
        %v1772 = vsel %vm400, %v1769, %v1771
        %1776 = vrot.lane.b32.xlu0 %v1750, 126
        %v1777 = vpop.permute.xlu0 %1776
        %1778 = vrot.lane.b32.xlu0 %v1751, 126
        %v1779 = vpop.permute.xlu0 %1778
        %1780 = vrot.lane.b32.xlu0 %v1752, 126
        %v1781 = vpop.permute.xlu0 %1780
        %v1782 = vsel %vm504, %v1777, %v1779
        %v1783 = vsel %vm504, %v1779, %v1781
        %v1787 = vrot.slane %v1753, 4
        %v1788 = vrot.slane %v1754, 4
        %v1789 = vrot.slane %v1755, 4
        %1790 = vrot.lane.b32.xlu0 %v1787, 112
        %v1791 = vpop.permute.xlu0 %1790
        %1792 = vrot.lane.b32.xlu0 %v1788, 112
        %v1793 = vpop.permute.xlu0 %1792
        %1794 = vrot.lane.b32.xlu0 %v1789, 112
        %v1795 = vpop.permute.xlu0 %1794
        %v1796 = vsel %vm519, %v1791, %v1793
        %v1797 = vsel %vm519, %v1793, %v1795
        %1799 = vrot.lane.b32.xlu0 %v1743, 111
        %v1800 = vpop.permute.xlu0 %1799
        %1801 = vrot.lane.b32.xlu0 %v1740, 111
        %v1802 = vpop.permute.xlu0 %1801
        %1803 = vrot.lane.b32.xlu0 %v1746, 111
        %v1804 = vpop.permute.xlu0 %1803
        %v1805 = vsel %vm529, %v1800, %v1802
        %v1806 = vsel %vm529, %v1802, %v1804
        %v1810 = vrot.slane %v1756, 4
        %v1811 = vrot.slane %v1757, 4
        %v1812 = vrot.slane %v1758, 4
        %1813 = vrot.lane.b32.xlu0 %v1810, 110
        %v1814 = vpop.permute.xlu0 %1813
        %1815 = vrot.lane.b32.xlu0 %v1811, 110
        %v1816 = vpop.permute.xlu0 %1815
        %1817 = vrot.lane.b32.xlu0 %v1812, 110
        %v1818 = vpop.permute.xlu0 %1817
        %v1819 = vsel %vm544, %v1814, %v1816
        %v1820 = vsel %vm544, %v1816, %v1818
        %1824 = vrot.lane.b32.xlu0 %v1759, 96
        %v1825 = vpop.permute.xlu0 %1824
        %1826 = vrot.lane.b32.xlu0 %v1760, 96
        %v1827 = vpop.permute.xlu0 %1826
        %1828 = vrot.lane.b32.xlu0 %v1761, 96
        %v1829 = vpop.permute.xlu0 %1828
        %v1830 = vsel %vm559, %v1825, %v1827
        %v1831 = vsel %vm559, %v1827, %v1829
        %v1832 = vrot.slane %v1746, 4
        %1833 = vrot.lane.b32.xlu0 %v1766, 95
        %v1834 = vpop.permute.xlu0 %1833
        %1835 = vrot.lane.b32.xlu0 %v1767, 95
        %v1836 = vpop.permute.xlu0 %1835
        %1837 = vrot.lane.b32.xlu0 %v1832, 95
        %v1838 = vpop.permute.xlu0 %1837
        %v1839 = vsel %vm571, %v1834, %v1836
        %v1840 = vsel %vm571, %v1836, %v1838
        %1844 = vrot.lane.b32.xlu0 %v1762, 94
        %v1845 = vpop.permute.xlu0 %1844
        %1846 = vrot.lane.b32.xlu0 %v1763, 94
        %v1847 = vpop.permute.xlu0 %1846
        %1848 = vrot.lane.b32.xlu0 %v1764, 94
        %v1849 = vpop.permute.xlu0 %1848
        %v1850 = vsel %vm583, %v1845, %v1847
        %v1851 = vsel %vm583, %v1847, %v1849
        %v1853 = vsel %vm596, %v405, %v1769
        %v1856 = vsel %vm596, %v1748, %v1772
        %v1859 = vsel %vm596, %v1749, %v1771
        %v1862 = vsel %vm596, %v1777, %v1791
        %v1865 = vsel %vm596, %v1782, %v1796
        %v1868 = vsel %vm596, %v1783, %v1797
        %v1871 = vsel %vm596, %v1800, %v1814
        %v1874 = vsel %vm596, %v1805, %v1819
        %v1877 = vsel %vm596, %v1806, %v1820
        %v1880 = vsel %vm596, %v1825, %v1834
        %v1883 = vsel %vm596, %v1830, %v1839
        %v1886 = vsel %vm596, %v1831, %v1840
        %s1887 = scalar_lea.vmem %s5, 4
        %v1888 = vld [vmem:[%s1887] sm:$0xf]
        %s1889 = scalar_lea.vmem %s6, 8
        %v1890 = vld [vmem:[%s1889] sm:$0xff]
        %1892 = vset.pattern.permute.xlu0 0
        %1893 = vperm.xlu0 %1892, %v1890
        %v1894 = vpop.permute.xlu0 %1893
        %1908 = vrot.lane.b32.xlu0 %v1853, 1
        %v1909 = vpop.permute.xlu0 %1908
        %1910 = vrot.lane.b32.xlu0 %v1856, 1
        %v1911 = vpop.permute.xlu0 %1910
        %1912 = vrot.lane.b32.xlu0 %v1859, 1
        %v1913 = vpop.permute.xlu0 %1912
        %1914 = vrot.lane.b32.xlu0 %v1862, 1
        %v1915 = vpop.permute.xlu0 %1914
        %1916 = vrot.lane.b32.xlu0 %v1865, 1
        %v1917 = vpop.permute.xlu0 %1916
        %1918 = vrot.lane.b32.xlu0 %v1868, 1
        %v1919 = vpop.permute.xlu0 %1918
        %1920 = vrot.lane.b32.xlu0 %v1871, 1
        %v1921 = vpop.permute.xlu0 %1920
        %1922 = vrot.lane.b32.xlu0 %v1874, 1
        %v1923 = vpop.permute.xlu0 %1922
        %1924 = vrot.lane.b32.xlu0 %v1877, 1
        %v1925 = vpop.permute.xlu0 %1924
        %1926 = vrot.lane.b32.xlu0 %v1880, 1
        %v1927 = vpop.permute.xlu0 %1926
        %1928 = vrot.lane.b32.xlu0 %v1883, 1
        %v1929 = vpop.permute.xlu0 %1928
        %1930 = vrot.lane.b32.xlu0 %v1886, 1
        %v1931 = vpop.permute.xlu0 %1930
        %1932 = vrot.lane.b32.xlu0 %v1845, 1
        %v1933 = vpop.permute.xlu0 %1932
        %1934 = vrot.lane.b32.xlu0 %v1850, 1
        %v1935 = vpop.permute.xlu0 %1934
        %1936 = vrot.lane.b32.xlu0 %v1851, 1
        %v1937 = vpop.permute.xlu0 %1936
        %v1938 = vsel %vm428, %v1909, %v1911
        %v1939 = vsel %vm428, %v1911, %v1913
        %v1940 = vsel %vm428, %v1915, %v1917
        %v1941 = vsel %vm428, %v1917, %v1919
        %v1942 = vsel %vm428, %v1921, %v1923
        %v1943 = vsel %vm428, %v1923, %v1925
        %v1944 = vsel %vm428, %v1927, %v1929
        %v1945 = vsel %vm428, %v1929, %v1931
        %v1946 = vsel %vm428, %v1933, %v1935
        %v1947 = vsel %vm428, %v1935, %v1937
        %v1957 = vsel %vm1024, %v1888, 0
        %v1960 = vsel %vm596, %v1946, 0
        %v1963 = vsel %vm596, %v1947, 0
        %1965 = vmatprep.subr.bf16.mxu0 %v1939
        %1966 = vmatpush1.bf16.msra.mxu0 %v1938
        %1967 = vmatprep.subr.bf16.mxu0 %v1941
        %1968 = vmatpush1.bf16.msra.mxu0 %v1940
        %1969 = vmatprep.subr.bf16.mxu0 %v1943
        %1970 = vmatpush1.bf16.msra.mxu0 %v1942
        %1971 = vmatprep.subr.bf16.mxu0 %v1945
        %1972 = vmatpush1.bf16.msra.mxu0 %v1944
        %1973 = vmatprep.subr.bf16.mxu0 %v1963
        %1974 = vmatpush1.bf16.msra.mxu0 %v1960
        %1975 = vmatprep.subr.bf16.mxu0 0
        %1976 = vmatpush1.bf16.msra.mxu0 0
        %1977 = vmatprep.subr.bf16.mxu0 0
        %1978 = vmatpush1.bf16.msra.mxu0 0
        %1979 = vmatprep.subr.bf16.mxu0 0
        %1980 = vmatpush1.bf16.msra.mxu0 0
        %1981 = vmatprep.subr.bf16.mxu0 0
        %1982 = vmatpush1.bf16.msra.mxu0 0
        %1983 = vmatprep.subr.bf16.mxu0 0
        %1984 = vmatpush1.bf16.msra.mxu0 0
        %1985 = vmatprep.subr.bf16.mxu0 0
        %1986 = vmatpush1.bf16.msra.mxu0 0
        %1987 = vmatprep.subr.bf16.mxu0 0
        %1988 = vmatpush1.bf16.msra.mxu0 0
        %1989 = vmatprep.subr.bf16.mxu0 0
        %1990 = vmatpush1.bf16.msra.mxu0 0
        %1991 = vmatprep.subr.bf16.mxu0 0
        %1992 = vmatpush1.bf16.msra.mxu0 0
        %1993 = vmatprep.subr.bf16.mxu0 0
        %1994 = vmatpush1.bf16.msra.mxu0 0
        %1995 = vmatprep.subr.bf16.mxu0 0
        %1996 = vmatpush1.bf16.msra.mxu0 0
        %1997 = vmatprep.mubr.bf16.mxu0 0
        %1998 = vmatmul.mubr.bf16.gmra.mrb[0].mxu0 %v1957
        %v1999 = vpop.f32.mrb[0].mxu0
        %v2000 = vadd.f32 %v1894, %v1999
        %v2001 = vpop.f32.mrb[0].mxu0
        %v2002 = vadd.f32 %v1894, %v2001
        %v2003 = vpop.f32.mrb[0].mxu0
        %v2004 = vpop.f32.mrb[0].mxu0
        %2005 = vdwg.mxu0
        %v2006 = vmax.f32 %v2000, 0.0
        %v2007 = vmax.f32 %v2002, 0.0
        %v2008 = vadd.f32 %v794, %v2006
        %v2009 = vadd.f32 %v795, %v2007
        %v2010 = vpack.c.bf16 %v2008, %v2008
        %v2011 = vpack.c.bf16 %v2009, %v2009
        %2014 = vrot.lane.b32.xlu0 %v2010, 16
        %v2015 = vpop.permute.xlu0 %2014
        %2016 = vrot.lane.b32.xlu0 %v2011, 16
        %v2017 = vpop.permute.xlu0 %2016
        %v2018 = vsel %vm363, %v2015, %v2017
        %v2021 = vsel %vm366, 0, %v2015
        %v2024 = vsel %vm366, %v2017, 0
        %v2026 = vld [vmem:[%s8] sm:$0x44]
        %v2028 = vunpack.c.l.b16 %v2026
        %v2029 = vunpack.c.h.b16 %v2026
        %v2030 = vpack.c.b16 %v2028, %v2028
        %v2031 = vpack.c.b16 %v2029, %v2029
        %v2033 = vpack.i.b16 %v2030, %v2030
        %v2035 = vlaneseq
        %v2036 = vshrl.u32 %v2035, 7
        %v2037 = vsub.s32 2, %v2036
        %v2038 = vrot.slane %v2033, %v2037
        %v2040 = vpack.i.b16 %v2031, %v2031
        %v2042 = vlaneseq
        %v2043 = vshrl.u32 %v2042, 7
        %v2044 = vsub.s32 2, %v2043
        %v2045 = vrot.slane %v2040, %v2044
        %2048 = vrot.lane.b32.xlu0 %v2038, 76
        %v2049 = vpop.permute.xlu0 %2048
        %2050 = vrot.lane.b32.xlu0 %v2045, 76
        %v2051 = vpop.permute.xlu0 %2050
        %vm2052 = vcmask 621568
        %v2053 = vsel %vm2052, %v2049, %v2051
        %v2057 = vmul.bf16 %v2049, 0
        %v2058 = vmul.bf16 %v2021, %v2053
        %v2059 = vmul.bf16 %v2018, %v2051
        %v2060 = vshrl.u32 %v2030, 16
        %v2061 = vpack.i.b16 %v2060, %v2060
        %v2063 = vlaneseq
        %v2064 = vshrl.u32 %v2063, 7
        %v2065 = vsub.s32 2, %v2064
        %v2066 = vrot.slane %v2061, %v2065
        %v2067 = vshrl.u32 %v2031, 16
        %v2068 = vpack.i.b16 %v2067, %v2067
        %v2070 = vlaneseq
        %v2071 = vshrl.u32 %v2070, 7
        %v2072 = vsub.s32 2, %v2071
        %v2073 = vrot.slane %v2068, %v2072
        %2076 = vrot.lane.b32.xlu0 %v2066, 84
        %v2077 = vpop.permute.xlu0 %2076
        %2078 = vrot.lane.b32.xlu0 %v2073, 84
        %v2079 = vpop.permute.xlu0 %2078
        %vm2080 = vcmask 687104
        %v2081 = vsel %vm2080, %v2077, %v2079
        %v2085 = vmul.bf16 %v2077, 0
        %v2086 = vmul.bf16 %v2021, %v2081
        %v2087 = vmul.bf16 %v2018, %v2079
        %2088 = vrot.lane.b32.xlu0 %v2038, 12
        %v2089 = vpop.permute.xlu0 %2088
        %2090 = vrot.lane.b32.xlu0 %v2045, 12
        %v2091 = vpop.permute.xlu0 %2090
        %vm2092 = vcmask 97280
        %v2093 = vsel %vm2092, %v2089, %v2091
        %v2097 = vmul.bf16 %v2021, %v2089
        %v2098 = vmul.bf16 %v2018, %v2093
        %v2099 = vmul.bf16 %v2024, %v2091
        %2100 = vrot.lane.b32.xlu0 %v2066, 20
        %v2101 = vpop.permute.xlu0 %2100
        %2102 = vrot.lane.b32.xlu0 %v2073, 20
        %v2103 = vpop.permute.xlu0 %2102
        %vm2104 = vcmask 162816
        %v2105 = vsel %vm2104, %v2101, %v2103
        %v2109 = vmul.bf16 %v2021, %v2101
        %v2110 = vmul.bf16 %v2018, %v2105
        %v2111 = vmul.bf16 %v2024, %v2103
        %v2112 = vmul.bf16 %v2021, %v2049
        %v2113 = vmul.bf16 %v2018, %v2053
        %v2114 = vmul.bf16 %v2024, %v2051
        %v2115 = vmul.bf16 %v2021, %v2077
        %v2116 = vmul.bf16 %v2018, %v2081
        %v2117 = vmul.bf16 %v2024, %v2079
        %v2119 = vrot.slane %v2021, 4
        %v2120 = vrot.slane %v2018, 4
        %2121 = vrot.lane.b32.xlu0 %v1480, 124
        %v2122 = vpop.permute.xlu0 %2121
        %2123 = vrot.lane.b32.xlu0 %v2119, 124
        %v2124 = vpop.permute.xlu0 %2123
        %2125 = vrot.lane.b32.xlu0 %v2120, 124
        %v2126 = vpop.permute.xlu0 %2125
        %v2127 = vsel %vm1500, %v2122, %v2124
        %v2128 = vsel %vm1500, %v2124, %v2126
        %2132 = vrot.lane.b32.xlu0 %v2085, 120
        %v2133 = vpop.permute.xlu0 %2132
        %2134 = vrot.lane.b32.xlu0 %v2086, 120
        %v2135 = vpop.permute.xlu0 %2134
        %2136 = vrot.lane.b32.xlu0 %v2087, 120
        %v2137 = vpop.permute.xlu0 %2136
        %vm2138 = vcmask 982016
        %v2139 = vsel %vm2138, %v2133, %v2135
        %v2140 = vsel %vm2138, %v2135, %v2137
        %v2144 = vrot.slane %v2097, 4
        %v2145 = vrot.slane %v2098, 4
        %v2146 = vrot.slane %v2099, 4
        %2147 = vrot.lane.b32.xlu0 %v2144, 64
        %v2148 = vpop.permute.xlu0 %2147
        %2149 = vrot.lane.b32.xlu0 %v2145, 64
        %v2150 = vpop.permute.xlu0 %2149
        %2151 = vrot.lane.b32.xlu0 %v2146, 64
        %v2152 = vpop.permute.xlu0 %2151
        %v2153 = vsel %vm1550, %v2148, %v2150
        %v2154 = vsel %vm1550, %v2150, %v2152
        %2156 = vrot.lane.b32.xlu0 %v2021, 60
        %v2157 = vpop.permute.xlu0 %2156
        %2158 = vrot.lane.b32.xlu0 %v2018, 60
        %v2159 = vpop.permute.xlu0 %2158
        %2160 = vrot.lane.b32.xlu0 %v2024, 60
        %v2161 = vpop.permute.xlu0 %2160
        %v2162 = vsel %vm1572, %v2157, %v2159
        %v2163 = vsel %vm1572, %v2159, %v2161
        %v2167 = vrot.slane %v2109, 4
        %v2168 = vrot.slane %v2110, 4
        %v2169 = vrot.slane %v2111, 4
        %2170 = vrot.lane.b32.xlu0 %v2167, 56
        %v2171 = vpop.permute.xlu0 %2170
        %2172 = vrot.lane.b32.xlu0 %v2168, 56
        %v2173 = vpop.permute.xlu0 %2172
        %2174 = vrot.lane.b32.xlu0 %v2169, 56
        %v2175 = vpop.permute.xlu0 %2174
        %vm2176 = vcmask 457728
        %v2177 = vsel %vm2176, %v2171, %v2173
        %v2178 = vsel %vm2176, %v2173, %v2175
        %v2179 = vrot.slane %v2024, 4
        %2180 = vrot.lane.b32.xlu0 %v2179, 124
        %v2181 = vpop.permute.xlu0 %2180
        %v2182 = vsel %vm1500, %v2126, %v2181
        %2186 = vrot.lane.b32.xlu0 %v2115, 120
        %v2187 = vpop.permute.xlu0 %2186
        %2188 = vrot.lane.b32.xlu0 %v2116, 120
        %v2189 = vpop.permute.xlu0 %2188
        %2190 = vrot.lane.b32.xlu0 %v2117, 120
        %v2191 = vpop.permute.xlu0 %2190
        %v2192 = vsel %vm2138, %v2187, %v2189
        %v2193 = vsel %vm2138, %v2189, %v2191
        %v2196 = vsel %vm596, %v2057, %v2127
        %v2199 = vsel %vm596, %v2058, %v2128
        %v2202 = vsel %vm596, %v2059, %v2126
        %v2205 = vsel %vm596, %v2139, %v2148
        %v2208 = vsel %vm596, %v2140, %v2153
        %v2211 = vsel %vm596, %v2137, %v2154
        %v2214 = vsel %vm596, %v2157, %v2171
        %v2217 = vsel %vm596, %v2162, %v2177
        %v2220 = vsel %vm596, %v2163, %v2178
        %v2222 = vsel %vm596, %v2112, %v2128
        %v2225 = vsel %vm596, %v2113, %v2182
        %v2228 = vsel %vm596, %v2114, %v2181
        %s2229 = scalar_lea.vmem %s3, 8
        %v2230 = vld [vmem:[%s2229] sm:$0xf]
        %s2231 = scalar_lea.vmem %s4, 16
        %v2232 = vld [vmem:[%s2231] sm:$0xff]
        %2234 = vset.pattern.permute.xlu0 0
        %2235 = vperm.xlu0 %2234, %v2232
        %v2236 = vpop.permute.xlu0 %2235
        %2250 = vrot.lane.b32.xlu0 %v2196, 52
        %v2251 = vpop.permute.xlu0 %2250
        %2252 = vrot.lane.b32.xlu0 %v2199, 52
        %v2253 = vpop.permute.xlu0 %2252
        %2254 = vrot.lane.b32.xlu0 %v2202, 52
        %v2255 = vpop.permute.xlu0 %2254
        %2256 = vrot.lane.b32.xlu0 %v2205, 52
        %v2257 = vpop.permute.xlu0 %2256
        %2258 = vrot.lane.b32.xlu0 %v2208, 52
        %v2259 = vpop.permute.xlu0 %2258
        %2260 = vrot.lane.b32.xlu0 %v2211, 52
        %v2261 = vpop.permute.xlu0 %2260
        %2262 = vrot.lane.b32.xlu0 %v2214, 52
        %v2263 = vpop.permute.xlu0 %2262
        %2264 = vrot.lane.b32.xlu0 %v2217, 52
        %v2265 = vpop.permute.xlu0 %2264
        %2266 = vrot.lane.b32.xlu0 %v2220, 52
        %v2267 = vpop.permute.xlu0 %2266
        %2268 = vrot.lane.b32.xlu0 %v2222, 52
        %v2269 = vpop.permute.xlu0 %2268
        %2270 = vrot.lane.b32.xlu0 %v2225, 52
        %v2271 = vpop.permute.xlu0 %2270
        %2272 = vrot.lane.b32.xlu0 %v2228, 52
        %v2273 = vpop.permute.xlu0 %2272
        %2274 = vrot.lane.b32.xlu0 %v2192, 52
        %v2275 = vpop.permute.xlu0 %2274
        %2276 = vrot.lane.b32.xlu0 %v2193, 52
        %v2277 = vpop.permute.xlu0 %2276
        %2278 = vrot.lane.b32.xlu0 %v2191, 52
        %v2279 = vpop.permute.xlu0 %2278
        %vm2280 = vcmask 424960
        %v2281 = vsel %vm2280, %v2251, %v2253
        %v2282 = vsel %vm2280, %v2253, %v2255
        %v2283 = vsel %vm2280, %v2257, %v2259
        %v2284 = vsel %vm2280, %v2259, %v2261
        %v2285 = vsel %vm2280, %v2263, %v2265
        %v2286 = vsel %vm2280, %v2265, %v2267
        %v2287 = vsel %vm2280, %v2269, %v2271
        %v2288 = vsel %vm2280, %v2271, %v2273
        %v2289 = vsel %vm2280, %v2275, %v2277
        %v2290 = vsel %vm2280, %v2277, %v2279
        %v2300 = vsel %vm1024, %v2230, 0
        %v2303 = vsel %vm596, %v2289, 0
        %v2306 = vsel %vm596, %v2290, 0
        %2308 = vmatprep.subr.bf16.mxu0 %v2282
        %2309 = vmatpush1.bf16.msra.mxu0 %v2281
        %2310 = vmatprep.subr.bf16.mxu0 %v2284
        %2311 = vmatpush1.bf16.msra.mxu0 %v2283
        %2312 = vmatprep.subr.bf16.mxu0 %v2286
        %2313 = vmatpush1.bf16.msra.mxu0 %v2285
        %2314 = vmatprep.subr.bf16.mxu0 %v2288
        %2315 = vmatpush1.bf16.msra.mxu0 %v2287
        %2316 = vmatprep.subr.bf16.mxu0 %v2306
        %2317 = vmatpush1.bf16.msra.mxu0 %v2303
        %2318 = vmatprep.subr.bf16.mxu0 0
        %2319 = vmatpush1.bf16.msra.mxu0 0
        %2320 = vmatprep.subr.bf16.mxu0 0
        %2321 = vmatpush1.bf16.msra.mxu0 0
        %2322 = vmatprep.subr.bf16.mxu0 0
        %2323 = vmatpush1.bf16.msra.mxu0 0
        %2324 = vmatprep.subr.bf16.mxu0 0
        %2325 = vmatpush1.bf16.msra.mxu0 0
        %2326 = vmatprep.subr.bf16.mxu0 0
        %2327 = vmatpush1.bf16.msra.mxu0 0
        %2328 = vmatprep.subr.bf16.mxu0 0
        %2329 = vmatpush1.bf16.msra.mxu0 0
        %2330 = vmatprep.subr.bf16.mxu0 0
        %2331 = vmatpush1.bf16.msra.mxu0 0
        %2332 = vmatprep.subr.bf16.mxu0 0
        %2333 = vmatpush1.bf16.msra.mxu0 0
        %2334 = vmatprep.subr.bf16.mxu0 0
        %2335 = vmatpush1.bf16.msra.mxu0 0
        %2336 = vmatprep.subr.bf16.mxu0 0
        %2337 = vmatpush1.bf16.msra.mxu0 0
        %2338 = vmatprep.subr.bf16.mxu0 0
        %2339 = vmatpush1.bf16.msra.mxu0 0
        %2340 = vmatprep.mubr.bf16.mxu0 0
        %2341 = vmatmul.mubr.bf16.gmra.mrb[0].mxu0 %v2300
        %v2342 = vpop.f32.mrb[0].mxu0
        %v2343 = vadd.f32 %v2236, %v2342
        %v2344 = vpop.f32.mrb[0].mxu0
        %v2345 = vadd.f32 %v2236, %v2344
        %v2346 = vpop.f32.mrb[0].mxu0
        %v2347 = vpop.f32.mrb[0].mxu0
        %2348 = vdwg.mxu0
        %v2349 = vmax.f32 %v2343, 0.0
        %v2350 = vmax.f32 %v2345, 0.0
        %v2351 = vpack.c.bf16 %v2349, %v2349
        %v2352 = vpack.c.bf16 %v2350, %v2350
        %2355 = vrot.lane.b32.xlu0 %v2351, 16
        %v2356 = vpop.permute.xlu0 %2355
        %2357 = vrot.lane.b32.xlu0 %v2352, 16
        %v2358 = vpop.permute.xlu0 %2357
        %v2359 = vsel %vm363, %v2356, %v2358
        %v2362 = vsel %vm366, 0, %v2356
        %v2365 = vsel %vm366, %v2358, 0
        %v2367 = vmul.bf16 %v2362, %v401
        %v2368 = vmul.bf16 %v2359, %v399
        %v2369 = vmul.bf16 %v2362, %v425
        %v2370 = vmul.bf16 %v2359, %v429
        %v2371 = vmul.bf16 %v2365, %v427
        %v2372 = vmul.bf16 %v2362, %v437
        %v2373 = vmul.bf16 %v2359, %v441
        %v2374 = vmul.bf16 %v2365, %v439
        %v2375 = vmul.bf16 %v2362, %v449
        %v2376 = vmul.bf16 %v2359, %v453
        %v2377 = vmul.bf16 %v2365, %v451
        %v2378 = vmul.bf16 %v2362, %v461
        %v2379 = vmul.bf16 %v2359, %v465
        %v2380 = vmul.bf16 %v2365, %v463
        %v2381 = vmul.bf16 %v2362, %v473
        %v2382 = vmul.bf16 %v2359, %v477
        %v2383 = vmul.bf16 %v2365, %v475
        %v2385 = vrot.slane %v2362, 4
        %v2386 = vrot.slane %v2359, 4
        %2387 = vrot.lane.b32.xlu0 %v2385, 127
        %v2388 = vpop.permute.xlu0 %2387
        %2389 = vrot.lane.b32.xlu0 %v2386, 127
        %v2390 = vpop.permute.xlu0 %2389
        %v2391 = vsel %vm400, %v2388, %v2390
        %2395 = vrot.lane.b32.xlu0 %v2369, 126
        %v2396 = vpop.permute.xlu0 %2395
        %2397 = vrot.lane.b32.xlu0 %v2370, 126
        %v2398 = vpop.permute.xlu0 %2397
        %2399 = vrot.lane.b32.xlu0 %v2371, 126
        %v2400 = vpop.permute.xlu0 %2399
        %v2401 = vsel %vm504, %v2396, %v2398
        %v2402 = vsel %vm504, %v2398, %v2400
        %v2406 = vrot.slane %v2372, 4
        %v2407 = vrot.slane %v2373, 4
        %v2408 = vrot.slane %v2374, 4
        %2409 = vrot.lane.b32.xlu0 %v2406, 112
        %v2410 = vpop.permute.xlu0 %2409
        %2411 = vrot.lane.b32.xlu0 %v2407, 112
        %v2412 = vpop.permute.xlu0 %2411
        %2413 = vrot.lane.b32.xlu0 %v2408, 112
        %v2414 = vpop.permute.xlu0 %2413
        %v2415 = vsel %vm519, %v2410, %v2412
        %v2416 = vsel %vm519, %v2412, %v2414
        %2418 = vrot.lane.b32.xlu0 %v2362, 111
        %v2419 = vpop.permute.xlu0 %2418
        %2420 = vrot.lane.b32.xlu0 %v2359, 111
        %v2421 = vpop.permute.xlu0 %2420
        %2422 = vrot.lane.b32.xlu0 %v2365, 111
        %v2423 = vpop.permute.xlu0 %2422
        %v2424 = vsel %vm529, %v2419, %v2421
        %v2425 = vsel %vm529, %v2421, %v2423
        %v2429 = vrot.slane %v2375, 4
        %v2430 = vrot.slane %v2376, 4
        %v2431 = vrot.slane %v2377, 4
        %2432 = vrot.lane.b32.xlu0 %v2429, 110
        %v2433 = vpop.permute.xlu0 %2432
        %2434 = vrot.lane.b32.xlu0 %v2430, 110
        %v2435 = vpop.permute.xlu0 %2434
        %2436 = vrot.lane.b32.xlu0 %v2431, 110
        %v2437 = vpop.permute.xlu0 %2436
        %v2438 = vsel %vm544, %v2433, %v2435
        %v2439 = vsel %vm544, %v2435, %v2437
        %2443 = vrot.lane.b32.xlu0 %v2378, 96
        %v2444 = vpop.permute.xlu0 %2443
        %2445 = vrot.lane.b32.xlu0 %v2379, 96
        %v2446 = vpop.permute.xlu0 %2445
        %2447 = vrot.lane.b32.xlu0 %v2380, 96
        %v2448 = vpop.permute.xlu0 %2447
        %v2449 = vsel %vm559, %v2444, %v2446
        %v2450 = vsel %vm559, %v2446, %v2448
        %v2451 = vrot.slane %v2365, 4
        %2452 = vrot.lane.b32.xlu0 %v2385, 95
        %v2453 = vpop.permute.xlu0 %2452
        %2454 = vrot.lane.b32.xlu0 %v2386, 95
        %v2455 = vpop.permute.xlu0 %2454
        %2456 = vrot.lane.b32.xlu0 %v2451, 95
        %v2457 = vpop.permute.xlu0 %2456
        %v2458 = vsel %vm571, %v2453, %v2455
        %v2459 = vsel %vm571, %v2455, %v2457
        %2463 = vrot.lane.b32.xlu0 %v2381, 94
        %v2464 = vpop.permute.xlu0 %2463
        %2465 = vrot.lane.b32.xlu0 %v2382, 94
        %v2466 = vpop.permute.xlu0 %2465
        %2467 = vrot.lane.b32.xlu0 %v2383, 94
        %v2468 = vpop.permute.xlu0 %2467
        %v2469 = vsel %vm583, %v2464, %v2466
        %v2470 = vsel %vm583, %v2466, %v2468
        %v2472 = vsel %vm596, %v405, %v2388
        %v2475 = vsel %vm596, %v2367, %v2391
        %v2478 = vsel %vm596, %v2368, %v2390
        %v2481 = vsel %vm596, %v2396, %v2410
        %v2484 = vsel %vm596, %v2401, %v2415
        %v2487 = vsel %vm596, %v2402, %v2416
        %v2490 = vsel %vm596, %v2419, %v2433
        %v2493 = vsel %vm596, %v2424, %v2438
        %v2496 = vsel %vm596, %v2425, %v2439
        %v2499 = vsel %vm596, %v2444, %v2453
        %v2502 = vsel %vm596, %v2449, %v2458
        %v2505 = vsel %vm596, %v2450, %v2459
        %s2506 = scalar_lea.vmem %s5, 8
        %v2507 = vld [vmem:[%s2506] sm:$0xf]
        %s2508 = scalar_lea.vmem %s6, 16
        %v2509 = vld [vmem:[%s2508] sm:$0xff]
        %2511 = vset.pattern.permute.xlu0 0
        %2512 = vperm.xlu0 %2511, %v2509
        %v2513 = vpop.permute.xlu0 %2512
        %2527 = vrot.lane.b32.xlu0 %v2472, 1
        %v2528 = vpop.permute.xlu0 %2527
        %2529 = vrot.lane.b32.xlu0 %v2475, 1
        %v2530 = vpop.permute.xlu0 %2529
        %2531 = vrot.lane.b32.xlu0 %v2478, 1
        %v2532 = vpop.permute.xlu0 %2531
        %2533 = vrot.lane.b32.xlu0 %v2481, 1
        %v2534 = vpop.permute.xlu0 %2533
        %2535 = vrot.lane.b32.xlu0 %v2484, 1
        %v2536 = vpop.permute.xlu0 %2535
        %2537 = vrot.lane.b32.xlu0 %v2487, 1
        %v2538 = vpop.permute.xlu0 %2537
        %2539 = vrot.lane.b32.xlu0 %v2490, 1
        %v2540 = vpop.permute.xlu0 %2539
        %2541 = vrot.lane.b32.xlu0 %v2493, 1
        %v2542 = vpop.permute.xlu0 %2541
        %2543 = vrot.lane.b32.xlu0 %v2496, 1
        %v2544 = vpop.permute.xlu0 %2543
        %2545 = vrot.lane.b32.xlu0 %v2499, 1
        %v2546 = vpop.permute.xlu0 %2545
        %2547 = vrot.lane.b32.xlu0 %v2502, 1
        %v2548 = vpop.permute.xlu0 %2547
        %2549 = vrot.lane.b32.xlu0 %v2505, 1
        %v2550 = vpop.permute.xlu0 %2549
        %2551 = vrot.lane.b32.xlu0 %v2464, 1
        %v2552 = vpop.permute.xlu0 %2551
        %2553 = vrot.lane.b32.xlu0 %v2469, 1
        %v2554 = vpop.permute.xlu0 %2553
        %2555 = vrot.lane.b32.xlu0 %v2470, 1
        %v2556 = vpop.permute.xlu0 %2555
        %v2557 = vsel %vm428, %v2528, %v2530
        %v2558 = vsel %vm428, %v2530, %v2532
        %v2559 = vsel %vm428, %v2534, %v2536
        %v2560 = vsel %vm428, %v2536, %v2538
        %v2561 = vsel %vm428, %v2540, %v2542
        %v2562 = vsel %vm428, %v2542, %v2544
        %v2563 = vsel %vm428, %v2546, %v2548
        %v2564 = vsel %vm428, %v2548, %v2550
        %v2565 = vsel %vm428, %v2552, %v2554
        %v2566 = vsel %vm428, %v2554, %v2556
        %v2576 = vsel %vm1024, %v2507, 0
        %v2579 = vsel %vm596, %v2565, 0
        %v2582 = vsel %vm596, %v2566, 0
        %2584 = vmatprep.subr.bf16.mxu0 %v2558
        %2585 = vmatpush1.bf16.msra.mxu0 %v2557
        %2586 = vmatprep.subr.bf16.mxu0 %v2560
        %2587 = vmatpush1.bf16.msra.mxu0 %v2559
        %2588 = vmatprep.subr.bf16.mxu0 %v2562
        %2589 = vmatpush1.bf16.msra.mxu0 %v2561
        %2590 = vmatprep.subr.bf16.mxu0 %v2564
        %2591 = vmatpush1.bf16.msra.mxu0 %v2563
        %2592 = vmatprep.subr.bf16.mxu0 %v2582
        %2593 = vmatpush1.bf16.msra.mxu0 %v2579
        %2594 = vmatprep.subr.bf16.mxu0 0
        %2595 = vmatpush1.bf16.msra.mxu0 0
        %2596 = vmatprep.subr.bf16.mxu0 0
        %2597 = vmatpush1.bf16.msra.mxu0 0
        %2598 = vmatprep.subr.bf16.mxu0 0
        %2599 = vmatpush1.bf16.msra.mxu0 0
        %2600 = vmatprep.subr.bf16.mxu0 0
        %2601 = vmatpush1.bf16.msra.mxu0 0
        %2602 = vmatprep.subr.bf16.mxu0 0
        %2603 = vmatpush1.bf16.msra.mxu0 0
        %2604 = vmatprep.subr.bf16.mxu0 0
        %2605 = vmatpush1.bf16.msra.mxu0 0
        %2606 = vmatprep.subr.bf16.mxu0 0
        %2607 = vmatpush1.bf16.msra.mxu0 0
        %2608 = vmatprep.subr.bf16.mxu0 0
        %2609 = vmatpush1.bf16.msra.mxu0 0
        %2610 = vmatprep.subr.bf16.mxu0 0
        %2611 = vmatpush1.bf16.msra.mxu0 0
        %2612 = vmatprep.subr.bf16.mxu0 0
        %2613 = vmatpush1.bf16.msra.mxu0 0
        %2614 = vmatprep.subr.bf16.mxu0 0
        %2615 = vmatpush1.bf16.msra.mxu0 0
        %2616 = vmatprep.mubr.bf16.mxu0 0
        %2617 = vmatmul.mubr.bf16.gmra.mrb[0].mxu0 %v2576
        %v2618 = vpop.f32.mrb[0].mxu0
        %v2619 = vadd.f32 %v2513, %v2618
        %v2620 = vpop.f32.mrb[0].mxu0
        %v2621 = vadd.f32 %v2513, %v2620
        %v2622 = vpop.f32.mrb[0].mxu0
        %v2623 = vpop.f32.mrb[0].mxu0
        %2624 = vdwg.mxu0
        %v2625 = vmax.f32 %v2619, 0.0
        %v2626 = vmax.f32 %v2621, 0.0
        %v2627 = vadd.f32 %v796, %v2625
        %v2628 = vadd.f32 %v797, %v2626
        %v2629 = vpack.c.bf16 %v2627, %v2627
        %v2630 = vpack.c.bf16 %v2628, %v2628
        %2633 = vrot.lane.b32.xlu0 %v2629, 16
        %v2634 = vpop.permute.xlu0 %2633
        %2635 = vrot.lane.b32.xlu0 %v2630, 16
        %v2636 = vpop.permute.xlu0 %2635
        %v2637 = vsel %vm363, %v2634, %v2636
        %v2640 = vsel %vm366, 0, %v2634
        %v2643 = vsel %vm366, %v2636, 0
        %v2645 = vld [vmem:[%s8] sm:$0x88]
        %v2647 = vunpack.c.l.b16 %v2645
        %v2648 = vunpack.c.h.b16 %v2645
        %v2649 = vpack.c.b16 %v2647, %v2647
        %v2650 = vpack.c.b16 %v2648, %v2648
        %v2652 = vpack.i.b16 %v2649, %v2649
        %v2654 = vlaneseq
        %v2655 = vshrl.u32 %v2654, 7
        %v2656 = vsub.s32 3, %v2655
        %v2657 = vrot.slane %v2652, %v2656
        %v2659 = vpack.i.b16 %v2650, %v2650
        %v2661 = vlaneseq
        %v2662 = vshrl.u32 %v2661, 7
        %v2663 = vsub.s32 3, %v2662
        %v2664 = vrot.slane %v2659, %v2663
        %2667 = vrot.lane.b32.xlu0 %v2657, 8
        %v2668 = vpop.permute.xlu0 %2667
        %2669 = vrot.lane.b32.xlu0 %v2664, 8
        %v2670 = vpop.permute.xlu0 %2669
        %vm2671 = vcmask 64512
        %v2672 = vsel %vm2671, %v2668, %v2670
        %v2676 = vmul.bf16 %v2668, 0
        %v2677 = vmul.bf16 %v2640, %v2672
        %v2678 = vmul.bf16 %v2637, %v2670
        %v2679 = vshrl.u32 %v2649, 16
        %v2680 = vpack.i.b16 %v2679, %v2679
        %v2682 = vlaneseq
        %v2683 = vshrl.u32 %v2682, 7
        %v2684 = vsub.s32 3, %v2683
        %v2685 = vrot.slane %v2680, %v2684
        %v2686 = vshrl.u32 %v2650, 16
        %v2687 = vpack.i.b16 %v2686, %v2686
        %v2689 = vlaneseq
        %v2690 = vshrl.u32 %v2689, 7
        %v2691 = vsub.s32 3, %v2690
        %v2692 = vrot.slane %v2687, %v2691
        %2695 = vrot.lane.b32.xlu0 %v2685, 24
        %v2696 = vpop.permute.xlu0 %2695
        %2697 = vrot.lane.b32.xlu0 %v2692, 24
        %v2698 = vpop.permute.xlu0 %2697
        %vm2699 = vcmask 195584
        %v2700 = vsel %vm2699, %v2696, %v2698
        %v2704 = vmul.bf16 %v2696, 0
        %v2705 = vmul.bf16 %v2640, %v2700
        %v2706 = vmul.bf16 %v2637, %v2698
        %v2707 = vmul.bf16 %v2640, %v2668
        %v2708 = vmul.bf16 %v2637, %v2672
        %v2709 = vmul.bf16 %v2643, %v2670
        %v2710 = vmul.bf16 %v2640, %v2696
        %v2711 = vmul.bf16 %v2637, %v2700
        %v2712 = vmul.bf16 %v2643, %v2698
        %v2713 = vmul.bf16 %v2637, %v2668
        %v2714 = vmul.bf16 %v2643, %v2672
        %v2715 = vmul.bf16 %v2670, 0
        %v2716 = vmul.bf16 %v2637, %v2696
        %v2717 = vmul.bf16 %v2643, %v2700
        %v2718 = vmul.bf16 %v2698, 0
        %v2720 = vrot.slane %v2640, 4
        %v2721 = vrot.slane %v2637, 4
        %2722 = vrot.lane.b32.xlu0 %v1480, 120
        %v2723 = vpop.permute.xlu0 %2722
        %2724 = vrot.lane.b32.xlu0 %v2720, 120
        %v2725 = vpop.permute.xlu0 %2724
        %2726 = vrot.lane.b32.xlu0 %v2721, 120
        %v2727 = vpop.permute.xlu0 %2726
        %v2728 = vsel %vm2138, %v2723, %v2725
        %v2729 = vsel %vm2138, %v2725, %v2727
        %2733 = vrot.lane.b32.xlu0 %v2704, 112
        %v2734 = vpop.permute.xlu0 %2733
        %2735 = vrot.lane.b32.xlu0 %v2705, 112
        %v2736 = vpop.permute.xlu0 %2735
        %2737 = vrot.lane.b32.xlu0 %v2706, 112
        %v2738 = vpop.permute.xlu0 %2737
        %v2739 = vsel %vm519, %v2734, %v2736
        %v2740 = vsel %vm519, %v2736, %v2738
        %v2744 = vrot.slane %v2707, 4
        %v2745 = vrot.slane %v2708, 4
        %v2746 = vrot.slane %v2709, 4
        %2748 = vrot.lane.b32.xlu0 %v2640, 120
        %v2749 = vpop.permute.xlu0 %2748
        %2750 = vrot.lane.b32.xlu0 %v2637, 120
        %v2751 = vpop.permute.xlu0 %2750
        %2752 = vrot.lane.b32.xlu0 %v2643, 120
        %v2753 = vpop.permute.xlu0 %2752
        %v2754 = vsel %vm2138, %v2749, %v2751
        %v2755 = vsel %vm2138, %v2751, %v2753
        %v2759 = vrot.slane %v2710, 4
        %v2760 = vrot.slane %v2711, 4
        %v2761 = vrot.slane %v2712, 4
        %2762 = vrot.lane.b32.xlu0 %v2759, 112
        %v2763 = vpop.permute.xlu0 %2762
        %2764 = vrot.lane.b32.xlu0 %v2760, 112
        %v2765 = vpop.permute.xlu0 %2764
        %2766 = vrot.lane.b32.xlu0 %v2761, 112
        %v2767 = vpop.permute.xlu0 %2766
        %v2768 = vsel %vm519, %v2763, %v2765
        %v2769 = vsel %vm519, %v2765, %v2767
        %v2770 = vrot.slane %v2643, 4
        %2771 = vrot.lane.b32.xlu0 %v2770, 120
        %v2772 = vpop.permute.xlu0 %2771
        %v2773 = vsel %vm2138, %v2727, %v2772
        %v2774 = vsel %vm2138, %v2772, %v2723
        %2778 = vrot.lane.b32.xlu0 %v2716, 112
        %v2779 = vpop.permute.xlu0 %2778
        %2780 = vrot.lane.b32.xlu0 %v2717, 112
        %v2781 = vpop.permute.xlu0 %2780
        %2782 = vrot.lane.b32.xlu0 %v2718, 112
        %v2783 = vpop.permute.xlu0 %2782
        %v2784 = vsel %vm519, %v2779, %v2781
        %v2785 = vsel %vm519, %v2781, %v2783
        %v2788 = vsel %vm596, %v2676, %v2728
        %v2791 = vsel %vm596, %v2677, %v2729
        %v2794 = vsel %vm596, %v2678, %v2727
        %v2797 = vsel %vm596, %v2739, %v2744
        %v2800 = vsel %vm596, %v2740, %v2745
        %v2803 = vsel %vm596, %v2738, %v2746
        %v2806 = vsel %vm596, %v2754, %v2768
        %v2809 = vsel %vm596, %v2755, %v2769
        %v2812 = vsel %vm596, %v2753, %v2767
        %v2815 = vsel %vm596, %v2713, %v2773
        %v2818 = vsel %vm596, %v2714, %v2774
        %v2821 = vsel %vm596, %v2715, %v2723
        %s2822 = scalar_lea.vmem %s3, 12
        %v2823 = vld [vmem:[%s2822] sm:$0xf]
        %s2824 = scalar_lea.vmem %s4, 24
        %v2825 = vld [vmem:[%s2824] sm:$0xff]
        %2827 = vset.pattern.permute.xlu0 0
        %2828 = vperm.xlu0 %2827, %v2825
        %v2829 = vpop.permute.xlu0 %2828
        %2843 = vrot.lane.b32.xlu0 %v2788, 120
        %v2844 = vpop.permute.xlu0 %2843
        %2845 = vrot.lane.b32.xlu0 %v2791, 120
        %v2846 = vpop.permute.xlu0 %2845
        %2847 = vrot.lane.b32.xlu0 %v2794, 120
        %v2848 = vpop.permute.xlu0 %2847
        %2849 = vrot.lane.b32.xlu0 %v2797, 120
        %v2850 = vpop.permute.xlu0 %2849
        %2851 = vrot.lane.b32.xlu0 %v2800, 120
        %v2852 = vpop.permute.xlu0 %2851
        %2853 = vrot.lane.b32.xlu0 %v2803, 120
        %v2854 = vpop.permute.xlu0 %2853
        %2855 = vrot.lane.b32.xlu0 %v2806, 120
        %v2856 = vpop.permute.xlu0 %2855
        %2857 = vrot.lane.b32.xlu0 %v2809, 120
        %v2858 = vpop.permute.xlu0 %2857
        %2859 = vrot.lane.b32.xlu0 %v2812, 120
        %v2860 = vpop.permute.xlu0 %2859
        %2861 = vrot.lane.b32.xlu0 %v2815, 120
        %v2862 = vpop.permute.xlu0 %2861
        %2863 = vrot.lane.b32.xlu0 %v2818, 120
        %v2864 = vpop.permute.xlu0 %2863
        %2865 = vrot.lane.b32.xlu0 %v2821, 120
        %v2866 = vpop.permute.xlu0 %2865
        %2867 = vrot.lane.b32.xlu0 %v2784, 120
        %v2868 = vpop.permute.xlu0 %2867
        %2869 = vrot.lane.b32.xlu0 %v2785, 120
        %v2870 = vpop.permute.xlu0 %2869
        %2871 = vrot.lane.b32.xlu0 %v2783, 120
        %v2872 = vpop.permute.xlu0 %2871
        %v2873 = vsel %vm2138, %v2844, %v2846
        %v2874 = vsel %vm2138, %v2846, %v2848
        %v2875 = vsel %vm2138, %v2850, %v2852
        %v2876 = vsel %vm2138, %v2852, %v2854
        %v2877 = vsel %vm2138, %v2856, %v2858
        %v2878 = vsel %vm2138, %v2858, %v2860
        %v2879 = vsel %vm2138, %v2862, %v2864
        %v2880 = vsel %vm2138, %v2864, %v2866
        %v2881 = vsel %vm2138, %v2868, %v2870
        %v2882 = vsel %vm2138, %v2870, %v2872
        %v2892 = vsel %vm1024, %v2823, 0
        %v2895 = vsel %vm596, %v2881, 0
        %v2898 = vsel %vm596, %v2882, 0
        %2900 = vmatprep.subr.bf16.mxu0 %v2874
        %2901 = vmatpush1.bf16.msra.mxu0 %v2873
        %2902 = vmatprep.subr.bf16.mxu0 %v2876
        %2903 = vmatpush1.bf16.msra.mxu0 %v2875
        %2904 = vmatprep.subr.bf16.mxu0 %v2878
        %2905 = vmatpush1.bf16.msra.mxu0 %v2877
        %2906 = vmatprep.subr.bf16.mxu0 %v2880
        %2907 = vmatpush1.bf16.msra.mxu0 %v2879
        %2908 = vmatprep.subr.bf16.mxu0 %v2898
        %2909 = vmatpush1.bf16.msra.mxu0 %v2895
        %2910 = vmatprep.subr.bf16.mxu0 0
        %2911 = vmatpush1.bf16.msra.mxu0 0
        %2912 = vmatprep.subr.bf16.mxu0 0
        %2913 = vmatpush1.bf16.msra.mxu0 0
        %2914 = vmatprep.subr.bf16.mxu0 0
        %2915 = vmatpush1.bf16.msra.mxu0 0
        %2916 = vmatprep.subr.bf16.mxu0 0
        %2917 = vmatpush1.bf16.msra.mxu0 0
        %2918 = vmatprep.subr.bf16.mxu0 0
        %2919 = vmatpush1.bf16.msra.mxu0 0
        %2920 = vmatprep.subr.bf16.mxu0 0
        %2921 = vmatpush1.bf16.msra.mxu0 0
        %2922 = vmatprep.subr.bf16.mxu0 0
        %2923 = vmatpush1.bf16.msra.mxu0 0
        %2924 = vmatprep.subr.bf16.mxu0 0
        %2925 = vmatpush1.bf16.msra.mxu0 0
        %2926 = vmatprep.subr.bf16.mxu0 0
        %2927 = vmatpush1.bf16.msra.mxu0 0
        %2928 = vmatprep.subr.bf16.mxu0 0
        %2929 = vmatpush1.bf16.msra.mxu0 0
        %2930 = vmatprep.subr.bf16.mxu0 0
        %2931 = vmatpush1.bf16.msra.mxu0 0
        %2932 = vmatprep.mubr.bf16.mxu0 0
        %2933 = vmatmul.mubr.bf16.gmra.mrb[0].mxu0 %v2892
        %v2934 = vpop.f32.mrb[0].mxu0
        %v2935 = vadd.f32 %v2829, %v2934
        %v2936 = vpop.f32.mrb[0].mxu0
        %v2937 = vadd.f32 %v2829, %v2936
        %v2938 = vpop.f32.mrb[0].mxu0
        %v2939 = vpop.f32.mrb[0].mxu0
        %2940 = vdwg.mxu0
        %v2941 = vmax.f32 %v2935, 0.0
        %v2942 = vmax.f32 %v2937, 0.0
        %v2943 = vpack.c.bf16 %v2941, %v2941
        %v2944 = vpack.c.bf16 %v2942, %v2942
        %2947 = vrot.lane.b32.xlu0 %v2943, 16
        %v2948 = vpop.permute.xlu0 %2947
        %2949 = vrot.lane.b32.xlu0 %v2944, 16
        %v2950 = vpop.permute.xlu0 %2949
        %v2951 = vsel %vm363, %v2948, %v2950
        %v2954 = vsel %vm366, 0, %v2948
        %v2957 = vsel %vm366, %v2950, 0
        %v2959 = vmul.bf16 %v2954, %v401
        %v2960 = vmul.bf16 %v2951, %v399
        %v2961 = vmul.bf16 %v2954, %v425
        %v2962 = vmul.bf16 %v2951, %v429
        %v2963 = vmul.bf16 %v2957, %v427
        %v2964 = vmul.bf16 %v2954, %v437
        %v2965 = vmul.bf16 %v2951, %v441
        %v2966 = vmul.bf16 %v2957, %v439
        %v2967 = vmul.bf16 %v2954, %v449
        %v2968 = vmul.bf16 %v2951, %v453
        %v2969 = vmul.bf16 %v2957, %v451
        %v2970 = vmul.bf16 %v2954, %v461
        %v2971 = vmul.bf16 %v2951, %v465
        %v2972 = vmul.bf16 %v2957, %v463
        %v2973 = vmul.bf16 %v2954, %v473
        %v2974 = vmul.bf16 %v2951, %v477
        %v2975 = vmul.bf16 %v2957, %v475
        %v2977 = vrot.slane %v2954, 4
        %v2978 = vrot.slane %v2951, 4
        %2979 = vrot.lane.b32.xlu0 %v2977, 127
        %v2980 = vpop.permute.xlu0 %2979
        %2981 = vrot.lane.b32.xlu0 %v2978, 127
        %v2982 = vpop.permute.xlu0 %2981
        %v2983 = vsel %vm400, %v2980, %v2982
        %2987 = vrot.lane.b32.xlu0 %v2961, 126
        %v2988 = vpop.permute.xlu0 %2987
        %2989 = vrot.lane.b32.xlu0 %v2962, 126
        %v2990 = vpop.permute.xlu0 %2989
        %2991 = vrot.lane.b32.xlu0 %v2963, 126
        %v2992 = vpop.permute.xlu0 %2991
        %v2993 = vsel %vm504, %v2988, %v2990
        %v2994 = vsel %vm504, %v2990, %v2992
        %v2998 = vrot.slane %v2964, 4
        %v2999 = vrot.slane %v2965, 4
        %v3000 = vrot.slane %v2966, 4
        %3001 = vrot.lane.b32.xlu0 %v2998, 112
        %v3002 = vpop.permute.xlu0 %3001
        %3003 = vrot.lane.b32.xlu0 %v2999, 112
        %v3004 = vpop.permute.xlu0 %3003
        %3005 = vrot.lane.b32.xlu0 %v3000, 112
        %v3006 = vpop.permute.xlu0 %3005
        %v3007 = vsel %vm519, %v3002, %v3004
        %v3008 = vsel %vm519, %v3004, %v3006
        %3010 = vrot.lane.b32.xlu0 %v2954, 111
        %v3011 = vpop.permute.xlu0 %3010
        %3012 = vrot.lane.b32.xlu0 %v2951, 111
        %v3013 = vpop.permute.xlu0 %3012
        %3014 = vrot.lane.b32.xlu0 %v2957, 111
        %v3015 = vpop.permute.xlu0 %3014
        %v3016 = vsel %vm529, %v3011, %v3013
        %v3017 = vsel %vm529, %v3013, %v3015
        %v3021 = vrot.slane %v2967, 4
        %v3022 = vrot.slane %v2968, 4
        %v3023 = vrot.slane %v2969, 4
        %3024 = vrot.lane.b32.xlu0 %v3021, 110
        %v3025 = vpop.permute.xlu0 %3024
        %3026 = vrot.lane.b32.xlu0 %v3022, 110
        %v3027 = vpop.permute.xlu0 %3026
        %3028 = vrot.lane.b32.xlu0 %v3023, 110
        %v3029 = vpop.permute.xlu0 %3028
        %v3030 = vsel %vm544, %v3025, %v3027
        %v3031 = vsel %vm544, %v3027, %v3029
        %3035 = vrot.lane.b32.xlu0 %v2970, 96
        %v3036 = vpop.permute.xlu0 %3035
        %3037 = vrot.lane.b32.xlu0 %v2971, 96
        %v3038 = vpop.permute.xlu0 %3037
        %3039 = vrot.lane.b32.xlu0 %v2972, 96
        %v3040 = vpop.permute.xlu0 %3039
        %v3041 = vsel %vm559, %v3036, %v3038
        %v3042 = vsel %vm559, %v3038, %v3040
        %v3043 = vrot.slane %v2957, 4
        %3044 = vrot.lane.b32.xlu0 %v2977, 95
        %v3045 = vpop.permute.xlu0 %3044
        %3046 = vrot.lane.b32.xlu0 %v2978, 95
        %v3047 = vpop.permute.xlu0 %3046
        %3048 = vrot.lane.b32.xlu0 %v3043, 95
        %v3049 = vpop.permute.xlu0 %3048
        %v3050 = vsel %vm571, %v3045, %v3047
        %v3051 = vsel %vm571, %v3047, %v3049
        %3055 = vrot.lane.b32.xlu0 %v2973, 94
        %v3056 = vpop.permute.xlu0 %3055
        %3057 = vrot.lane.b32.xlu0 %v2974, 94
        %v3058 = vpop.permute.xlu0 %3057
        %3059 = vrot.lane.b32.xlu0 %v2975, 94
        %v3060 = vpop.permute.xlu0 %3059
        %v3061 = vsel %vm583, %v3056, %v3058
        %v3062 = vsel %vm583, %v3058, %v3060
        %v3064 = vsel %vm596, %v405, %v2980
        %v3067 = vsel %vm596, %v2959, %v2983
        %v3070 = vsel %vm596, %v2960, %v2982
        %v3073 = vsel %vm596, %v2988, %v3002
        %v3076 = vsel %vm596, %v2993, %v3007
        %v3079 = vsel %vm596, %v2994, %v3008
        %v3082 = vsel %vm596, %v3011, %v3025
        %v3085 = vsel %vm596, %v3016, %v3030
        %v3088 = vsel %vm596, %v3017, %v3031
        %v3091 = vsel %vm596, %v3036, %v3045
        %v3094 = vsel %vm596, %v3041, %v3050
        %v3097 = vsel %vm596, %v3042, %v3051
        %s3098 = scalar_lea.vmem %s5, 12
        %v3099 = vld [vmem:[%s3098] sm:$0xf]
        %s3100 = scalar_lea.vmem %s6, 24
        %v3101 = vld [vmem:[%s3100] sm:$0xff]
        %3103 = vset.pattern.permute.xlu0 0
        %3104 = vperm.xlu0 %3103, %v3101
        %v3105 = vpop.permute.xlu0 %3104
        %3119 = vrot.lane.b32.xlu0 %v3064, 1
        %v3120 = vpop.permute.xlu0 %3119
        %3121 = vrot.lane.b32.xlu0 %v3067, 1
        %v3122 = vpop.permute.xlu0 %3121
        %3123 = vrot.lane.b32.xlu0 %v3070, 1
        %v3124 = vpop.permute.xlu0 %3123
        %3125 = vrot.lane.b32.xlu0 %v3073, 1
        %v3126 = vpop.permute.xlu0 %3125
        %3127 = vrot.lane.b32.xlu0 %v3076, 1
        %v3128 = vpop.permute.xlu0 %3127
        %3129 = vrot.lane.b32.xlu0 %v3079, 1
        %v3130 = vpop.permute.xlu0 %3129
        %3131 = vrot.lane.b32.xlu0 %v3082, 1
        %v3132 = vpop.permute.xlu0 %3131
        %3133 = vrot.lane.b32.xlu0 %v3085, 1
        %v3134 = vpop.permute.xlu0 %3133
        %3135 = vrot.lane.b32.xlu0 %v3088, 1
        %v3136 = vpop.permute.xlu0 %3135
        %3137 = vrot.lane.b32.xlu0 %v3091, 1
        %v3138 = vpop.permute.xlu0 %3137
        %3139 = vrot.lane.b32.xlu0 %v3094, 1
        %v3140 = vpop.permute.xlu0 %3139
        %3141 = vrot.lane.b32.xlu0 %v3097, 1
        %v3142 = vpop.permute.xlu0 %3141
        %3143 = vrot.lane.b32.xlu0 %v3056, 1
        %v3144 = vpop.permute.xlu0 %3143
        %3145 = vrot.lane.b32.xlu0 %v3061, 1
        %v3146 = vpop.permute.xlu0 %3145
        %3147 = vrot.lane.b32.xlu0 %v3062, 1
        %v3148 = vpop.permute.xlu0 %3147
        %v3149 = vsel %vm428, %v3120, %v3122
        %v3150 = vsel %vm428, %v3122, %v3124
        %v3151 = vsel %vm428, %v3126, %v3128
        %v3152 = vsel %vm428, %v3128, %v3130
        %v3153 = vsel %vm428, %v3132, %v3134
        %v3154 = vsel %vm428, %v3134, %v3136
        %v3155 = vsel %vm428, %v3138, %v3140
        %v3156 = vsel %vm428, %v3140, %v3142
        %v3157 = vsel %vm428, %v3144, %v3146
        %v3158 = vsel %vm428, %v3146, %v3148
        %v3168 = vsel %vm1024, %v3099, 0
        %v3171 = vsel %vm596, %v3157, 0
        %v3174 = vsel %vm596, %v3158, 0
        %3176 = vmatprep.subr.bf16.mxu0 %v3150
        %3177 = vmatpush1.bf16.msra.mxu0 %v3149
        %3178 = vmatprep.subr.bf16.mxu0 %v3152
        %3179 = vmatpush1.bf16.msra.mxu0 %v3151
        %3180 = vmatprep.subr.bf16.mxu0 %v3154
        %3181 = vmatpush1.bf16.msra.mxu0 %v3153
        %3182 = vmatprep.subr.bf16.mxu0 %v3156
        %3183 = vmatpush1.bf16.msra.mxu0 %v3155
        %3184 = vmatprep.subr.bf16.mxu0 %v3174
        %3185 = vmatpush1.bf16.msra.mxu0 %v3171
        %3186 = vmatprep.subr.bf16.mxu0 0
        %3187 = vmatpush1.bf16.msra.mxu0 0
        %3188 = vmatprep.subr.bf16.mxu0 0
        %3189 = vmatpush1.bf16.msra.mxu0 0
        %3190 = vmatprep.subr.bf16.mxu0 0
        %3191 = vmatpush1.bf16.msra.mxu0 0
        %3192 = vmatprep.subr.bf16.mxu0 0
        %3193 = vmatpush1.bf16.msra.mxu0 0
        %3194 = vmatprep.subr.bf16.mxu0 0
        %3195 = vmatpush1.bf16.msra.mxu0 0
        %3196 = vmatprep.subr.bf16.mxu0 0
        %3197 = vmatpush1.bf16.msra.mxu0 0
        %3198 = vmatprep.subr.bf16.mxu0 0
        %3199 = vmatpush1.bf16.msra.mxu0 0
        %3200 = vmatprep.subr.bf16.mxu0 0
        %3201 = vmatpush1.bf16.msra.mxu0 0
        %3202 = vmatprep.subr.bf16.mxu0 0
        %3203 = vmatpush1.bf16.msra.mxu0 0
        %3204 = vmatprep.subr.bf16.mxu0 0
        %3205 = vmatpush1.bf16.msra.mxu0 0
        %3206 = vmatprep.subr.bf16.mxu0 0
        %3207 = vmatpush1.bf16.msra.mxu0 0
        %3208 = vmatprep.mubr.bf16.mxu0 0
        %3209 = vmatmul.mubr.bf16.gmra.mrb[0].mxu0 %v3168
        %v3210 = vpop.f32.mrb[0].mxu0
        %v3211 = vadd.f32 %v3105, %v3210
        %v3212 = vpop.f32.mrb[0].mxu0
        %v3213 = vadd.f32 %v3105, %v3212
        %v3214 = vpop.f32.mrb[0].mxu0
        %v3215 = vpop.f32.mrb[0].mxu0
        %3216 = vdwg.mxu0
        %v3217 = vmax.f32 %v3211, 0.0
        %v3218 = vmax.f32 %v3213, 0.0
        %v3219 = vadd.f32 %v798, %v3217
        %v3220 = vadd.f32 %v799, %v3218
        %v3221 = vpack.c.bf16 %v3219, %v3219
        %v3222 = vpack.c.bf16 %v3220, %v3220
        %s3223 = scalar_lea.vmem %s3, 16
        %v3224 = vld [vmem:[%s3223] sm:$0xf]
        %s3225 = scalar_lea.vmem %s4, 32
        %v3226 = vld [vmem:[%s3225] sm:$0xff]
        %3228 = vset.pattern.permute.xlu0 0
        %3229 = vperm.xlu0 %3228, %v3226
        %v3230 = vpop.permute.xlu0 %3229
        %v3233 = vunpack.c.l.b16 %v3224
        %v3234 = vpack.c.b16 %v3233, %v3233
        %3235 = vrot.lane.b32.xlu0 %v3234, 96
        %v3236 = vpop.permute.xlu0 %3235
        %vm3237 = vcmask 64512
        %v3239 = vsel %vm3237, %v3236, 0
        %v3242 = vsel %vm596, %v3221, 0
        %v3245 = vsel %vm596, %v3222, 0
        %3247 = vmatprep.subr.bf16.mxu0 %v3245
        %3248 = vmatpush1.bf16.msra.mxu0 %v3242
        %3249 = vmatprep.subr.bf16.mxu0 0
        %3250 = vmatpush1.bf16.msra.mxu0 0
        %3251 = vmatprep.subr.bf16.mxu0 0
        %3252 = vmatpush1.bf16.msra.mxu0 0
        %3253 = vmatprep.subr.bf16.mxu0 0
        %3254 = vmatpush1.bf16.msra.mxu0 0
        %3255 = vmatprep.subr.bf16.mxu0 0
        %3256 = vmatpush1.bf16.msra.mxu0 0
        %3257 = vmatprep.subr.bf16.mxu0 0
        %3258 = vmatpush1.bf16.msra.mxu0 0
        %3259 = vmatprep.subr.bf16.mxu0 0
        %3260 = vmatpush1.bf16.msra.mxu0 0
        %3261 = vmatprep.subr.bf16.mxu0 0
        %3262 = vmatpush1.bf16.msra.mxu0 0
        %3263 = vmatprep.subr.bf16.mxu0 0
        %3264 = vmatpush1.bf16.msra.mxu0 0
        %3265 = vmatprep.subr.bf16.mxu0 0
        %3266 = vmatpush1.bf16.msra.mxu0 0
        %3267 = vmatprep.subr.bf16.mxu0 0
        %3268 = vmatpush1.bf16.msra.mxu0 0
        %3269 = vmatprep.subr.bf16.mxu0 0
        %3270 = vmatpush1.bf16.msra.mxu0 0
        %3271 = vmatprep.subr.bf16.mxu0 0
        %3272 = vmatpush1.bf16.msra.mxu0 0
        %3273 = vmatprep.subr.bf16.mxu0 0
        %3274 = vmatpush1.bf16.msra.mxu0 0
        %3275 = vmatprep.subr.bf16.mxu0 0
        %3276 = vmatpush1.bf16.msra.mxu0 0
        %3277 = vmatprep.subr.bf16.mxu0 0
        %3278 = vmatpush1.bf16.msra.mxu0 0
        %3279 = vmatprep.mubr.bf16.mxu0 0
        %3280 = vmatmul.mubr.bf16.gmra.mrb[0].mxu0 %v3239
        %v3281 = vpop.f32.mrb[0].mxu0
        %v3282 = vadd.f32 %v3230, %v3281
        %v3283 = vpop.f32.mrb[0].mxu0
        %v3284 = vadd.f32 %v3230, %v3283
        %v3285 = vpop.f32.mrb[0].mxu0
        %v3286 = vpop.f32.mrb[0].mxu0
        %3287 = vdwg.mxu0
        %v3288 = vmax.f32 %v3282, 0.0
        %v3289 = vmax.f32 %v3284, 0.0
        %v3290 = vpack.c.bf16 %v3288, %v3288
        %v3291 = vpack.c.bf16 %v3289, %v3289
        %3294 = vrot.lane.b32.xlu0 %v3290, 16
        %v3295 = vpop.permute.xlu0 %3294
        %3296 = vrot.lane.b32.xlu0 %v3291, 16
        %v3297 = vpop.permute.xlu0 %3296
        %v3298 = vsel %vm363, %v3295, %v3297
        %v3301 = vsel %vm366, 0, %v3295
        %v3304 = vsel %vm366, %v3297, 0
        %v3306 = vmul.bf16 %v3301, %v401
        %v3307 = vmul.bf16 %v3298, %v399
        %v3308 = vmul.bf16 %v3301, %v425
        %v3309 = vmul.bf16 %v3298, %v429
        %v3310 = vmul.bf16 %v3304, %v427
        %v3311 = vmul.bf16 %v3301, %v437
        %v3312 = vmul.bf16 %v3298, %v441
        %v3313 = vmul.bf16 %v3304, %v439
        %v3314 = vmul.bf16 %v3301, %v449
        %v3315 = vmul.bf16 %v3298, %v453
        %v3316 = vmul.bf16 %v3304, %v451
        %v3317 = vmul.bf16 %v3301, %v461
        %v3318 = vmul.bf16 %v3298, %v465
        %v3319 = vmul.bf16 %v3304, %v463
        %v3320 = vmul.bf16 %v3301, %v473
        %v3321 = vmul.bf16 %v3298, %v477
        %v3322 = vmul.bf16 %v3304, %v475
        %v3324 = vrot.slane %v3301, 4
        %v3325 = vrot.slane %v3298, 4
        %3326 = vrot.lane.b32.xlu0 %v3324, 127
        %v3327 = vpop.permute.xlu0 %3326
        %3328 = vrot.lane.b32.xlu0 %v3325, 127
        %v3329 = vpop.permute.xlu0 %3328
        %v3330 = vsel %vm400, %v3327, %v3329
        %3334 = vrot.lane.b32.xlu0 %v3308, 126
        %v3335 = vpop.permute.xlu0 %3334
        %3336 = vrot.lane.b32.xlu0 %v3309, 126
        %v3337 = vpop.permute.xlu0 %3336
        %3338 = vrot.lane.b32.xlu0 %v3310, 126
        %v3339 = vpop.permute.xlu0 %3338
        %v3340 = vsel %vm504, %v3335, %v3337
        %v3341 = vsel %vm504, %v3337, %v3339
        %v3345 = vrot.slane %v3311, 4
        %v3346 = vrot.slane %v3312, 4
        %v3347 = vrot.slane %v3313, 4
        %3348 = vrot.lane.b32.xlu0 %v3345, 112
        %v3349 = vpop.permute.xlu0 %3348
        %3350 = vrot.lane.b32.xlu0 %v3346, 112
        %v3351 = vpop.permute.xlu0 %3350
        %3352 = vrot.lane.b32.xlu0 %v3347, 112
        %v3353 = vpop.permute.xlu0 %3352
        %v3354 = vsel %vm519, %v3349, %v3351
        %v3355 = vsel %vm519, %v3351, %v3353
        %3357 = vrot.lane.b32.xlu0 %v3301, 111
        %v3358 = vpop.permute.xlu0 %3357
        %3359 = vrot.lane.b32.xlu0 %v3298, 111
        %v3360 = vpop.permute.xlu0 %3359
        %3361 = vrot.lane.b32.xlu0 %v3304, 111
        %v3362 = vpop.permute.xlu0 %3361
        %v3363 = vsel %vm529, %v3358, %v3360
        %v3364 = vsel %vm529, %v3360, %v3362
        %v3368 = vrot.slane %v3314, 4
        %v3369 = vrot.slane %v3315, 4
        %v3370 = vrot.slane %v3316, 4
        %3371 = vrot.lane.b32.xlu0 %v3368, 110
        %v3372 = vpop.permute.xlu0 %3371
        %3373 = vrot.lane.b32.xlu0 %v3369, 110
        %v3374 = vpop.permute.xlu0 %3373
        %3375 = vrot.lane.b32.xlu0 %v3370, 110
        %v3376 = vpop.permute.xlu0 %3375
        %v3377 = vsel %vm544, %v3372, %v3374
        %v3378 = vsel %vm544, %v3374, %v3376
        %3382 = vrot.lane.b32.xlu0 %v3317, 96
        %v3383 = vpop.permute.xlu0 %3382
        %3384 = vrot.lane.b32.xlu0 %v3318, 96
        %v3385 = vpop.permute.xlu0 %3384
        %3386 = vrot.lane.b32.xlu0 %v3319, 96
        %v3387 = vpop.permute.xlu0 %3386
        %v3388 = vsel %vm559, %v3383, %v3385
        %v3389 = vsel %vm559, %v3385, %v3387
        %v3390 = vrot.slane %v3304, 4
        %3391 = vrot.lane.b32.xlu0 %v3324, 95
        %v3392 = vpop.permute.xlu0 %3391
        %3393 = vrot.lane.b32.xlu0 %v3325, 95
        %v3394 = vpop.permute.xlu0 %3393
        %3395 = vrot.lane.b32.xlu0 %v3390, 95
        %v3396 = vpop.permute.xlu0 %3395
        %v3397 = vsel %vm571, %v3392, %v3394
        %v3398 = vsel %vm571, %v3394, %v3396
        %3402 = vrot.lane.b32.xlu0 %v3320, 94
        %v3403 = vpop.permute.xlu0 %3402
        %3404 = vrot.lane.b32.xlu0 %v3321, 94
        %v3405 = vpop.permute.xlu0 %3404
        %3406 = vrot.lane.b32.xlu0 %v3322, 94
        %v3407 = vpop.permute.xlu0 %3406
        %v3408 = vsel %vm583, %v3403, %v3405
        %v3409 = vsel %vm583, %v3405, %v3407
        %v3411 = vsel %vm596, %v405, %v3327
        %v3414 = vsel %vm596, %v3306, %v3330
        %v3417 = vsel %vm596, %v3307, %v3329
        %v3420 = vsel %vm596, %v3335, %v3349
        %v3423 = vsel %vm596, %v3340, %v3354
        %v3426 = vsel %vm596, %v3341, %v3355
        %v3429 = vsel %vm596, %v3358, %v3372
        %v3432 = vsel %vm596, %v3363, %v3377
        %v3435 = vsel %vm596, %v3364, %v3378
        %v3438 = vsel %vm596, %v3383, %v3392
        %v3441 = vsel %vm596, %v3388, %v3397
        %v3444 = vsel %vm596, %v3389, %v3398
        %s3445 = scalar_lea.vmem %s5, 16
        %v3446 = vld [vmem:[%s3445] sm:$0xf]
        %s3447 = scalar_lea.vmem %s6, 32
        %v3448 = vld [vmem:[%s3447] sm:$0xff]
        %3450 = vset.pattern.permute.xlu0 0
        %3451 = vperm.xlu0 %3450, %v3448
        %v3452 = vpop.permute.xlu0 %3451
        %3466 = vrot.lane.b32.xlu0 %v3411, 1
        %v3467 = vpop.permute.xlu0 %3466
        %3468 = vrot.lane.b32.xlu0 %v3414, 1
        %v3469 = vpop.permute.xlu0 %3468
        %3470 = vrot.lane.b32.xlu0 %v3417, 1
        %v3471 = vpop.permute.xlu0 %3470
        %3472 = vrot.lane.b32.xlu0 %v3420, 1
        %v3473 = vpop.permute.xlu0 %3472
        %3474 = vrot.lane.b32.xlu0 %v3423, 1
        %v3475 = vpop.permute.xlu0 %3474
        %3476 = vrot.lane.b32.xlu0 %v3426, 1
        %v3477 = vpop.permute.xlu0 %3476
        %3478 = vrot.lane.b32.xlu0 %v3429, 1
        %v3479 = vpop.permute.xlu0 %3478
        %3480 = vrot.lane.b32.xlu0 %v3432, 1
        %v3481 = vpop.permute.xlu0 %3480
        %3482 = vrot.lane.b32.xlu0 %v3435, 1
        %v3483 = vpop.permute.xlu0 %3482
        %3484 = vrot.lane.b32.xlu0 %v3438, 1
        %v3485 = vpop.permute.xlu0 %3484
        %3486 = vrot.lane.b32.xlu0 %v3441, 1
        %v3487 = vpop.permute.xlu0 %3486
        %3488 = vrot.lane.b32.xlu0 %v3444, 1
        %v3489 = vpop.permute.xlu0 %3488
        %3490 = vrot.lane.b32.xlu0 %v3403, 1
        %v3491 = vpop.permute.xlu0 %3490
        %3492 = vrot.lane.b32.xlu0 %v3408, 1
        %v3493 = vpop.permute.xlu0 %3492
        %3494 = vrot.lane.b32.xlu0 %v3409, 1
        %v3495 = vpop.permute.xlu0 %3494
        %v3496 = vsel %vm428, %v3467, %v3469
        %v3497 = vsel %vm428, %v3469, %v3471
        %v3498 = vsel %vm428, %v3473, %v3475
        %v3499 = vsel %vm428, %v3475, %v3477
        %v3500 = vsel %vm428, %v3479, %v3481
        %v3501 = vsel %vm428, %v3481, %v3483
        %v3502 = vsel %vm428, %v3485, %v3487
        %v3503 = vsel %vm428, %v3487, %v3489
        %v3504 = vsel %vm428, %v3491, %v3493
        %v3505 = vsel %vm428, %v3493, %v3495
        %v3515 = vsel %vm1024, %v3446, 0
        %v3518 = vsel %vm596, %v3504, 0
        %v3521 = vsel %vm596, %v3505, 0
        %3523 = vmatprep.subr.bf16.mxu0 %v3497
        %3524 = vmatpush1.bf16.msra.mxu0 %v3496
        %3525 = vmatprep.subr.bf16.mxu0 %v3499
        %3526 = vmatpush1.bf16.msra.mxu0 %v3498
        %3527 = vmatprep.subr.bf16.mxu0 %v3501
        %3528 = vmatpush1.bf16.msra.mxu0 %v3500
        %3529 = vmatprep.subr.bf16.mxu0 %v3503
        %3530 = vmatpush1.bf16.msra.mxu0 %v3502
        %3531 = vmatprep.subr.bf16.mxu0 %v3521
        %3532 = vmatpush1.bf16.msra.mxu0 %v3518
        %3533 = vmatprep.subr.bf16.mxu0 0
        %3534 = vmatpush1.bf16.msra.mxu0 0
        %3535 = vmatprep.subr.bf16.mxu0 0
        %3536 = vmatpush1.bf16.msra.mxu0 0
        %3537 = vmatprep.subr.bf16.mxu0 0
        %3538 = vmatpush1.bf16.msra.mxu0 0
        %3539 = vmatprep.subr.bf16.mxu0 0
        %3540 = vmatpush1.bf16.msra.mxu0 0
        %3541 = vmatprep.subr.bf16.mxu0 0
        %3542 = vmatpush1.bf16.msra.mxu0 0
        %3543 = vmatprep.subr.bf16.mxu0 0
        %3544 = vmatpush1.bf16.msra.mxu0 0
        %3545 = vmatprep.subr.bf16.mxu0 0
        %3546 = vmatpush1.bf16.msra.mxu0 0
        %3547 = vmatprep.subr.bf16.mxu0 0
        %3548 = vmatpush1.bf16.msra.mxu0 0
        %3549 = vmatprep.subr.bf16.mxu0 0
        %3550 = vmatpush1.bf16.msra.mxu0 0
        %3551 = vmatprep.subr.bf16.mxu0 0
        %3552 = vmatpush1.bf16.msra.mxu0 0
        %3553 = vmatprep.subr.bf16.mxu0 0
        %3554 = vmatpush1.bf16.msra.mxu0 0
        %3555 = vmatprep.mubr.bf16.mxu0 0
        %3556 = vmatmul.mubr.bf16.gmra.mrb[0].mxu0 %v3515
        %v3557 = vpop.f32.mrb[0].mxu0
        %v3558 = vadd.f32 %v3452, %v3557
        %v3559 = vpop.f32.mrb[0].mxu0
        %v3560 = vadd.f32 %v3452, %v3559
        %v3561 = vpop.f32.mrb[0].mxu0
        %v3562 = vpop.f32.mrb[0].mxu0
        %3563 = vdwg.mxu0
        %v3564 = vmax.f32 %v3558, 0.0
        %v3565 = vmax.f32 %v3560, 0.0
        %v3566 = vld [vmem:[%s347] sm:$0xff]
        %3568 = vset.pattern.permute.xlu0 0
        %3569 = vperm.xlu0 %3568, %v3566
        %v3570 = vpop.permute.xlu0 %3569
        %3572 = vst [vmem:[%s338] sm:$0xff] %v1349
        %3573 = vst [vmem:[%s338 + $0x8] sm:$0xff] %v1350
        %3574 = vst [vmem:[%s338 + $0x10] sm:$0xff] %v2006
        %3575 = vst [vmem:[%s338 + $0x18] sm:$0xff] %v2007
        %3576 = vst [vmem:[%s338 + $0x20] sm:$0xff] %v2625
        %3577 = vst [vmem:[%s338 + $0x28] sm:$0xff] %v2626
        %3578 = vst [vmem:[%s338 + $0x30] sm:$0xff] %v3217
        %3579 = vst [vmem:[%s338 + $0x38] sm:$0xff] %v3218
        %3580 = vst [vmem:[%s338 + $0x40] sm:$0xff] %v3564
        %3581 = vst [vmem:[%s338 + $0x48] sm:$0xff] %v3565
        %3582 = vst [vmem:[%s338 + $0x50] sm:$0xff] %v3570
        %3583 = vst [vmem:[%s338 + $0x58] sm:$0xff] %v3570
        %s3584 = sand.u32 %s230, 1
        %s3585 = scalar_lea.sflag [#allocation3], %s3584
        %s3586 = sand.u32 %s230, 1
        %s3587 = smul.addr %s3586, 96
        %s3588 = scalar_lea.vmem [#allocation2], %s3587
        // Predicated region
        $region57: #{tpu_custom_call.1} parent=55 // pred_check
          %p3589 = pneg %p240
        $region58: #{tpu_custom_call.1} parent=55 // pred_check_branch
          %3591 = sbr.rel (%p3589) target = $region60
        $region59: #{tpu_custom_call.1} parent=55 // pred_region
          %s3593 = ssub.s32 1536, 1536
          %3594 = vsyncadd %s3585, %s3593
          %s3595 = smul.addr %s23, 12
          %s3596 = smul.addr %s3595, 128
          %s3597 = scalar_lea.hbm %s9, %s3596
          %s3598 = sshll.u32 %s3588, 4
          %s3599 = int_to_ptr.vmem [resolvable:$true] %s3598
          %3604 = dma.vmem_to_hbm [thread:$0]  %s3599, 1536, %s3597, %s3585, 256, 256, 16
        $region60: #{tpu_custom_call.1} parent=55 // pred_fallthru
          _
      $region56: #{tpu_custom_call.1} parent=5 // pred_fallthru
        _
      %p3605 = scmp.le.s32.totalorder 2, %s18
      // Predicated region
      $region61: #{tpu_custom_call.1} parent=5 // pred_check
        %p3606 = pneg %p3605
      $region62: #{tpu_custom_call.1} parent=5 // pred_check_branch
        %3608 = sbr.rel (%p3606) target = $region64
      $region63: #{tpu_custom_call.1} parent=5 // pred_region
        %s3609 = ssub.s32 %s18, 2
        // Predicated region
        $region65: #{tpu_custom_call.1} parent=63 // pred_check
          %p3610 = pneg %p246
        $region66: #{tpu_custom_call.1} parent=63 // pred_check_branch
          %3612 = sbr.rel (%p3610) target = $region68
        $region67: #{tpu_custom_call.1} parent=63 // pred_region
          %s3613 = sand.u32 %s231, 1
          %s3614 = scalar_lea.sflag [#allocation3], %s3613
          %s3615 = sand.u32 %s231, 1
          %s3616 = smul.addr %s3615, 96
          %s3617 = scalar_lea.vmem [#allocation2], %s3616
          %3618 = dma.done %s3614, 1536
        $region68: #{tpu_custom_call.1} parent=63 // pred_fallthru
          _
      $region64: #{tpu_custom_call.1} parent=5 // pred_fallthru
        _
    $region6: #{tpu_custom_call.1} parent=1 // loop_footer
      %s22 = sadd.s32 1, %s18
    $region7: #{tpu_custom_call.1} parent=1 // loop_footer_branch
      %17 = sbr.rel target = $region3
    $region8: #{tpu_custom_call.1} parent=1 // loop_exit
      _
    %3619 = vsyncpa [#allocation3], 1
    %s3620 = scalar_lea.sflag [#allocation3], 1
    %3621 = vsyncpa %s3620, 1

</llo_original>
